<compile_context>
chip_gen: v5e
topology: v5e:2x2
jax: 0.10.0
libtpu: 0.0.40
codegen_flags: <defaults>
</compile_context>

<pallas_src>
import functools
import math

import jax
import jax.numpy as jnp
import numpy as np
from jax.experimental import pallas as pl
from jax.experimental.pallas import tpu as pltpu

BN_EPS = 1e-5


def _round_up(x, m):
    return ((x + m - 1) // m) * m


def _vmem_capacity_bytes():
    try:
        return int(getattr(pltpu.get_tpu_info(), "vmem_capacity_bytes", 128 << 20))
    except Exception:
        return 128 << 20


# ---------------- Pallas kernel ----------------

def _conv3x3_relu_bn_kernel(a_ref, b_ref, w_ref, bias_ref, scale_ref, shift_ref, o_ref,
                            *, fuse_taps):
    # a_ref:            (1, TH, Wp, Ci)   body rows of the zero-padded NHWC window
    # b_ref:            (1, 2,  Wp, Ci)   2-row bottom halo of the same window (same HBM array)
    # w_ref:            (3, 3*Ci, Cop)    weights: [dx, dy*Ci + c, o], Cop = round_up(Co, 128)
    # bias/scale/shift: (1, Cop)          f32
    # o_ref:            (1, Co, TH*W)     channels-first, lane-dense output block
    th, wp, ci = a_ref.shape[1], a_ref.shape[2], a_ref.shape[3]
    cop = w_ref.shape[2]
    co = o_ref.shape[1]
    w_out = o_ref.shape[2] // th
    rows = th * wp

    win = jnp.concatenate([a_ref[0], b_ref[0]], axis=0)          # (TH+2, Wp, Ci)
    acc = jnp.zeros((rows, cop), jnp.float32)

    if fuse_taps:
        # dy folded into the MXU K dimension (K = 3*Ci): 3 dots + 2 rolls per tile.
        xk = jnp.concatenate([win[0:th], win[1:th + 1], win[2:th + 2]], axis=-1)
        xk = xk.reshape(rows, 3 * ci)
        for dx in range(3):
            # dx offset via a sublane rotate (XLU slot); wrapped elements only ever read the
            # zero right-pad columns or land in discarded pad-column outputs.
            xr = xk if dx == 1 else pltpu.roll(xk, (1 - dx) % rows, 0)
            acc = acc + jnp.dot(xr.astype(w_ref.dtype), w_ref[dx],
                                preferred_element_type=jnp.float32)
    else:
        # Fallback (no lane-dim concatenate): 9 small dots, dx rolls hoisted to 2 per tile.
        lfull = (th + 2) * wp
        xw = win.reshape(lfull, ci)
        xdx = (pltpu.roll(xw, 1, 0), xw, pltpu.roll(xw, lfull - 1, 0))
        for dy in range(3):
            for dx in range(3):
                xs = xdx[dx][dy * wp:dy * wp + rows]
                acc = acc + jnp.dot(xs.astype(w_ref.dtype),
                                    w_ref[dx][dy * ci:(dy + 1) * ci, :],
                                    preferred_element_type=jnp.float32)

    # epilogue: once per tile, all f32, broadcasts hoisted out of the tap loop
    acc = jnp.maximum(acc + bias_ref[...], 0.0)                  # conv bias + ReLU
    acc = acc * scale_ref[...] + shift_ref[...]                  # BatchNorm2d (eval), pre-folded
    # TODO(synk): Dropout2d is identity in eval mode; training-mode channel dropout
    # (+ 1/(1-p) rescale) is not implemented.

    y = acc.reshape(th, wp, cop)[:, :w_out, :]                   # drop pad cols (aligned at 0)
    y = y.reshape(th * w_out, cop)
    # NCHW block: one per-tile XLU transpose instead of a wrapper-side HBM pass of the output.
    yt = y.T[:co, :]                                             # (Co, TH*W), lane-dense
    o_ref[...] = yt.reshape(1, co, th * w_out).astype(o_ref.dtype)


# ---------------- wrapper ----------------

def _choose_row_tile(h, w, wp, ci, co_pad, target, esz_in, esz_out, vmem_budget):
    """Row tile TH: even, TH*W a multiple of 128 (lane-dense NCHW output blocks + aligned
    in-kernel transpose), sized to the VMEM budget.  H is padded up to a multiple of TH."""
    q = 128 // math.gcd(w, 128)
    if q % 2:
        q *= 2
    # rough per-row VMEM cost: double-buffered in/out blocks + in-kernel slab/acc scratch
    per_row = wp * ci * esz_in * 8 + w * co_pad * esz_out * 2 + wp * co_pad * 4 * 3
    max_rows = max(q, int(vmem_budget) // max(per_row, 1))
    th = min(max(target, q), max_rows)
    th = max(q, (th // q) * q)
    if th >= h:                        # single row-tile per image (also handles awkward W/H)
        th = _round_up(h, 2)
        return th, th
    return th, _round_up(h, th)


def _pallas_forward(xp, wk, bias, scale, shift, *, n, ci, co, co_pad, th, wp, w, h_pad,
                    out_dtype, vmem_limit, fuse_taps):
    n_tiles = h_pad // th
    kernel = functools.partial(_conv3x3_relu_bn_kernel, fuse_taps=fuse_taps)
    return pl.pallas_call(
        kernel,
        out_shape=jax.ShapeDtypeStruct((n, co, h_pad * w), out_dtype),
        grid=(n, n_tiles),
        in_specs=[
            pl.BlockSpec((1, th, wp, ci), lambda b, t: (b, t, 0, 0)),              # body rows
            pl.BlockSpec((1, 2, wp, ci), lambda b, t: (b, (t + 1) * (th // 2), 0, 0)),  # halo
            pl.BlockSpec((3, 3 * ci, co_pad), lambda b, t: (0, 0, 0)),             # weights
            pl.BlockSpec((1, co_pad), lambda b, t: (0, 0)),                        # conv bias
            pl.BlockSpec((1, co_pad), lambda b, t: (0, 0)),                        # bn scale
            pl.BlockSpec((1, co_pad), lambda b, t: (0, 0)),                        # bn shift
        ],
        out_specs=pl.BlockSpec((1, co, th * w), lambda b, t: (b, 0, t)),           # NCHW blocks
        compiler_params=pltpu.CompilerParams(
            dimension_semantics=("parallel", "parallel"),
            vmem_limit_bytes=vmem_limit,
        ),
    )(xp, xp, wk, bias, scale, shift)


def dcan_conv_forward(x_nchw, params, *, row_tile=None, compute_dtype=None, out_dtype=None):
    """dcanConv forward: Conv2d(3x3, pad=1) -> ReLU -> BatchNorm2d(eval) -> Dropout2d(eval)."""
    n, ci, h, w = x_nchw.shape
    conv_w = params["conv_w"]                                    # PyTorch layout: (Co, Ci, 3, 3)
    co = conv_w.shape[0]
    compute_dtype = jnp.dtype(compute_dtype or x_nchw.dtype)     # bf16 on v6e/v7x if desired
    out_dtype = jnp.dtype(out_dtype or x_nchw.dtype)             # bf16 halves output HBM traffic
    co_pad = _round_up(co, 128)                                  # lane pad: free (<128 masked)
    wp = _round_up(w + 1, 8)                                     # >= 1 zero col (roll trick)

    vmem_cap = _vmem_capacity_bytes()
    if row_tile is None:
        row_tile = 64 if vmem_cap >= (96 << 20) else 32          # bigger tiles on v5e/v6e
    esz_in = jnp.dtype(x_nchw.dtype).itemsize
    th, h_pad = _choose_row_tile(h, w, wp, ci, co_pad, row_tile, esz_in,
                                 out_dtype.itemsize, int(0.4 * vmem_cap))

    # single input pass: NCHW -> NHWC + zero pad (XLA fuses these); no halo copies in HBM.
    # TODO(synk): if the producer can emit NHWC activations, accept them and drop this transpose.
    x_nhwc = jnp.transpose(x_nchw, (0, 2, 3, 1))
    xp = jnp.pad(x_nhwc, ((0, 0), (1, 1 + h_pad - h), (0, wp - w), (0, 0)))

    # weights -> (3, 3*Ci, Co_pad): [dx, dy*Ci + c, o]
    w3 = jnp.transpose(conv_w, (3, 2, 1, 0)).reshape(3, 3 * ci, co)
    wk = jnp.pad(w3, ((0, 0), (0, 0), (0, co_pad - co))).astype(compute_dtype)
    bias = jnp.pad(params["conv_b"], (0, co_pad - co)).astype(jnp.float32).reshape(1, co_pad)
    scale = params["bn_gamma"] / jnp.sqrt(params["bn_var"] + BN_EPS)
    shift = params["bn_beta"] - params["bn_mean"] * scale        # conv bias NOT folded (ReLU between)
    scale = jnp.pad(scale, (0, co_pad - co)).astype(jnp.float32).reshape(1, co_pad)
    shift = jnp.pad(shift, (0, co_pad - co)).astype(jnp.float32).reshape(1, co_pad)

    # explicit VMEM budget: double-buffered in/out blocks + resident operands + compute scratch
    blk_in = (th + 2) * wp * ci * esz_in
    blk_out = co * th * w * out_dtype.itemsize
    resident = (3 * 3 * ci + 3) * co_pad * 4
    scratch = th * wp * (3 * ci * max(esz_in, 4) * 4 + co_pad * 4 * 3)
    need = 2 * (blk_in + blk_out) + 2 * resident + scratch
    vmem_limit = int(min(max(2 * need, 8 << 20), int(0.75 * vmem_cap)))

    call = functools.partial(_pallas_forward, xp, wk, bias, scale, shift, n=n, ci=ci, co=co,
                             co_pad=co_pad, th=th, wp=wp, w=w, h_pad=h_pad,
                             out_dtype=out_dtype, vmem_limit=vmem_limit)
    try:
        out = call(fuse_taps=True)      # 3 MXU dots per tile (dy folded into K = 3*Ci)
    except Exception:                    # Mosaic builds without unaligned lane-dim concatenate
        out = call(fuse_taps=False)     # identical math: 9 small dots, 2 rolls

    out = out.reshape(n, co, h_pad, w)  # free: contiguous split of the (H*W) axis
    if h_pad != h:
        out = out[:, :, :h, :]
    return out


# ---------------- pure-JAX reference (same math, for a sanity check) ----------------

def _reference(x_nchw, params):
    n, ci, h, w = x_nchw.shape
    co = params["conv_w"].shape[0]
    x = jnp.transpose(x_nchw, (0, 2, 3, 1))
    xp = jnp.pad(x, ((0, 0), (1, 1), (1, 1), (0, 0)))
    w3 = jnp.transpose(params["conv_w"], (2, 3, 1, 0))
    out = jnp.zeros((n, h, w, co), jnp.float32)
    for dy in range(3):
        for dx in range(3):
            out = out + jnp.einsum("nhwc,cd->nhwd",
                                   xp[:, dy:dy + h, dx:dx + w, :], w3[dy, dx])
    out = jnp.maximum(out + params["conv_b"], 0.0)
    scale = params["bn_gamma"] / jnp.sqrt(params["bn_var"] + BN_EPS)
    shift = params["bn_beta"] - params["bn_mean"] * scale
    return jnp.transpose(out * scale + shift, (0, 3, 1, 2))


if __name__ == "__main__":
    key = jax.random.PRNGKey(0)
    N, Cin, H, W = 2, 4, 16, 16
    Cout = 32
    ks = jax.random.split(key, 7)

    params = {
        "conv_w":   0.1 * jax.random.normal(ks[0], (Cout, Cin, 3, 3), jnp.float32),
        "conv_b":   0.1 * jax.random.normal(ks[1], (Cout,), jnp.float32),
        "bn_gamma": 1.0 + 0.1 * jax.random.normal(ks[2], (Cout,), jnp.float32),
        "bn_beta":  0.1 * jax.random.normal(ks[3], (Cout,), jnp.float32),
        "bn_mean":  0.1 * jax.random.normal(ks[4], (Cout,), jnp.float32),
        "bn_var":   jnp.abs(1.0 + 0.1 * jax.random.normal(ks[5], (Cout,), jnp.float32)),
    }
    x = jax.random.normal(ks[6], (N, Cin, H, W), jnp.float32)   # NCHW, as in PyTorch

    out = jax.block_until_ready(
        dcan_conv_forward(x, params, row_tile=8))               # 8-row tiles -> (2, 2) grid
    ref = _reference(x, params)

    assert out.shape == (N, Cout, H, W), out.shape
    np.testing.assert_allclose(np.asarray(out), np.asarray(ref), rtol=1e-4, atol=1e-4)
    print("KERNEL_OK")
</pallas_src>

<mosaic_0001>
module attributes {stable_mosaic.version = 11 : i64} {
  func.func @_conv3x3_relu_bn_kernel(%arg0: i32, %arg1: i32, %arg2: memref<1x8x24x4xf32, #tpu.memory_space<vmem>>, %arg3: memref<1x2x24x4xf32, #tpu.memory_space<vmem>>, %arg4: memref<3x12x128xf32, #tpu.memory_space<vmem>>, %arg5: memref<1x128xf32, #tpu.memory_space<vmem>>, %arg6: memref<1x128xf32, #tpu.memory_space<vmem>>, %arg7: memref<1x128xf32, #tpu.memory_space<vmem>>, %arg8: memref<1x32x128xf32, #tpu.memory_space<vmem>>) attributes {dimension_semantics = [#tpu.dimension_semantics<parallel>, #tpu.dimension_semantics<parallel>], iteration_bounds = array<i64: 2, 2>, scalar_prefetch = 0 : i64, scratch_operands = 0 : i64, tpu.core_type = #tpu.core_type<tc>, window_params = [{transform_indices = @transform_0, window_bounds = array<i64: 1, 8, 24, 4>}, {transform_indices = @transform_1, window_bounds = array<i64: 1, 2, 24, 4>}, {pipeline_mode = #tpu.pipeline_mode<synchronous>, transform_indices = @transform_2, window_bounds = array<i64: 3, 12, 128>}, {pipeline_mode = #tpu.pipeline_mode<synchronous>, transform_indices = @transform_3, window_bounds = array<i64: 1, 128>}, {pipeline_mode = #tpu.pipeline_mode<synchronous>, transform_indices = @transform_4, window_bounds = array<i64: 1, 128>}, {pipeline_mode = #tpu.pipeline_mode<synchronous>, transform_indices = @transform_5, window_bounds = array<i64: 1, 128>}, {transform_indices = @transform_6, window_bounds = array<i64: 1, 32, 128>}]} {
    %c0 = arith.constant 0 : index
    %c0_0 = arith.constant 0 : index
    %c0_1 = arith.constant 0 : index
    %c0_2 = arith.constant 0 : index
    %0 = vector.load %arg2[%c0, %c0_0, %c0_1, %c0_2] : memref<1x8x24x4xf32, #tpu.memory_space<vmem>>, vector<1x8x24x4xf32>
    %1 = vector.shape_cast %0 : vector<1x8x24x4xf32> to vector<8x24x4xf32>
    %c0_3 = arith.constant 0 : index
    %c0_4 = arith.constant 0 : index
    %c0_5 = arith.constant 0 : index
    %c0_6 = arith.constant 0 : index
    %2 = vector.load %arg3[%c0_3, %c0_4, %c0_5, %c0_6] : memref<1x2x24x4xf32, #tpu.memory_space<vmem>>, vector<1x2x24x4xf32>
    %3 = vector.shape_cast %2 : vector<1x2x24x4xf32> to vector<2x24x4xf32>
    %4 = tpu.concatenate %1, %3 in 0 : vector<8x24x4xf32>, vector<2x24x4xf32> -> vector<10x24x4xf32>
    %cst = arith.constant 0.000000e+00 : f32
    %5 = vector.broadcast %cst : f32 to vector<192x128xf32>
    %6 = vector.extract_strided_slice %4 {offsets = [0, 0, 0], sizes = [8, 24, 4], strides = [1, 1, 1]} : vector<10x24x4xf32> to vector<8x24x4xf32>
    %7 = vector.extract_strided_slice %4 {offsets = [1, 0, 0], sizes = [8, 24, 4], strides = [1, 1, 1]} : vector<10x24x4xf32> to vector<8x24x4xf32>
    %8 = vector.extract_strided_slice %4 {offsets = [2, 0, 0], sizes = [8, 24, 4], strides = [1, 1, 1]} : vector<10x24x4xf32> to vector<8x24x4xf32>
    %9 = tpu.concatenate %6, %7, %8 in 2 : vector<8x24x4xf32>, vector<8x24x4xf32>, vector<8x24x4xf32> -> vector<8x24x12xf32>
    %10 = vector.shape_cast %9 : vector<8x24x12xf32> to vector<192x12xf32>
    %c1_i32 = arith.constant 1 : i32
    %11 = tpu.dynamic_rotate %10 by %c1_i32 dim 0 : vector<192x12xf32>, i32 -> vector<192x12xf32>
    %c0_7 = arith.constant 0 : index
    %c0_8 = arith.constant 0 : index
    %c0_9 = arith.constant 0 : index
    %12 = vector.load %arg4[%c0_7, %c0_8, %c0_9] : memref<3x12x128xf32, #tpu.memory_space<vmem>>, vector<1x12x128xf32>
    %13 = vector.shape_cast %12 : vector<1x12x128xf32> to vector<12x128xf32>
    %cst_10 = arith.constant dense<0.000000e+00> : vector<192x128xf32>
    %14 = tpu.matmul %11, %13, %cst_10 {dimension_numbers = #tpu.dot_dimension_numbers<[1], [0], [0], [1], [0, 0, 1, 1], [], []>} : vector<192x12xf32>, vector<12x128xf32>, vector<192x128xf32> -> vector<192x128xf32>
    %15 = arith.addf %5, %14 : vector<192x128xf32>
    %c1 = arith.constant 1 : index
    %c0_11 = arith.constant 0 : index
    %c0_12 = arith.constant 0 : index
    %16 = vector.load %arg4[%c1, %c0_11, %c0_12] : memref<3x12x128xf32, #tpu.memory_space<vmem>>, vector<1x12x128xf32>
    %17 = vector.shape_cast %16 : vector<1x12x128xf32> to vector<12x128xf32>
    %cst_13 = arith.constant dense<0.000000e+00> : vector<192x128xf32>
    %18 = tpu.matmul %10, %17, %cst_13 {dimension_numbers = #tpu.dot_dimension_numbers<[1], [0], [0], [1], [0, 0, 1, 1], [], []>} : vector<192x12xf32>, vector<12x128xf32>, vector<192x128xf32> -> vector<192x128xf32>
    %19 = arith.addf %15, %18 : vector<192x128xf32>
    %c191_i32 = arith.constant 191 : i32
    %20 = tpu.dynamic_rotate %10 by %c191_i32 dim 0 : vector<192x12xf32>, i32 -> vector<192x12xf32>
    %c2 = arith.constant 2 : index
    %c0_14 = arith.constant 0 : index
    %c0_15 = arith.constant 0 : index
    %21 = vector.load %arg4[%c2, %c0_14, %c0_15] : memref<3x12x128xf32, #tpu.memory_space<vmem>>, vector<1x12x128xf32>
    %22 = vector.shape_cast %21 : vector<1x12x128xf32> to vector<12x128xf32>
    %cst_16 = arith.constant dense<0.000000e+00> : vector<192x128xf32>
    %23 = tpu.matmul %20, %22, %cst_16 {dimension_numbers = #tpu.dot_dimension_numbers<[1], [0], [0], [1], [0, 0, 1, 1], [], []>} : vector<192x12xf32>, vector<12x128xf32>, vector<192x128xf32> -> vector<192x128xf32>
    %24 = arith.addf %19, %23 : vector<192x128xf32>
    %c0_17 = arith.constant 0 : index
    %c0_18 = arith.constant 0 : index
    %25 = vector.load %arg5[%c0_17, %c0_18] : memref<1x128xf32, #tpu.memory_space<vmem>>, vector<1x128xf32>
    %26 = vector.broadcast %25 : vector<1x128xf32> to vector<192x128xf32>
    %27 = arith.addf %24, %26 : vector<192x128xf32>
    %cst_19 = arith.constant 0.000000e+00 : f32
    %28 = vector.broadcast %cst_19 : f32 to vector<192x128xf32>
    %29 = arith.maximumf %27, %28 : vector<192x128xf32>
    %c0_20 = arith.constant 0 : index
    %c0_21 = arith.constant 0 : index
    %30 = vector.load %arg6[%c0_20, %c0_21] : memref<1x128xf32, #tpu.memory_space<vmem>>, vector<1x128xf32>
    %31 = vector.broadcast %30 : vector<1x128xf32> to vector<192x128xf32>
    %32 = arith.mulf %29, %31 : vector<192x128xf32>
    %c0_22 = arith.constant 0 : index
    %c0_23 = arith.constant 0 : index
    %33 = vector.load %arg7[%c0_22, %c0_23] : memref<1x128xf32, #tpu.memory_space<vmem>>, vector<1x128xf32>
    %34 = vector.broadcast %33 : vector<1x128xf32> to vector<192x128xf32>
    %35 = arith.addf %32, %34 : vector<192x128xf32>
    %36 = vector.shape_cast %35 : vector<192x128xf32> to vector<8x24x128xf32>
    %37 = vector.extract_strided_slice %36 {offsets = [0, 0, 0], sizes = [8, 16, 128], strides = [1, 1, 1]} : vector<8x24x128xf32> to vector<8x16x128xf32>
    %38 = vector.shape_cast %37 : vector<8x16x128xf32> to vector<128x128xf32>
    %39 = tpu.transpose %38, [1, 0] : vector<128x128xf32> -> vector<128x128xf32>
    %40 = vector.extract_strided_slice %39 {offsets = [0, 0], sizes = [32, 128], strides = [1, 1]} : vector<128x128xf32> to vector<32x128xf32>
    %41 = vector.shape_cast %40 : vector<32x128xf32> to vector<1x32x128xf32>
    %c0_24 = arith.constant 0 : index
    %c0_25 = arith.constant 0 : index
    %c0_26 = arith.constant 0 : index
    %42 = vector.load %arg8[%c0_24, %c0_25, %c0_26] : memref<1x32x128xf32, #tpu.memory_space<vmem>>, vector<1x32x128xf32>
    tpu.vector_store %arg8[%c0_24, %c0_25, %c0_26], %41 {strides = array<i32>} : memref<1x32x128xf32, #tpu.memory_space<vmem>>, vector<1x32x128xf32>,
    return
  }
  func.func @transform_0(%arg0: i32, %arg1: i32) -> (i32, i32, i32, i32) {
    %c0_i32 = arith.constant 0 : i32
    %c0_i32_0 = arith.constant 0 : i32
    %c0_i32_1 = arith.constant 0 : i32
    return %arg0, %arg1, %c0_i32, %c0_i32_0 : i32, i32, i32, i32
  }
  func.func @transform_1(%arg0: i32, %arg1: i32) -> (i32, i32, i32, i32) {
    %c1_i32 = arith.constant 1 : i32
    %0 = arith.addi %arg1, %c1_i32 : i32
    %c4_i32 = arith.constant 4 : i32
    %1 = arith.muli %0, %c4_i32 : i32
    %c0_i32 = arith.constant 0 : i32
    %c0_i32_0 = arith.constant 0 : i32
    %c0_i32_1 = arith.constant 0 : i32
    return %arg0, %1, %c0_i32, %c0_i32_0 : i32, i32, i32, i32
  }
  func.func @transform_2(%arg0: i32, %arg1: i32) -> (i32, i32, i32) {
    %c0_i32 = arith.constant 0 : i32
    %c0_i32_0 = arith.constant 0 : i32
    %c0_i32_1 = arith.constant 0 : i32
    %c0_i32_2 = arith.constant 0 : i32
    return %c0_i32, %c0_i32_0, %c0_i32_1 : i32, i32, i32
  }
  func.func @transform_3(%arg0: i32, %arg1: i32) -> (i32, i32) {
    %c0_i32 = arith.constant 0 : i32
    %c0_i32_0 = arith.constant 0 : i32
    %c0_i32_1 = arith.constant 0 : i32
    return %c0_i32, %c0_i32_0 : i32, i32
  }
  func.func @transform_4(%arg0: i32, %arg1: i32) -> (i32, i32) {
    %c0_i32 = arith.constant 0 : i32
    %c0_i32_0 = arith.constant 0 : i32
    %c0_i32_1 = arith.constant 0 : i32
    return %c0_i32, %c0_i32_0 : i32, i32
  }
  func.func @transform_5(%arg0: i32, %arg1: i32) -> (i32, i32) {
    %c0_i32 = arith.constant 0 : i32
    %c0_i32_0 = arith.constant 0 : i32
    %c0_i32_1 = arith.constant 0 : i32
    return %c0_i32, %c0_i32_0 : i32, i32
  }
  func.func @transform_6(%arg0: i32, %arg1: i32) -> (i32, i32, i32) {
    %c0_i32 = arith.constant 0 : i32
    %c0_i32_0 = arith.constant 0 : i32
    return %arg0, %c0_i32, %arg1 : i32, i32, i32
  }
}

module attributes {stable_mosaic.version = 11 : i64} {
  func.func @_conv3x3_relu_bn_kernel(%arg0: i32, %arg1: i32, %arg2: memref<1x8x24x4xf32, #tpu.memory_space<vmem>>, %arg3: memref<1x2x24x4xf32, #tpu.memory_space<vmem>>, %arg4: memref<3x12x128xf32, #tpu.memory_space<vmem>>, %arg5: memref<1x128xf32, #tpu.memory_space<vmem>>, %arg6: memref<1x128xf32, #tpu.memory_space<vmem>>, %arg7: memref<1x128xf32, #tpu.memory_space<vmem>>, %arg8: memref<1x32x128xf32, #tpu.memory_space<vmem>>) attributes {dimension_semantics = [#tpu.dimension_semantics<parallel>, #tpu.dimension_semantics<parallel>], iteration_bounds = array<i64: 2, 2>, scalar_prefetch = 0 : i64, scratch_operands = 0 : i64, tpu.core_type = #tpu.core_type<tc>, window_params = [{transform_indices = @transform_0, window_bounds = array<i64: 1, 8, 24, 4>}, {transform_indices = @transform_1, window_bounds = array<i64: 1, 2, 24, 4>}, {pipeline_mode = #tpu.pipeline_mode<synchronous>, transform_indices = @transform_2, window_bounds = array<i64: 3, 12, 128>}, {pipeline_mode = #tpu.pipeline_mode<synchronous>, transform_indices = @transform_3, window_bounds = array<i64: 1, 128>}, {pipeline_mode = #tpu.pipeline_mode<synchronous>, transform_indices = @transform_4, window_bounds = array<i64: 1, 128>}, {pipeline_mode = #tpu.pipeline_mode<synchronous>, transform_indices = @transform_5, window_bounds = array<i64: 1, 128>}, {transform_indices = @transform_6, window_bounds = array<i64: 1, 32, 128>}]} {
    %c0 = arith.constant 0 : index
    %c0_0 = arith.constant 0 : index
    %c0_1 = arith.constant 0 : index
    %c0_2 = arith.constant 0 : index
    %0 = vector.load %arg2[%c0, %c0_0, %c0_1, %c0_2] : memref<1x8x24x4xf32, #tpu.memory_space<vmem>>, vector<1x8x24x4xf32>
    %1 = vector.shape_cast %0 : vector<1x8x24x4xf32> to vector<8x24x4xf32>
    %c0_3 = arith.constant 0 : index
    %c0_4 = arith.constant 0 : index
    %c0_5 = arith.constant 0 : index
    %c0_6 = arith.constant 0 : index
    %2 = vector.load %arg3[%c0_3, %c0_4, %c0_5, %c0_6] : memref<1x2x24x4xf32, #tpu.memory_space<vmem>>, vector<1x2x24x4xf32>
    %3 = vector.shape_cast %2 : vector<1x2x24x4xf32> to vector<2x24x4xf32>
    %4 = tpu.concatenate %1, %3 in 0 : vector<8x24x4xf32>, vector<2x24x4xf32> -> vector<10x24x4xf32>
    %cst = arith.constant 0.000000e+00 : f32
    %5 = vector.broadcast %cst : f32 to vector<192x128xf32>
    %6 = vector.shape_cast %4 : vector<10x24x4xf32> to vector<240x4xf32>
    %c1_i32 = arith.constant 1 : i32
    %7 = tpu.dynamic_rotate %6 by %c1_i32 dim 0 : vector<240x4xf32>, i32 -> vector<240x4xf32>
    %c239_i32 = arith.constant 239 : i32
    %8 = tpu.dynamic_rotate %6 by %c239_i32 dim 0 : vector<240x4xf32>, i32 -> vector<240x4xf32>
    %9 = vector.extract_strided_slice %7 {offsets = [0, 0], sizes = [192, 4], strides = [1, 1]} : vector<240x4xf32> to vector<192x4xf32>
    %c0_7 = arith.constant 0 : index
    %c0_8 = arith.constant 0 : index
    %c0_9 = arith.constant 0 : index
    %10 = vector.load %arg4[%c0_7, %c0_8, %c0_9] : memref<3x12x128xf32, #tpu.memory_space<vmem>>, vector<1x12x128xf32>
    %11 = vector.shape_cast %10 : vector<1x12x128xf32> to vector<12x128xf32>
    %12 = vector.extract_strided_slice %11 {offsets = [0, 0], sizes = [4, 128], strides = [1, 1]} : vector<12x128xf32> to vector<4x128xf32>
    %cst_10 = arith.constant dense<0.000000e+00> : vector<192x128xf32>
    %13 = tpu.matmul %9, %12, %cst_10 {dimension_numbers = #tpu.dot_dimension_numbers<[1], [0], [0], [1], [0, 0, 1, 1], [], []>} : vector<192x4xf32>, vector<4x128xf32>, vector<192x128xf32> -> vector<192x128xf32>
    %14 = arith.addf %5, %13 : vector<192x128xf32>
    %15 = vector.extract_strided_slice %6 {offsets = [0, 0], sizes = [192, 4], strides = [1, 1]} : vector<240x4xf32> to vector<192x4xf32>
    %c1 = arith.constant 1 : index
    %c0_11 = arith.constant 0 : index
    %c0_12 = arith.constant 0 : index
    %16 = vector.load %arg4[%c1, %c0_11, %c0_12] : memref<3x12x128xf32, #tpu.memory_space<vmem>>, vector<1x12x128xf32>
    %17 = vector.shape_cast %16 : vector<1x12x128xf32> to vector<12x128xf32>
    %18 = vector.extract_strided_slice %17 {offsets = [0, 0], sizes = [4, 128], strides = [1, 1]} : vector<12x128xf32> to vector<4x128xf32>
    %cst_13 = arith.constant dense<0.000000e+00> : vector<192x128xf32>
    %19 = tpu.matmul %15, %18, %cst_13 {dimension_numbers = #tpu.dot_dimension_numbers<[1], [0], [0], [1], [0, 0, 1, 1], [], []>} : vector<192x4xf32>, vector<4x128xf32>, vector<192x128xf32> -> vector<192x128xf32>
    %20 = arith.addf %14, %19 : vector<192x128xf32>
    %21 = vector.extract_strided_slice %8 {offsets = [0, 0], sizes = [192, 4], strides = [1, 1]} : vector<240x4xf32> to vector<192x4xf32>
    %c2 = arith.constant 2 : index
    %c0_14 = arith.constant 0 : index
    %c0_15 = arith.constant 0 : index
    %22 = vector.load %arg4[%c2, %c0_14, %c0_15] : memref<3x12x128xf32, #tpu.memory_space<vmem>>, vector<1x12x128xf32>
    %23 = vector.shape_cast %22 : vector<1x12x128xf32> to vector<12x128xf32>
    %24 = vector.extract_strided_slice %23 {offsets = [0, 0], sizes = [4, 128], strides = [1, 1]} : vector<12x128xf32> to vector<4x128xf32>
    %cst_16 = arith.constant dense<0.000000e+00> : vector<192x128xf32>
    %25 = tpu.matmul %21, %24, %cst_16 {dimension_numbers = #tpu.dot_dimension_numbers<[1], [0], [0], [1], [0, 0, 1, 1], [], []>} : vector<192x4xf32>, vector<4x128xf32>, vector<192x128xf32> -> vector<192x128xf32>
    %26 = arith.addf %20, %25 : vector<192x128xf32>
    %27 = vector.extract_strided_slice %7 {offsets = [24, 0], sizes = [192, 4], strides = [1, 1]} : vector<240x4xf32> to vector<192x4xf32>
    %c0_17 = arith.constant 0 : index
    %c0_18 = arith.constant 0 : index
    %c0_19 = arith.constant 0 : index
    %28 = vector.load %arg4[%c0_17, %c0_18, %c0_19] : memref<3x12x128xf32, #tpu.memory_space<vmem>>, vector<1x12x128xf32>
    %29 = vector.shape_cast %28 : vector<1x12x128xf32> to vector<12x128xf32>
    %30 = vector.extract_strided_slice %29 {offsets = [4, 0], sizes = [4, 128], strides = [1, 1]} : vector<12x128xf32> to vector<4x128xf32>
    %cst_20 = arith.constant dense<0.000000e+00> : vector<192x128xf32>
    %31 = tpu.matmul %27, %30, %cst_20 {dimension_numbers = #tpu.dot_dimension_numbers<[1], [0], [0], [1], [0, 0, 1, 1], [], []>} : vector<192x4xf32>, vector<4x128xf32>, vector<192x128xf32> -> vector<192x128xf32>
    %32 = arith.addf %26, %31 : vector<192x128xf32>
    %33 = vector.extract_strided_slice %6 {offsets = [24, 0], sizes = [192, 4], strides = [1, 1]} : vector<240x4xf32> to vector<192x4xf32>
    %c1_21 = arith.constant 1 : index
    %c0_22 = arith.constant 0 : index
    %c0_23 = arith.constant 0 : index
    %34 = vector.load %arg4[%c1_21, %c0_22, %c0_23] : memref<3x12x128xf32, #tpu.memory_space<vmem>>, vector<1x12x128xf32>
    %35 = vector.shape_cast %34 : vector<1x12x128xf32> to vector<12x128xf32>
    %36 = vector.extract_strided_slice %35 {offsets = [4, 0], sizes = [4, 128], strides = [1, 1]} : vector<12x128xf32> to vector<4x128xf32>
    %cst_24 = arith.constant dense<0.000000e+00> : vector<192x128xf32>
    %37 = tpu.matmul %33, %36, %cst_24 {dimension_numbers = #tpu.dot_dimension_numbers<[1], [0], [0], [1], [0, 0, 1, 1], [], []>} : vector<192x4xf32>, vector<4x128xf32>, vector<192x128xf32> -> vector<192x128xf32>
    %38 = arith.addf %32, %37 : vector<192x128xf32>
    %39 = vector.extract_strided_slice %8 {offsets = [24, 0], sizes = [192, 4], strides = [1, 1]} : vector<240x4xf32> to vector<192x4xf32>
    %c2_25 = arith.constant 2 : index
    %c0_26 = arith.constant 0 : index
    %c0_27 = arith.constant 0 : index
    %40 = vector.load %arg4[%c2_25, %c0_26, %c0_27] : memref<3x12x128xf32, #tpu.memory_space<vmem>>, vector<1x12x128xf32>
    %41 = vector.shape_cast %40 : vector<1x12x128xf32> to vector<12x128xf32>
    %42 = vector.extract_strided_slice %41 {offsets = [4, 0], sizes = [4, 128], strides = [1, 1]} : vector<12x128xf32> to vector<4x128xf32>
    %cst_28 = arith.constant dense<0.000000e+00> : vector<192x128xf32>
    %43 = tpu.matmul %39, %42, %cst_28 {dimension_numbers = #tpu.dot_dimension_numbers<[1], [0], [0], [1], [0, 0, 1, 1], [], []>} : vector<192x4xf32>, vector<4x128xf32>, vector<192x128xf32> -> vector<192x128xf32>
    %44 = arith.addf %38, %43 : vector<192x128xf32>
    %45 = vector.extract_strided_slice %7 {offsets = [48, 0], sizes = [192, 4], strides = [1, 1]} : vector<240x4xf32> to vector<192x4xf32>
    %c0_29 = arith.constant 0 : index
    %c0_30 = arith.constant 0 : index
    %c0_31 = arith.constant 0 : index
    %46 = vector.load %arg4[%c0_29, %c0_30, %c0_31] : memref<3x12x128xf32, #tpu.memory_space<vmem>>, vector<1x12x128xf32>
    %47 = vector.shape_cast %46 : vector<1x12x128xf32> to vector<12x128xf32>
    %48 = vector.extract_strided_slice %47 {offsets = [8, 0], sizes = [4, 128], strides = [1, 1]} : vector<12x128xf32> to vector<4x128xf32>
    %cst_32 = arith.constant dense<0.000000e+00> : vector<192x128xf32>
    %49 = tpu.matmul %45, %48, %cst_32 {dimension_numbers = #tpu.dot_dimension_numbers<[1], [0], [0], [1], [0, 0, 1, 1], [], []>} : vector<192x4xf32>, vector<4x128xf32>, vector<192x128xf32> -> vector<192x128xf32>
    %50 = arith.addf %44, %49 : vector<192x128xf32>
    %51 = vector.extract_strided_slice %6 {offsets = [48, 0], sizes = [192, 4], strides = [1, 1]} : vector<240x4xf32> to vector<192x4xf32>
    %c1_33 = arith.constant 1 : index
    %c0_34 = arith.constant 0 : index
    %c0_35 = arith.constant 0 : index
    %52 = vector.load %arg4[%c1_33, %c0_34, %c0_35] : memref<3x12x128xf32, #tpu.memory_space<vmem>>, vector<1x12x128xf32>
    %53 = vector.shape_cast %52 : vector<1x12x128xf32> to vector<12x128xf32>
    %54 = vector.extract_strided_slice %53 {offsets = [8, 0], sizes = [4, 128], strides = [1, 1]} : vector<12x128xf32> to vector<4x128xf32>
    %cst_36 = arith.constant dense<0.000000e+00> : vector<192x128xf32>
    %55 = tpu.matmul %51, %54, %cst_36 {dimension_numbers = #tpu.dot_dimension_numbers<[1], [0], [0], [1], [0, 0, 1, 1], [], []>} : vector<192x4xf32>, vector<4x128xf32>, vector<192x128xf32> -> vector<192x128xf32>
    %56 = arith.addf %50, %55 : vector<192x128xf32>
    %57 = vector.extract_strided_slice %8 {offsets = [48, 0], sizes = [192, 4], strides = [1, 1]} : vector<240x4xf32> to vector<192x4xf32>
    %c2_37 = arith.constant 2 : index
    %c0_38 = arith.constant 0 : index
    %c0_39 = arith.constant 0 : index
    %58 = vector.load %arg4[%c2_37, %c0_38, %c0_39] : memref<3x12x128xf32, #tpu.memory_space<vmem>>, vector<1x12x128xf32>
    %59 = vector.shape_cast %58 : vector<1x12x128xf32> to vector<12x128xf32>
    %60 = vector.extract_strided_slice %59 {offsets = [8, 0], sizes = [4, 128], strides = [1, 1]} : vector<12x128xf32> to vector<4x128xf32>
    %cst_40 = arith.constant dense<0.000000e+00> : vector<192x128xf32>
    %61 = tpu.matmul %57, %60, %cst_40 {dimension_numbers = #tpu.dot_dimension_numbers<[1], [0], [0], [1], [0, 0, 1, 1], [], []>} : vector<192x4xf32>, vector<4x128xf32>, vector<192x128xf32> -> vector<192x128xf32>
    %62 = arith.addf %56, %61 : vector<192x128xf32>
    %c0_41 = arith.constant 0 : index
    %c0_42 = arith.constant 0 : index
    %63 = vector.load %arg5[%c0_41, %c0_42] : memref<1x128xf32, #tpu.memory_space<vmem>>, vector<1x128xf32>
    %64 = vector.broadcast %63 : vector<1x128xf32> to vector<192x128xf32>
    %65 = arith.addf %62, %64 : vector<192x128xf32>
    %cst_43 = arith.constant 0.000000e+00 : f32
    %66 = vector.broadcast %cst_43 : f32 to vector<192x128xf32>
    %67 = arith.maximumf %65, %66 : vector<192x128xf32>
    %c0_44 = arith.constant 0 : index
    %c0_45 = arith.constant 0 : index
    %68 = vector.load %arg6[%c0_44, %c0_45] : memref<1x128xf32, #tpu.memory_space<vmem>>, vector<1x128xf32>
    %69 = vector.broadcast %68 : vector<1x128xf32> to vector<192x128xf32>
    %70 = arith.mulf %67, %69 : vector<192x128xf32>
    %c0_46 = arith.constant 0 : index
    %c0_47 = arith.constant 0 : index
    %71 = vector.load %arg7[%c0_46, %c0_47] : memref<1x128xf32, #tpu.memory_space<vmem>>, vector<1x128xf32>
    %72 = vector.broadcast %71 : vector<1x128xf32> to vector<192x128xf32>
    %73 = arith.addf %70, %72 : vector<192x128xf32>
    %74 = vector.shape_cast %73 : vector<192x128xf32> to vector<8x24x128xf32>
    %75 = vector.extract_strided_slice %74 {offsets = [0, 0, 0], sizes = [8, 16, 128], strides = [1, 1, 1]} : vector<8x24x128xf32> to vector<8x16x128xf32>
    %76 = vector.shape_cast %75 : vector<8x16x128xf32> to vector<128x128xf32>
    %77 = tpu.transpose %76, [1, 0] : vector<128x128xf32> -> vector<128x128xf32>
    %78 = vector.extract_strided_slice %77 {offsets = [0, 0], sizes = [32, 128], strides = [1, 1]} : vector<128x128xf32> to vector<32x128xf32>
    %79 = vector.shape_cast %78 : vector<32x128xf32> to vector<1x32x128xf32>
    %c0_48 = arith.constant 0 : index
    %c0_49 = arith.constant 0 : index
    %c0_50 = arith.constant 0 : index
    %80 = vector.load %arg8[%c0_48, %c0_49, %c0_50] : memref<1x32x128xf32, #tpu.memory_space<vmem>>, vector<1x32x128xf32>
    tpu.vector_store %arg8[%c0_48, %c0_49, %c0_50], %79 {strides = array<i32>} : memref<1x32x128xf32, #tpu.memory_space<vmem>>, vector<1x32x128xf32>,
    return
  }
  func.func @transform_0(%arg0: i32, %arg1: i32) -> (i32, i32, i32, i32) {
    %c0_i32 = arith.constant 0 : i32
    %c0_i32_0 = arith.constant 0 : i32
    %c0_i32_1 = arith.constant 0 : i32
    return %arg0, %arg1, %c0_i32, %c0_i32_0 : i32, i32, i32, i32
  }
  func.func @transform_1(%arg0: i32, %arg1: i32) -> (i32, i32, i32, i32) {
    %c1_i32 = arith.constant 1 : i32
    %0 = arith.addi %arg1, %c1_i32 : i32
    %c4_i32 = arith.constant 4 : i32
    %1 = arith.muli %0, %c4_i32 : i32
    %c0_i32 = arith.constant 0 : i32
    %c0_i32_0 = arith.constant 0 : i32
    %c0_i32_1 = arith.constant 0 : i32
    return %arg0, %1, %c0_i32, %c0_i32_0 : i32, i32, i32, i32
  }
  func.func @transform_2(%arg0: i32, %arg1: i32) -> (i32, i32, i32) {
    %c0_i32 = arith.constant 0 : i32
    %c0_i32_0 = arith.constant 0 : i32
    %c0_i32_1 = arith.constant 0 : i32
    %c0_i32_2 = arith.constant 0 : i32
    return %c0_i32, %c0_i32_0, %c0_i32_1 : i32, i32, i32
  }
  func.func @transform_3(%arg0: i32, %arg1: i32) -> (i32, i32) {
    %c0_i32 = arith.constant 0 : i32
    %c0_i32_0 = arith.constant 0 : i32
    %c0_i32_1 = arith.constant 0 : i32
    return %c0_i32, %c0_i32_0 : i32, i32
  }
  func.func @transform_4(%arg0: i32, %arg1: i32) -> (i32, i32) {
    %c0_i32 = arith.constant 0 : i32
    %c0_i32_0 = arith.constant 0 : i32
    %c0_i32_1 = arith.constant 0 : i32
    return %c0_i32, %c0_i32_0 : i32, i32
  }
  func.func @transform_5(%arg0: i32, %arg1: i32) -> (i32, i32) {
    %c0_i32 = arith.constant 0 : i32
    %c0_i32_0 = arith.constant 0 : i32
    %c0_i32_1 = arith.constant 0 : i32
    return %c0_i32, %c0_i32_0 : i32, i32
  }
  func.func @transform_6(%arg0: i32, %arg1: i32) -> (i32, i32, i32) {
    %c0_i32 = arith.constant 0 : i32
    %c0_i32_0 = arith.constant 0 : i32
    return %arg0, %c0_i32, %arg1 : i32, i32, i32
  }
}

</mosaic_0001>

<llo_original>
// kernel: tpu_custom_call.1
$region0: #{tpu_custom_call.1}
  #allocation0 [shape = 'u32[]', space=smem, size = 0x4, offset = 0x4, fixed_abs, tag = 'smem constant byte address 0x4 - core index']
  #allocation1 [shape = 'u32[72,128]{1,0:T(1,128)}', space=vmem, size = 0x9000, scoped, tag = 'internal scratch']
  %s0 = inlined_call_operand.vmem [shape: f32[2,18,24,4], index: 0, kind: input, shape index: {}]
  %s1 = inlined_call_operand.vmem [shape: f32[2,18,24,4], index: 1, kind: input, shape index: {}]
  %s2 = inlined_call_operand.vmem [shape: f32[3,12,128], index: 2, kind: input, shape index: {}]
  %s3 = inlined_call_operand.vmem [shape: f32[1,128], index: 3, kind: input, shape index: {}]
  %s4 = inlined_call_operand.vmem [shape: f32[1,128], index: 4, kind: input, shape index: {}]
  %s5 = inlined_call_operand.vmem [shape: f32[1,128], index: 5, kind: input, shape index: {}]
  %s6 = inlined_call_operand.hbm [shape: f32[2,32,256], index: 6, kind: output, shape index: {}]
  %s7 = sld [smem:[#allocation0]]
  $region57: #{tpu_custom_call.1} parent=0
    _
  %s9 = ssub.s32 1, %s7
  %s10 = scalar_select 0, %s9, %s7
  $region1: #{tpu_custom_call.1} parent=0
    #allocation2 [shape = 'u8[32768]{0}', space=vmem, size = 0x8000, scoped, tag = 'output window, operand 0']
    #allocation3 [shape = 's32[2]{0}', space=sflag, size = 0x8, scoped, tag = 'scoped memory for tpu_custom_call.1']
    %11 = vsyncpa [#allocation3], 0
    %s12 = scalar_lea.sflag [#allocation3], 1
    %13 = vsyncpa %s12, 0
    loop: start=0, step=1, limit=6
    $region2: #{tpu_custom_call.1} parent=1 // loop_pre_header
      _
    $region3: #{tpu_custom_call.1} parent=1 // loop_header
      %s15 = sphi 0, %s19
      %p16 = scmp.ge.s32.totalorder %s15, 6
      %s22 = sphi 0, %s34
      %s23 = sphi 0, %s30
      %s24 = sphi 0, %s22
      %s25 = sphi 0, %s23
      %s26 = sphi 0, %s24
      %s27 = sphi 0, %s25
      %s39 = sphi 0, %s41
      %s42 = sphi 0, %s39
      %s43 = sphi 0, %s42
      %s59 = sphi 0, %s43
      %s71 = sphi 0, %s73
      %s74 = sphi 0, %s71
      %s75 = sphi 0, %s74
      %s91 = sphi 0, %s75
      %s95 = sphi 0, %s95
      %s97 = sphi 0, %s95
      %s98 = sphi 0, %s97
      %s112 = sphi 0, %s98
      %s116 = sphi 0, %s116
      %s118 = sphi 0, %s116
      %s119 = sphi 0, %s118
      %s133 = sphi 0, %s119
      %s137 = sphi 0, %s137
      %s139 = sphi 0, %s137
      %s140 = sphi 0, %s139
      %s154 = sphi 0, %s140
      %s158 = sphi 0, %s158
      %s160 = sphi 0, %s158
      %s161 = sphi 0, %s160
      %s175 = sphi 0, %s161
      %s183 = sphi 0, %s185
      %s186 = sphi 0, %s183
      %s187 = sphi 0, %s186
      %s203 = sphi 0, %s187
    $region4: #{tpu_custom_call.1} parent=1 // loop_header_branch
      %18 = sbr.rel (%p16) target = $region8
    $region5: #{tpu_custom_call.1} parent=1 // loop_body
      %s20 = ssub.s32 %s15, 1
      %s21 = ssub.s32 %s15, 2
      %s28 = sadd.s32 1, %s23
      %p29 = scmp.ge.s32.totalorder %s28, 2
      %s30 = scalar_select %p29, 0, %s28
      %s31 = sadd.s32 1, %s22
      %s32 = scalar_select %p29, %s31, %s22
      %p33 = scmp.ge.s32.totalorder %s32, 2
      %s34 = scalar_select %p33, 0, %s32
      %s35 = ssub.s32 %s22, %s34
      %s36 = ssub.s32 %s23, %s30
      %s37 = sor.u32 %s35, %s36
      %p38 = scmp.eq.s32.totalorder %s37, 0
      %s40 = sadd.s32 %s39, 1
      %s41 = scalar_select %p38, %s39, %s40
      %p44 = pneg %p38
      %p45 = scmp.eq.s32.totalorder %s15, 3
      %p46 = por %p44, %p45
      %p47 = scmp.ne.s32.totalorder %s39, %s42
      %p48 = scmp.eq.s32.totalorder %s15, 0
      %p49 = por %p47, %p48
      %p50 = scmp.ne.s32.totalorder %s39, %s42
      %p51 = scmp.eq.s32.totalorder %s20, 3
      %p52 = por %p50, %p51
      %p53 = scmp.ne.s32.totalorder %s42, %s43
      %p54 = scmp.eq.s32.totalorder %s20, 0
      %p55 = por %p53, %p54
      %p56 = scmp.ne.s32.totalorder %s42, %s43
      %p57 = scmp.eq.s32.totalorder %s21, 3
      %p58 = por %p56, %p57
      %p60 = scmp.ne.s32.totalorder %s43, %s59
      %p61 = scmp.eq.s32.totalorder %s21, 0
      %p62 = por %p60, %p61
      %s63 = sadd.s32 %s23, 1
      %s64 = smul.u32 %s63, 4
      %s65 = sadd.s32 %s30, 1
      %s66 = smul.u32 %s65, 4
      %s67 = ssub.s32 %s22, %s34
      %s68 = ssub.s32 %s64, %s66
      %s69 = sor.u32 %s67, %s68
      %p70 = scmp.eq.s32.totalorder %s69, 0
      %s72 = sadd.s32 %s71, 1
      %s73 = scalar_select %p70, %s71, %s72
      %p76 = pneg %p70
      %p77 = scmp.eq.s32.totalorder %s15, 3
      %p78 = por %p76, %p77
      %p79 = scmp.ne.s32.totalorder %s71, %s74
      %p80 = scmp.eq.s32.totalorder %s15, 0
      %p81 = por %p79, %p80
      %p82 = scmp.ne.s32.totalorder %s71, %s74
      %p83 = scmp.eq.s32.totalorder %s20, 3
      %p84 = por %p82, %p83
      %p85 = scmp.ne.s32.totalorder %s74, %s75
      %p86 = scmp.eq.s32.totalorder %s20, 0
      %p87 = por %p85, %p86
      %p88 = scmp.ne.s32.totalorder %s74, %s75
      %p89 = scmp.eq.s32.totalorder %s21, 3
      %p90 = por %p88, %p89
      %p92 = scmp.ne.s32.totalorder %s75, %s91
      %p93 = scmp.eq.s32.totalorder %s21, 0
      %p94 = por %p92, %p93
      %s96 = sadd.s32 %s95, 1
      %p99 = scmp.eq.s32.totalorder %s15, 3
      %p100 = scmp.ne.s32.totalorder %s95, %s97
      %p101 = scmp.eq.s32.totalorder %s15, 0
      %p102 = por %p100, %p101
      %p103 = scmp.ne.s32.totalorder %s95, %s97
      %p104 = scmp.eq.s32.totalorder %s20, 3
      %p105 = por %p103, %p104
      %p106 = scmp.ne.s32.totalorder %s97, %s98
      %p107 = scmp.eq.s32.totalorder %s20, 0
      %p108 = por %p106, %p107
      %p109 = scmp.ne.s32.totalorder %s97, %s98
      %p110 = scmp.eq.s32.totalorder %s21, 3
      %p111 = por %p109, %p110
      %p113 = scmp.ne.s32.totalorder %s98, %s112
      %p114 = scmp.eq.s32.totalorder %s21, 0
      %p115 = por %p113, %p114
      %s117 = sadd.s32 %s116, 1
      %p120 = scmp.eq.s32.totalorder %s15, 3
      %p121 = scmp.ne.s32.totalorder %s116, %s118
      %p122 = scmp.eq.s32.totalorder %s15, 0
      %p123 = por %p121, %p122
      %p124 = scmp.ne.s32.totalorder %s116, %s118
      %p125 = scmp.eq.s32.totalorder %s20, 3
      %p126 = por %p124, %p125
      %p127 = scmp.ne.s32.totalorder %s118, %s119
      %p128 = scmp.eq.s32.totalorder %s20, 0
      %p129 = por %p127, %p128
      %p130 = scmp.ne.s32.totalorder %s118, %s119
      %p131 = scmp.eq.s32.totalorder %s21, 3
      %p132 = por %p130, %p131
      %p134 = scmp.ne.s32.totalorder %s119, %s133
      %p135 = scmp.eq.s32.totalorder %s21, 0
      %p136 = por %p134, %p135
      %s138 = sadd.s32 %s137, 1
      %p141 = scmp.eq.s32.totalorder %s15, 3
      %p142 = scmp.ne.s32.totalorder %s137, %s139
      %p143 = scmp.eq.s32.totalorder %s15, 0
      %p144 = por %p142, %p143
      %p145 = scmp.ne.s32.totalorder %s137, %s139
      %p146 = scmp.eq.s32.totalorder %s20, 3
      %p147 = por %p145, %p146
      %p148 = scmp.ne.s32.totalorder %s139, %s140
      %p149 = scmp.eq.s32.totalorder %s20, 0
      %p150 = por %p148, %p149
      %p151 = scmp.ne.s32.totalorder %s139, %s140
      %p152 = scmp.eq.s32.totalorder %s21, 3
      %p153 = por %p151, %p152
      %p155 = scmp.ne.s32.totalorder %s140, %s154
      %p156 = scmp.eq.s32.totalorder %s21, 0
      %p157 = por %p155, %p156
      %s159 = sadd.s32 %s158, 1
      %p162 = scmp.eq.s32.totalorder %s15, 3
      %p163 = scmp.ne.s32.totalorder %s158, %s160
      %p164 = scmp.eq.s32.totalorder %s15, 0
      %p165 = por %p163, %p164
      %p166 = scmp.ne.s32.totalorder %s158, %s160
      %p167 = scmp.eq.s32.totalorder %s20, 3
      %p168 = por %p166, %p167
      %p169 = scmp.ne.s32.totalorder %s160, %s161
      %p170 = scmp.eq.s32.totalorder %s20, 0
      %p171 = por %p169, %p170
      %p172 = scmp.ne.s32.totalorder %s160, %s161
      %p173 = scmp.eq.s32.totalorder %s21, 3
      %p174 = por %p172, %p173
      %p176 = scmp.ne.s32.totalorder %s161, %s175
      %p177 = scmp.eq.s32.totalorder %s21, 0
      %p178 = por %p176, %p177
      %s179 = ssub.s32 %s22, %s34
      %s180 = ssub.s32 %s23, %s30
      %s181 = sor.u32 %s179, %s180
      %p182 = scmp.eq.s32.totalorder %s181, 0
      %s184 = sadd.s32 %s183, 1
      %s185 = scalar_select %p182, %s183, %s184
      %p188 = pneg %p182
      %p189 = scmp.eq.s32.totalorder %s15, 3
      %p190 = por %p188, %p189
      %p191 = scmp.ne.s32.totalorder %s183, %s186
      %p192 = scmp.eq.s32.totalorder %s15, 0
      %p193 = por %p191, %p192
      %p194 = scmp.ne.s32.totalorder %s183, %s186
      %p195 = scmp.eq.s32.totalorder %s20, 3
      %p196 = por %p194, %p195
      %p197 = scmp.ne.s32.totalorder %s186, %s187
      %p198 = scmp.eq.s32.totalorder %s20, 0
      %p199 = por %p197, %p198
      %p200 = scmp.ne.s32.totalorder %s186, %s187
      %p201 = scmp.eq.s32.totalorder %s21, 3
      %p202 = por %p200, %p201
      %p204 = scmp.ne.s32.totalorder %s187, %s203
      %p205 = scmp.eq.s32.totalorder %s21, 0
      %p206 = por %p204, %p205
      %p207 = scmp.le.s32.totalorder 1, %s15
      %p208 = scmp.lt.s32.totalorder %s15, 5
      %p209 = pnand %p207, %p208
      %p210 = pneg %p209
      // Predicated region
      $region9: #{tpu_custom_call.1} parent=5 // pred_check
        _
      $region10: #{tpu_custom_call.1} parent=5 // pred_check_branch
        %212 = sbr.rel (%p209) target = $region12
      $region11: #{tpu_custom_call.1} parent=5 // pred_region
        %s213 = ssub.s32 %s15, 1
        // Predicated region
        $region13: #{tpu_custom_call.1} parent=11 // pred_check
          %p214 = pneg %p108
        $region14: #{tpu_custom_call.1} parent=11 // pred_check_branch
          %216 = sbr.rel (%p214) target = $region16
        $region15: #{tpu_custom_call.1} parent=11 // pred_region
          _
        $region16: #{tpu_custom_call.1} parent=11 // pred_fallthru
          _
        // Predicated region
        $region17: #{tpu_custom_call.1} parent=11 // pred_check
          %p217 = pneg %p129
        $region18: #{tpu_custom_call.1} parent=11 // pred_check_branch
          %219 = sbr.rel (%p217) target = $region20
        $region19: #{tpu_custom_call.1} parent=11 // pred_region
          _
        $region20: #{tpu_custom_call.1} parent=11 // pred_fallthru
          _
        // Predicated region
        $region21: #{tpu_custom_call.1} parent=11 // pred_check
          %p220 = pneg %p150
        $region22: #{tpu_custom_call.1} parent=11 // pred_check_branch
          %222 = sbr.rel (%p220) target = $region24
        $region23: #{tpu_custom_call.1} parent=11 // pred_region
          _
        $region24: #{tpu_custom_call.1} parent=11 // pred_fallthru
          _
        // Predicated region
        $region25: #{tpu_custom_call.1} parent=11 // pred_check
          %p223 = pneg %p171
        $region26: #{tpu_custom_call.1} parent=11 // pred_check_branch
          %225 = sbr.rel (%p223) target = $region28
        $region27: #{tpu_custom_call.1} parent=11 // pred_region
          _
        $region28: #{tpu_custom_call.1} parent=11 // pred_fallthru
          _
      $region12: #{tpu_custom_call.1} parent=5 // pred_fallthru
        _
      %p226 = scmp.lt.s32.totalorder %s15, 4
      // Predicated region
      $region29: #{tpu_custom_call.1} parent=5 // pred_check
        %p227 = pneg %p226
      $region30: #{tpu_custom_call.1} parent=5 // pred_check_branch
        %229 = sbr.rel (%p227) target = $region32
      $region31: #{tpu_custom_call.1} parent=5 // pred_region
        // Predicated region
        $region33: #{tpu_custom_call.1} parent=31 // pred_check
          %p230 = pneg %p49
        $region34: #{tpu_custom_call.1} parent=31 // pred_check_branch
          %232 = sbr.rel (%p230) target = $region36
        $region35: #{tpu_custom_call.1} parent=31 // pred_region
          %s233 = smul.u32 8, %s23
          %s234 = ssub.s32 18, %s233
          %p235 = scmp.lt.s32.totalorder %s234, 8
          %s236 = scalar_select %p235, %s234, 8
          %s237 = smul.u32 8, %s236
          %s238 = smul.u32 %s237, 3
          %p239 = scmp.lt.s32.totalorder %s22, 1
          %s240 = scalar_select %p239, %s22, 1
          %p241 = scmp.lt.s32.totalorder %s233, 17
          %s242 = scalar_select %p241, %s233, 17
          %s243 = smul.addr %s242, 3
          %s244 = smul.addr %s240, 54
          %s245 = sadd.s32 %s243, %s244
          %s246 = smul.addr %s245, 8
          %s247 = scalar_lea.vmem %s0, %s246
          %s248 = smul.u32 8, %s23
          %s249 = ssub.s32 18, %s248
          %p250 = scmp.lt.s32.totalorder %s249, 8
          %s251 = scalar_select %p250, %s249, 8
          %s252 = smul.u32 8, %s251
          %s253 = smul.u32 %s252, 3
        $region36: #{tpu_custom_call.1} parent=31 // pred_fallthru
          _
        // Predicated region
        $region37: #{tpu_custom_call.1} parent=31 // pred_check
          %p254 = pneg %p81
        $region38: #{tpu_custom_call.1} parent=31 // pred_check_branch
          %256 = sbr.rel (%p254) target = $region40
        $region39: #{tpu_custom_call.1} parent=31 // pred_region
          %s257 = sadd.s32 %s23, 1
          %s258 = smul.u32 %s257, 4
          %s259 = smul.u32 2, %s258
          %p260 = scmp.lt.s32.totalorder %s22, 1
          %s261 = scalar_select %p260, %s22, 1
          %p262 = scmp.lt.s32.totalorder %s259, 17
          %s263 = scalar_select %p262, %s259, 17
          %s264 = smul.addr %s263, 3
          %s265 = smul.addr %s261, 54
          %s266 = sadd.s32 %s264, %s265
          %s267 = smul.addr %s266, 8
          %s268 = scalar_lea.vmem %s1, %s267
          %s269 = sadd.s32 %s23, 1
          %s270 = smul.u32 %s269, 4
          %s271 = smul.u32 2, %s270
        $region40: #{tpu_custom_call.1} parent=31 // pred_fallthru
          _
      $region32: #{tpu_custom_call.1} parent=5 // pred_fallthru
        _
      %p272 = scmp.le.s32.totalorder 1, %s15
      %p273 = scmp.lt.s32.totalorder %s15, 5
      %p274 = pnand %p272, %p273
      %p275 = pneg %p274
      // Predicated region
      $region41: #{tpu_custom_call.1} parent=5 // pred_check
        _
      $region42: #{tpu_custom_call.1} parent=5 // pred_check_branch
        %277 = sbr.rel (%p274) target = $region44
      $region43: #{tpu_custom_call.1} parent=5 // pred_region
        %s278 = ssub.s32 %s15, 1
        %s279 = smul.u32 8, %s25
        %s280 = ssub.s32 18, %s279
        %p281 = scmp.lt.s32.totalorder %s280, 8
        %s282 = scalar_select %p281, %s280, 8
        %s283 = smul.u32 8, %s282
        %s284 = smul.u32 %s283, 3
        %p285 = scmp.lt.s32.totalorder %s24, 1
        %s286 = scalar_select %p285, %s24, 1
        %p287 = scmp.lt.s32.totalorder %s279, 17
        %s288 = scalar_select %p287, %s279, 17
        %s289 = smul.addr %s288, 3
        %s290 = smul.addr %s286, 54
        %s291 = sadd.s32 %s289, %s290
        %s292 = smul.addr %s291, 8
        %s293 = scalar_lea.vmem %s0, %s292
        %p294 = pneg %p55
        %p295 = pneg %p52
        %s296 = sadd.s32 %s25, 1
        %s297 = smul.u32 %s296, 4
        %s298 = smul.u32 2, %s297
        %p299 = scmp.lt.s32.totalorder %s24, 1
        %s300 = scalar_select %p299, %s24, 1
        %p301 = scmp.lt.s32.totalorder %s298, 17
        %s302 = scalar_select %p301, %s298, 17
        %s303 = smul.addr %s302, 3
        %s304 = smul.addr %s300, 54
        %s305 = sadd.s32 %s303, %s304
        %s306 = smul.addr %s305, 8
        %s307 = scalar_lea.vmem %s1, %s306
        %p308 = pneg %p87
        %p309 = pneg %p84
        %p310 = pneg %p108
        %p311 = pneg %p105
        %p312 = pneg %p129
        %p313 = pneg %p126
        %p314 = pneg %p150
        %p315 = pneg %p147
        %p316 = pneg %p171
        %p317 = pneg %p168
        %p318 = pneg %p199
        %p319 = pneg %p196
        %s320 = sand.u32 %s186, 1
        %s321 = scalar_lea.sflag [#allocation3], %s320
        %s322 = sand.u32 %s186, 1
        %s323 = smul.addr %s322, 32
        %s324 = scalar_lea.vmem [#allocation2], %s323
        %s325 = smul.u32 8, %s25
        %s326 = ssub.s32 18, %s325
        %p327 = scmp.lt.s32.totalorder %s326, 8
        %s328 = scalar_select %p327, %s326, 8
        %s329 = smul.u32 8, %s328
        %s330 = smul.u32 %s329, 3
        %p331 = scmp.lt.s32.totalorder %s24, 1
        %s332 = scalar_select %p331, %s24, 1
        %p333 = scmp.lt.s32.totalorder %s325, 17
        %s334 = scalar_select %p333, %s325, 17
        %s335 = smul.addr %s334, 3
        %s336 = smul.addr %s332, 54
        %s337 = sadd.s32 %s335, %s336
        %s338 = smul.addr %s337, 8
        %s339 = scalar_lea.vmem %s0, %s338
        %s340 = smul.u32 8, %s25
        %s341 = ssub.s32 18, %s340
        %p342 = scmp.lt.s32.totalorder %s341, 8
        %s343 = scalar_select %p342, %s341, 8
        %s344 = smul.u32 8, %s343
        %s345 = smul.u32 %s344, 3
        %s346 = sadd.s32 %s25, 1
        %s347 = smul.u32 %s346, 4
        %s348 = smul.u32 2, %s347
        %p349 = scmp.lt.s32.totalorder %s24, 1
        %s350 = scalar_select %p349, %s24, 1
        %p351 = scmp.lt.s32.totalorder %s348, 17
        %s352 = scalar_select %p351, %s348, 17
        %s353 = smul.addr %s352, 3
        %s354 = smul.addr %s350, 54
        %s355 = sadd.s32 %s353, %s354
        %s356 = smul.addr %s355, 8
        %s357 = scalar_lea.vmem %s1, %s356
        %s358 = sadd.s32 %s25, 1
        %s359 = smul.u32 %s358, 4
        %s360 = smul.u32 2, %s359
        %v361 = vld [vmem:[%s339] sm:$0xff]
        %v362 = vld [vmem:[%s339 + $0x8] sm:$0xff]
        %v363 = vld [vmem:[%s339 + $0x10] sm:$0xff]
        %v364 = vld [vmem:[%s339 + $0x18] sm:$0xff]
        %v365 = vld [vmem:[%s339 + $0x20] sm:$0xff]
        %v366 = vld [vmem:[%s339 + $0x28] sm:$0xff]
        %v367 = vld [vmem:[%s339 + $0x30] sm:$0xff]
        %v368 = vld [vmem:[%s339 + $0x38] sm:$0xff]
        %v369 = vld [vmem:[%s339 + $0x40] sm:$0xff]
        %v370 = vld [vmem:[%s339 + $0x48] sm:$0xff]
        %v371 = vld [vmem:[%s339 + $0x50] sm:$0xff]
        %v372 = vld [vmem:[%s339 + $0x58] sm:$0xff]
        %v373 = vld [vmem:[%s339 + $0x60] sm:$0xff]
        %v374 = vld [vmem:[%s339 + $0x68] sm:$0xff]
        %v375 = vld [vmem:[%s339 + $0x70] sm:$0xff]
        %v376 = vld [vmem:[%s339 + $0x78] sm:$0xff]
        %v377 = vld [vmem:[%s339 + $0x80] sm:$0xff]
        %v378 = vld [vmem:[%s339 + $0x88] sm:$0xff]
        %v379 = vld [vmem:[%s339 + $0x90] sm:$0xff]
        %v380 = vld [vmem:[%s339 + $0x98] sm:$0xff]
        %v381 = vld [vmem:[%s339 + $0xa0] sm:$0xff]
        %v382 = vld [vmem:[%s339 + $0xa8] sm:$0xff]
        %v383 = vld [vmem:[%s339 + $0xb0] sm:$0xff]
        %v384 = vld [vmem:[%s339 + $0xb8] sm:$0xff]
        %v385 = vld [vmem:[%s357] sm:$0xff]
        %v386 = vld [vmem:[%s357 + $0x8] sm:$0xff]
        %v387 = vld [vmem:[%s357 + $0x10] sm:$0xff]
        %v388 = vld [vmem:[%s357 + $0x18] sm:$0xff]
        %v389 = vld [vmem:[%s357 + $0x20] sm:$0xff]
        %v390 = vld [vmem:[%s357 + $0x28] sm:$0xff]
        %415 = vrot.lane.b32.xlu0 %v364, 4
        %v416 = vpop.permute.xlu0 %415
        %417 = vrot.lane.b32.xlu0 %v365, 4
        %v418 = vpop.permute.xlu0 %417
        %419 = vrot.lane.b32.xlu0 %v366, 4
        %v420 = vpop.permute.xlu0 %419
        %421 = vrot.lane.b32.xlu0 %v367, 4
        %v422 = vpop.permute.xlu0 %421
        %423 = vrot.lane.b32.xlu0 %v368, 4
        %v424 = vpop.permute.xlu0 %423
        %425 = vrot.lane.b32.xlu0 %v369, 4
        %v426 = vpop.permute.xlu0 %425
        %427 = vrot.lane.b32.xlu0 %v370, 4
        %v428 = vpop.permute.xlu0 %427
        %429 = vrot.lane.b32.xlu0 %v371, 4
        %v430 = vpop.permute.xlu0 %429
        %431 = vrot.lane.b32.xlu0 %v372, 4
        %v432 = vpop.permute.xlu0 %431
        %433 = vrot.lane.b32.xlu0 %v373, 4
        %v434 = vpop.permute.xlu0 %433
        %435 = vrot.lane.b32.xlu0 %v374, 4
        %v436 = vpop.permute.xlu0 %435
        %437 = vrot.lane.b32.xlu0 %v375, 4
        %v438 = vpop.permute.xlu0 %437
        %439 = vrot.lane.b32.xlu0 %v376, 4
        %v440 = vpop.permute.xlu0 %439
        %441 = vrot.lane.b32.xlu0 %v377, 4
        %v442 = vpop.permute.xlu0 %441
        %443 = vrot.lane.b32.xlu0 %v378, 4
        %v444 = vpop.permute.xlu0 %443
        %445 = vrot.lane.b32.xlu0 %v379, 4
        %v446 = vpop.permute.xlu0 %445
        %447 = vrot.lane.b32.xlu0 %v380, 4
        %v448 = vpop.permute.xlu0 %447
        %449 = vrot.lane.b32.xlu0 %v381, 4
        %v450 = vpop.permute.xlu0 %449
        %451 = vrot.lane.b32.xlu0 %v382, 4
        %v452 = vpop.permute.xlu0 %451
        %453 = vrot.lane.b32.xlu0 %v383, 4
        %v454 = vpop.permute.xlu0 %453
        %455 = vrot.lane.b32.xlu0 %v384, 4
        %v456 = vpop.permute.xlu0 %455
        %457 = vrot.lane.b32.xlu0 %v385, 4
        %v458 = vpop.permute.xlu0 %457
        %459 = vrot.lane.b32.xlu0 %v386, 4
        %v460 = vpop.permute.xlu0 %459
        %461 = vrot.lane.b32.xlu0 %v387, 4
        %v462 = vpop.permute.xlu0 %461
        %490 = vrot.lane.b32.xlu0 %v367, 8
        %v491 = vpop.permute.xlu0 %490
        %492 = vrot.lane.b32.xlu0 %v368, 8
        %v493 = vpop.permute.xlu0 %492
        %494 = vrot.lane.b32.xlu0 %v369, 8
        %v495 = vpop.permute.xlu0 %494
        %496 = vrot.lane.b32.xlu0 %v370, 8
        %v497 = vpop.permute.xlu0 %496
        %498 = vrot.lane.b32.xlu0 %v371, 8
        %v499 = vpop.permute.xlu0 %498
        %500 = vrot.lane.b32.xlu0 %v372, 8
        %v501 = vpop.permute.xlu0 %500
        %502 = vrot.lane.b32.xlu0 %v373, 8
        %v503 = vpop.permute.xlu0 %502
        %504 = vrot.lane.b32.xlu0 %v374, 8
        %v505 = vpop.permute.xlu0 %504
        %506 = vrot.lane.b32.xlu0 %v375, 8
        %v507 = vpop.permute.xlu0 %506
        %508 = vrot.lane.b32.xlu0 %v376, 8
        %v509 = vpop.permute.xlu0 %508
        %510 = vrot.lane.b32.xlu0 %v377, 8
        %v511 = vpop.permute.xlu0 %510
        %512 = vrot.lane.b32.xlu0 %v378, 8
        %v513 = vpop.permute.xlu0 %512
        %514 = vrot.lane.b32.xlu0 %v379, 8
        %v515 = vpop.permute.xlu0 %514
        %516 = vrot.lane.b32.xlu0 %v380, 8
        %v517 = vpop.permute.xlu0 %516
        %518 = vrot.lane.b32.xlu0 %v381, 8
        %v519 = vpop.permute.xlu0 %518
        %520 = vrot.lane.b32.xlu0 %v382, 8
        %v521 = vpop.permute.xlu0 %520
        %522 = vrot.lane.b32.xlu0 %v383, 8
        %v523 = vpop.permute.xlu0 %522
        %524 = vrot.lane.b32.xlu0 %v384, 8
        %v525 = vpop.permute.xlu0 %524
        %526 = vrot.lane.b32.xlu0 %v385, 8
        %v527 = vpop.permute.xlu0 %526
        %528 = vrot.lane.b32.xlu0 %v386, 8
        %v529 = vpop.permute.xlu0 %528
        %530 = vrot.lane.b32.xlu0 %v387, 8
        %v531 = vpop.permute.xlu0 %530
        %532 = vrot.lane.b32.xlu0 %v388, 8
        %v533 = vpop.permute.xlu0 %532
        %534 = vrot.lane.b32.xlu0 %v389, 8
        %v535 = vpop.permute.xlu0 %534
        %536 = vrot.lane.b32.xlu0 %v390, 8
        %v537 = vpop.permute.xlu0 %536
        %vm562 = vcmask 31744
        %v563 = vsel %vm562, %v361, %v416
        %v564 = vsel %vm562, %v362, %v418
        %v565 = vsel %vm562, %v363, %v420
        %v566 = vsel %vm562, %v364, %v422
        %v567 = vsel %vm562, %v365, %v424
        %v568 = vsel %vm562, %v366, %v426
        %v569 = vsel %vm562, %v367, %v428
        %v570 = vsel %vm562, %v368, %v430
        %v571 = vsel %vm562, %v369, %v432
        %v572 = vsel %vm562, %v370, %v434
        %v573 = vsel %vm562, %v371, %v436
        %v574 = vsel %vm562, %v372, %v438
        %v575 = vsel %vm562, %v373, %v440
        %v576 = vsel %vm562, %v374, %v442
        %v577 = vsel %vm562, %v375, %v444
        %v578 = vsel %vm562, %v376, %v446
        %v579 = vsel %vm562, %v377, %v448
        %v580 = vsel %vm562, %v378, %v450
        %v581 = vsel %vm562, %v379, %v452
        %v582 = vsel %vm562, %v380, %v454
        %v583 = vsel %vm562, %v381, %v456
        %v584 = vsel %vm562, %v382, %v458
        %v585 = vsel %vm562, %v383, %v460
        %v586 = vsel %vm562, %v384, %v462
        %vm587 = vcmask 64512
        %v588 = vsel %vm587, %v563, %v491
        %v589 = vsel %vm587, %v564, %v493
        %v590 = vsel %vm587, %v565, %v495
        %v591 = vsel %vm587, %v566, %v497
        %v592 = vsel %vm587, %v567, %v499
        %v593 = vsel %vm587, %v568, %v501
        %v594 = vsel %vm587, %v569, %v503
        %v595 = vsel %vm587, %v570, %v505
        %v596 = vsel %vm587, %v571, %v507
        %v597 = vsel %vm587, %v572, %v509
        %v598 = vsel %vm587, %v573, %v511
        %v599 = vsel %vm587, %v574, %v513
        %v600 = vsel %vm587, %v575, %v515
        %v601 = vsel %vm587, %v576, %v517
        %v602 = vsel %vm587, %v577, %v519
        %v603 = vsel %vm587, %v578, %v521
        %v604 = vsel %vm587, %v579, %v523
        %v605 = vsel %vm587, %v580, %v525
        %v606 = vsel %vm587, %v581, %v527
        %v607 = vsel %vm587, %v582, %v529
        %v608 = vsel %vm587, %v583, %v531
        %v609 = vsel %vm587, %v584, %v533
        %v610 = vsel %vm587, %v585, %v535
        %v611 = vsel %vm587, %v586, %v537
        %v612 = vrot.slane %v588, 7
        %v613 = vrot.slane %v589, 7
        %v614 = vrot.slane %v590, 7
        %v615 = vrot.slane %v591, 7
        %v616 = vrot.slane %v592, 7
        %v617 = vrot.slane %v593, 7
        %v618 = vrot.slane %v594, 7
        %v619 = vrot.slane %v595, 7
        %v620 = vrot.slane %v596, 7
        %v621 = vrot.slane %v597, 7
        %v622 = vrot.slane %v598, 7
        %v623 = vrot.slane %v599, 7
        %v624 = vrot.slane %v600, 7
        %v625 = vrot.slane %v601, 7
        %v626 = vrot.slane %v602, 7
        %v627 = vrot.slane %v603, 7
        %v628 = vrot.slane %v604, 7
        %v629 = vrot.slane %v605, 7
        %v630 = vrot.slane %v606, 7
        %v631 = vrot.slane %v607, 7
        %v632 = vrot.slane %v608, 7
        %v633 = vrot.slane %v609, 7
        %v634 = vrot.slane %v610, 7
        %v635 = vrot.slane %v611, 7
        %v636 = vlaneseq
        %v637 = vshrl.u32 %v636, 7
        %vm638 = vcmp.lt.s32.totalorder %v637, 1
        %v639 = vsel %vm638, %v634, %v635
        %v640 = vsel %vm638, %v633, %v634
        %v641 = vsel %vm638, %v632, %v633
        %v642 = vsel %vm638, %v631, %v632
        %v643 = vsel %vm638, %v630, %v631
        %v644 = vsel %vm638, %v629, %v630
        %v645 = vsel %vm638, %v628, %v629
        %v646 = vsel %vm638, %v627, %v628
        %v647 = vsel %vm638, %v626, %v627
        %v648 = vsel %vm638, %v625, %v626
        %v649 = vsel %vm638, %v624, %v625
        %v650 = vsel %vm638, %v623, %v624
        %v651 = vsel %vm638, %v622, %v623
        %v652 = vsel %vm638, %v621, %v622
        %v653 = vsel %vm638, %v620, %v621
        %v654 = vsel %vm638, %v619, %v620
        %v655 = vsel %vm638, %v618, %v619
        %v656 = vsel %vm638, %v617, %v618
        %v657 = vsel %vm638, %v616, %v617
        %v658 = vsel %vm638, %v615, %v616
        %v659 = vsel %vm638, %v614, %v615
        %v660 = vsel %vm638, %v613, %v614
        %v661 = vsel %vm638, %v612, %v613
        %v662 = vsel %vm638, %v635, %v612
        %v663 = vld [vmem:[%s2] sm:$0xff]
        %v664 = vld [vmem:[%s2 + $0x8] sm:$0xf]
        %s665 = scalar_lea.vmem %s2, 16
        %v666 = vld [vmem:[%s665] sm:$0xff]
        %v667 = vld [vmem:[%s665 + $0x8] sm:$0xf]
        %vm668 = vcmask 97280
        %v670 = vsel %vm668, %v588, 0
        %v673 = vsel %vm668, %v589, 0
        %v676 = vsel %vm668, %v590, 0
        %v679 = vsel %vm668, %v591, 0
        %v682 = vsel %vm668, %v592, 0
        %v685 = vsel %vm668, %v593, 0
        %v688 = vsel %vm668, %v594, 0
        %v691 = vsel %vm668, %v595, 0
        %v694 = vsel %vm668, %v596, 0
        %v697 = vsel %vm668, %v597, 0
        %v700 = vsel %vm668, %v598, 0
        %v703 = vsel %vm668, %v599, 0
        %v706 = vsel %vm668, %v600, 0
        %v709 = vsel %vm668, %v601, 0
        %v712 = vsel %vm668, %v602, 0
        %v715 = vsel %vm668, %v603, 0
        %v718 = vsel %vm668, %v604, 0
        %v721 = vsel %vm668, %v605, 0
        %v724 = vsel %vm668, %v606, 0
        %v727 = vsel %vm668, %v607, 0
        %v730 = vsel %vm668, %v608, 0
        %v733 = vsel %vm668, %v609, 0
        %v736 = vsel %vm668, %v610, 0
        %v739 = vsel %vm668, %v611, 0
        %vm741 = vcmask 1043456
        %v743 = vsel %vm741, %v667, 0
        %745 = vmatpush.msra.mxu0 0.0
        %746 = vmatpush.msra.mxu0 0.0
        %747 = vmatpush.msra.mxu0 0.0
        %748 = vmatpush.msra.mxu0 0.0
        %749 = vmatpush.msra.mxu0 0.0
        %750 = vmatpush.msra.mxu0 0.0
        %751 = vmatpush.msra.mxu0 0.0
        %752 = vmatpush.msra.mxu0 0.0
        %753 = vmatpush.msra.mxu0 0.0
        %754 = vmatpush.msra.mxu0 0.0
        %755 = vmatpush.msra.mxu0 0.0
        %756 = vmatpush.msra.mxu0 0.0
        %757 = vmatpush.msra.mxu0 0.0
        %758 = vmatpush.msra.mxu0 0.0
        %759 = vmatpush.msra.mxu0 %v743
        %760 = vmatpush.msra.mxu0 %v666
        %761 = vmatmul.f32.gmra.mxu0 %v670
        %v762 = vpop.f32.mrf.mxu0
        %v763 = vadd.f32 0.0, %v762
        %764 = vmatmul.f32.gmra.mxu0 %v673
        %v765 = vpop.f32.mrf.mxu0
        %v766 = vadd.f32 0.0, %v765
        %767 = vmatmul.f32.gmra.mxu0 %v676
        %v768 = vpop.f32.mrf.mxu0
        %769 = vmatmul.f32.gmra.mxu0 %v679
        %v770 = vpop.f32.mrf.mxu0
        %v771 = vadd.f32 0.0, %v770
        %772 = vmatmul.f32.gmra.mxu0 %v682
        %v773 = vpop.f32.mrf.mxu0
        %v774 = vadd.f32 0.0, %v773
        %775 = vmatmul.f32.gmra.mxu0 %v685
        %v776 = vpop.f32.mrf.mxu0
        %777 = vmatmul.f32.gmra.mxu0 %v688
        %v778 = vpop.f32.mrf.mxu0
        %v779 = vadd.f32 0.0, %v778
        %780 = vmatmul.f32.gmra.mxu0 %v691
        %v781 = vpop.f32.mrf.mxu0
        %v782 = vadd.f32 0.0, %v781
        %783 = vmatmul.f32.gmra.mxu0 %v694
        %v784 = vpop.f32.mrf.mxu0
        %785 = vmatmul.f32.gmra.mxu0 %v697
        %v786 = vpop.f32.mrf.mxu0
        %v787 = vadd.f32 0.0, %v786
        %788 = vmatmul.f32.gmra.mxu0 %v700
        %v789 = vpop.f32.mrf.mxu0
        %v790 = vadd.f32 0.0, %v789
        %791 = vmatmul.f32.gmra.mxu0 %v703
        %v792 = vpop.f32.mrf.mxu0
        %793 = vmatmul.f32.gmra.mxu0 %v706
        %v794 = vpop.f32.mrf.mxu0
        %v795 = vadd.f32 0.0, %v794
        %796 = vmatmul.f32.gmra.mxu0 %v709
        %v797 = vpop.f32.mrf.mxu0
        %v798 = vadd.f32 0.0, %v797
        %799 = vmatmul.f32.gmra.mxu0 %v712
        %v800 = vpop.f32.mrf.mxu0
        %801 = vmatmul.f32.gmra.mxu0 %v715
        %v802 = vpop.f32.mrf.mxu0
        %v803 = vadd.f32 0.0, %v802
        %804 = vmatmul.f32.gmra.mxu0 %v718
        %v805 = vpop.f32.mrf.mxu0
        %v806 = vadd.f32 0.0, %v805
        %807 = vmatmul.f32.gmra.mxu0 %v721
        %v808 = vpop.f32.mrf.mxu0
        %809 = vmatmul.f32.gmra.mxu0 %v724
        %v810 = vpop.f32.mrf.mxu0
        %v811 = vadd.f32 0.0, %v810
        %812 = vmatmul.f32.gmra.mxu0 %v727
        %v813 = vpop.f32.mrf.mxu0
        %v814 = vadd.f32 0.0, %v813
        %815 = vmatmul.f32.gmra.mxu0 %v730
        %v816 = vpop.f32.mrf.mxu0
        %817 = vmatmul.f32.gmra.mxu0 %v733
        %v818 = vpop.f32.mrf.mxu0
        %v819 = vadd.f32 0.0, %v818
        %820 = vmatmul.f32.gmra.mxu0 %v736
        %v821 = vpop.f32.mrf.mxu0
        %v822 = vadd.f32 0.0, %v821
        %823 = vmatmul.f32.gmra.mxu0 %v739
        %v824 = vpop.f32.mrf.mxu0
        %825 = vdwg.mxu0
        %v827 = vsel %vm668, %v662, 0
        %v830 = vsel %vm668, %v661, 0
        %v833 = vsel %vm668, %v660, 0
        %v836 = vsel %vm668, %v659, 0
        %v839 = vsel %vm668, %v658, 0
        %v842 = vsel %vm668, %v657, 0
        %v845 = vsel %vm668, %v656, 0
        %v848 = vsel %vm668, %v655, 0
        %v851 = vsel %vm668, %v654, 0
        %v854 = vsel %vm668, %v653, 0
        %v857 = vsel %vm668, %v652, 0
        %v860 = vsel %vm668, %v651, 0
        %v863 = vsel %vm668, %v650, 0
        %v866 = vsel %vm668, %v649, 0
        %v869 = vsel %vm668, %v648, 0
        %v872 = vsel %vm668, %v647, 0
        %v875 = vsel %vm668, %v646, 0
        %v878 = vsel %vm668, %v645, 0
        %v881 = vsel %vm668, %v644, 0
        %v884 = vsel %vm668, %v643, 0
        %v887 = vsel %vm668, %v642, 0
        %v890 = vsel %vm668, %v641, 0
        %v893 = vsel %vm668, %v640, 0
        %v896 = vsel %vm668, %v639, 0
        %v899 = vsel %vm741, %v664, 0
        %901 = vmatpush.msra.mxu0 0.0
        %902 = vmatpush.msra.mxu0 0.0
        %903 = vmatpush.msra.mxu0 0.0
        %904 = vmatpush.msra.mxu0 0.0
        %905 = vmatpush.msra.mxu0 0.0
        %906 = vmatpush.msra.mxu0 0.0
        %907 = vmatpush.msra.mxu0 0.0
        %908 = vmatpush.msra.mxu0 0.0
        %909 = vmatpush.msra.mxu0 0.0
        %910 = vmatpush.msra.mxu0 0.0
        %911 = vmatpush.msra.mxu0 0.0
        %912 = vmatpush.msra.mxu0 0.0
        %913 = vmatpush.msra.mxu0 0.0
        %914 = vmatpush.msra.mxu0 0.0
        %915 = vmatpush.msra.mxu0 %v899
        %916 = vmatpush.msra.mxu0 %v663
        %917 = vmatmul.f32.gmra.mxu0 %v827
        %v918 = vpop.f32.mrf.mxu0
        %v919 = vadd.f32 %v763, %v918
        %920 = vmatmul.f32.gmra.mxu0 %v830
        %v921 = vpop.f32.mrf.mxu0
        %v922 = vadd.f32 %v766, %v921
        %923 = vmatmul.f32.gmra.mxu0 %v833
        %v924 = vpop.f32.mrf.mxu0
        %925 = vmatmul.f32.gmra.mxu0 %v836
        %v926 = vpop.f32.mrf.mxu0
        %v927 = vadd.f32 %v771, %v926
        %928 = vmatmul.f32.gmra.mxu0 %v839
        %v929 = vpop.f32.mrf.mxu0
        %v930 = vadd.f32 %v774, %v929
        %931 = vmatmul.f32.gmra.mxu0 %v842
        %v932 = vpop.f32.mrf.mxu0
        %933 = vmatmul.f32.gmra.mxu0 %v845
        %v934 = vpop.f32.mrf.mxu0
        %v935 = vadd.f32 %v779, %v934
        %936 = vmatmul.f32.gmra.mxu0 %v848
        %v937 = vpop.f32.mrf.mxu0
        %v938 = vadd.f32 %v782, %v937
        %939 = vmatmul.f32.gmra.mxu0 %v851
        %v940 = vpop.f32.mrf.mxu0
        %941 = vmatmul.f32.gmra.mxu0 %v854
        %v942 = vpop.f32.mrf.mxu0
        %v943 = vadd.f32 %v787, %v942
        %944 = vmatmul.f32.gmra.mxu0 %v857
        %v945 = vpop.f32.mrf.mxu0
        %v946 = vadd.f32 %v790, %v945
        %947 = vmatmul.f32.gmra.mxu0 %v860
        %v948 = vpop.f32.mrf.mxu0
        %949 = vmatmul.f32.gmra.mxu0 %v863
        %v950 = vpop.f32.mrf.mxu0
        %v951 = vadd.f32 %v795, %v950
        %952 = vmatmul.f32.gmra.mxu0 %v866
        %v953 = vpop.f32.mrf.mxu0
        %v954 = vadd.f32 %v798, %v953
        %955 = vmatmul.f32.gmra.mxu0 %v869
        %v956 = vpop.f32.mrf.mxu0
        %957 = vmatmul.f32.gmra.mxu0 %v872
        %v958 = vpop.f32.mrf.mxu0
        %v959 = vadd.f32 %v803, %v958
        %960 = vmatmul.f32.gmra.mxu0 %v875
        %v961 = vpop.f32.mrf.mxu0
        %v962 = vadd.f32 %v806, %v961
        %963 = vmatmul.f32.gmra.mxu0 %v878
        %v964 = vpop.f32.mrf.mxu0
        %965 = vmatmul.f32.gmra.mxu0 %v881
        %v966 = vpop.f32.mrf.mxu0
        %v967 = vadd.f32 %v811, %v966
        %968 = vmatmul.f32.gmra.mxu0 %v884
        %v969 = vpop.f32.mrf.mxu0
        %v970 = vadd.f32 %v814, %v969
        %971 = vmatmul.f32.gmra.mxu0 %v887
        %v972 = vpop.f32.mrf.mxu0
        %973 = vmatmul.f32.gmra.mxu0 %v890
        %v974 = vpop.f32.mrf.mxu0
        %v975 = vadd.f32 %v819, %v974
        %976 = vmatmul.f32.gmra.mxu0 %v893
        %v977 = vpop.f32.mrf.mxu0
        %v978 = vadd.f32 %v822, %v977
        %979 = vmatmul.f32.gmra.mxu0 %v896
        %v980 = vpop.f32.mrf.mxu0
        %981 = vdwg.mxu0
        %v982 = vrot.slane %v588, 1
        %v983 = vrot.slane %v589, 1
        %v984 = vrot.slane %v590, 1
        %v985 = vrot.slane %v591, 1
        %v986 = vrot.slane %v592, 1
        %v987 = vrot.slane %v593, 1
        %v988 = vrot.slane %v594, 1
        %v989 = vrot.slane %v595, 1
        %v990 = vrot.slane %v596, 1
        %v991 = vrot.slane %v597, 1
        %v992 = vrot.slane %v598, 1
        %v993 = vrot.slane %v599, 1
        %v994 = vrot.slane %v600, 1
        %v995 = vrot.slane %v601, 1
        %v996 = vrot.slane %v602, 1
        %v997 = vrot.slane %v603, 1
        %v998 = vrot.slane %v604, 1
        %v999 = vrot.slane %v605, 1
        %v1000 = vrot.slane %v606, 1
        %v1001 = vrot.slane %v607, 1
        %v1002 = vrot.slane %v608, 1
        %v1003 = vrot.slane %v609, 1
        %v1004 = vrot.slane %v610, 1
        %v1005 = vrot.slane %v611, 1
        %vm1006 = vcmp.lt.s32.totalorder %v637, 7
        %v1007 = vsel %vm1006, %v1004, %v1005
        %v1008 = vsel %vm1006, %v1003, %v1004
        %v1009 = vsel %vm1006, %v1002, %v1003
        %v1010 = vsel %vm1006, %v1001, %v1002
        %v1011 = vsel %vm1006, %v1000, %v1001
        %v1012 = vsel %vm1006, %v999, %v1000
        %v1013 = vsel %vm1006, %v998, %v999
        %v1014 = vsel %vm1006, %v997, %v998
        %v1015 = vsel %vm1006, %v996, %v997
        %v1016 = vsel %vm1006, %v995, %v996
        %v1017 = vsel %vm1006, %v994, %v995
        %v1018 = vsel %vm1006, %v993, %v994
        %v1019 = vsel %vm1006, %v992, %v993
        %v1020 = vsel %vm1006, %v991, %v992
        %v1021 = vsel %vm1006, %v990, %v991
        %v1022 = vsel %vm1006, %v989, %v990
        %v1023 = vsel %vm1006, %v988, %v989
        %v1024 = vsel %vm1006, %v987, %v988
        %v1025 = vsel %vm1006, %v986, %v987
        %v1026 = vsel %vm1006, %v985, %v986
        %v1027 = vsel %vm1006, %v984, %v985
        %v1028 = vsel %vm1006, %v983, %v984
        %v1029 = vsel %vm1006, %v982, %v983
        %v1030 = vsel %vm1006, %v1005, %v982
        %s1031 = scalar_lea.vmem %s2, 32
        %v1032 = vld [vmem:[%s1031] sm:$0xff]
        %v1033 = vld [vmem:[%s1031 + $0x8] sm:$0xf]
        %v1035 = vsel %vm668, %v1029, 0
        %v1038 = vsel %vm668, %v1028, 0
        %v1041 = vsel %vm668, %v1027, 0
        %v1044 = vsel %vm668, %v1026, 0
        %v1047 = vsel %vm668, %v1025, 0
        %v1050 = vsel %vm668, %v1024, 0
        %v1053 = vsel %vm668, %v1023, 0
        %v1056 = vsel %vm668, %v1022, 0
        %v1059 = vsel %vm668, %v1021, 0
        %v1062 = vsel %vm668, %v1020, 0
        %v1065 = vsel %vm668, %v1019, 0
        %v1068 = vsel %vm668, %v1018, 0
        %v1071 = vsel %vm668, %v1017, 0
        %v1074 = vsel %vm668, %v1016, 0
        %v1077 = vsel %vm668, %v1015, 0
        %v1080 = vsel %vm668, %v1014, 0
        %v1083 = vsel %vm668, %v1013, 0
        %v1086 = vsel %vm668, %v1012, 0
        %v1089 = vsel %vm668, %v1011, 0
        %v1092 = vsel %vm668, %v1010, 0
        %v1095 = vsel %vm668, %v1009, 0
        %v1098 = vsel %vm668, %v1008, 0
        %v1101 = vsel %vm668, %v1007, 0
        %v1104 = vsel %vm668, %v1030, 0
        %v1107 = vsel %vm741, %v1033, 0
        %1109 = vmatpush.msra.mxu0 0.0
        %1110 = vmatpush.msra.mxu0 0.0
        %1111 = vmatpush.msra.mxu0 0.0
        %1112 = vmatpush.msra.mxu0 0.0
        %1113 = vmatpush.msra.mxu0 0.0
        %1114 = vmatpush.msra.mxu0 0.0
        %1115 = vmatpush.msra.mxu0 0.0
        %1116 = vmatpush.msra.mxu0 0.0
        %1117 = vmatpush.msra.mxu0 0.0
        %1118 = vmatpush.msra.mxu0 0.0
        %1119 = vmatpush.msra.mxu0 0.0
        %1120 = vmatpush.msra.mxu0 0.0
        %1121 = vmatpush.msra.mxu0 0.0
        %1122 = vmatpush.msra.mxu0 0.0
        %1123 = vmatpush.msra.mxu0 %v1107
        %1124 = vmatpush.msra.mxu0 %v1032
        %1125 = vmatmul.f32.gmra.mxu0 %v1035
        %v1126 = vpop.f32.mrf.mxu0
        %v1127 = vadd.f32 0.0, %v1126
        %1128 = vmatmul.f32.gmra.mxu0 %v1038
        %v1129 = vpop.f32.mrf.mxu0
        %v1130 = vadd.f32 0.0, %v1129
        %1131 = vmatmul.f32.gmra.mxu0 %v1041
        %v1132 = vpop.f32.mrf.mxu0
        %1133 = vmatmul.f32.gmra.mxu0 %v1044
        %v1134 = vpop.f32.mrf.mxu0
        %v1135 = vadd.f32 0.0, %v1134
        %1136 = vmatmul.f32.gmra.mxu0 %v1047
        %v1137 = vpop.f32.mrf.mxu0
        %v1138 = vadd.f32 0.0, %v1137
        %1139 = vmatmul.f32.gmra.mxu0 %v1050
        %v1140 = vpop.f32.mrf.mxu0
        %1141 = vmatmul.f32.gmra.mxu0 %v1053
        %v1142 = vpop.f32.mrf.mxu0
        %v1143 = vadd.f32 0.0, %v1142
        %1144 = vmatmul.f32.gmra.mxu0 %v1056
        %v1145 = vpop.f32.mrf.mxu0
        %v1146 = vadd.f32 0.0, %v1145
        %1147 = vmatmul.f32.gmra.mxu0 %v1059
        %v1148 = vpop.f32.mrf.mxu0
        %1149 = vmatmul.f32.gmra.mxu0 %v1062
        %v1150 = vpop.f32.mrf.mxu0
        %v1151 = vadd.f32 0.0, %v1150
        %1152 = vmatmul.f32.gmra.mxu0 %v1065
        %v1153 = vpop.f32.mrf.mxu0
        %v1154 = vadd.f32 0.0, %v1153
        %1155 = vmatmul.f32.gmra.mxu0 %v1068
        %v1156 = vpop.f32.mrf.mxu0
        %1157 = vmatmul.f32.gmra.mxu0 %v1071
        %v1158 = vpop.f32.mrf.mxu0
        %v1159 = vadd.f32 0.0, %v1158
        %1160 = vmatmul.f32.gmra.mxu0 %v1074
        %v1161 = vpop.f32.mrf.mxu0
        %v1162 = vadd.f32 0.0, %v1161
        %1163 = vmatmul.f32.gmra.mxu0 %v1077
        %v1164 = vpop.f32.mrf.mxu0
        %1165 = vmatmul.f32.gmra.mxu0 %v1080
        %v1166 = vpop.f32.mrf.mxu0
        %v1167 = vadd.f32 0.0, %v1166
        %1168 = vmatmul.f32.gmra.mxu0 %v1083
        %v1169 = vpop.f32.mrf.mxu0
        %v1170 = vadd.f32 0.0, %v1169
        %1171 = vmatmul.f32.gmra.mxu0 %v1086
        %v1172 = vpop.f32.mrf.mxu0
        %1173 = vmatmul.f32.gmra.mxu0 %v1089
        %v1174 = vpop.f32.mrf.mxu0
        %v1175 = vadd.f32 0.0, %v1174
        %1176 = vmatmul.f32.gmra.mxu0 %v1092
        %v1177 = vpop.f32.mrf.mxu0
        %v1178 = vadd.f32 0.0, %v1177
        %1179 = vmatmul.f32.gmra.mxu0 %v1095
        %v1180 = vpop.f32.mrf.mxu0
        %1181 = vmatmul.f32.gmra.mxu0 %v1098
        %v1182 = vpop.f32.mrf.mxu0
        %v1183 = vadd.f32 0.0, %v1182
        %1184 = vmatmul.f32.gmra.mxu0 %v1101
        %v1185 = vpop.f32.mrf.mxu0
        %v1186 = vadd.f32 0.0, %v1185
        %1187 = vmatmul.f32.gmra.mxu0 %v1104
        %v1188 = vpop.f32.mrf.mxu0
        %1189 = vdwg.mxu0
        %v1190 = vadd.f32 %v919, %v1127
        %v1191 = vadd.f32 %v922, %v1130
        %v1192 = vadd.f32 %v927, %v1135
        %v1193 = vadd.f32 %v930, %v1138
        %v1194 = vadd.f32 %v935, %v1143
        %v1195 = vadd.f32 %v938, %v1146
        %v1196 = vadd.f32 %v943, %v1151
        %v1197 = vadd.f32 %v946, %v1154
        %v1198 = vadd.f32 %v951, %v1159
        %v1199 = vadd.f32 %v954, %v1162
        %v1200 = vadd.f32 %v959, %v1167
        %v1201 = vadd.f32 %v962, %v1170
        %v1202 = vadd.f32 %v967, %v1175
        %v1203 = vadd.f32 %v970, %v1178
        %v1204 = vadd.f32 %v975, %v1183
        %v1205 = vadd.f32 %v978, %v1186
        %v1206 = vld [vmem:[%s3] sm:$0x1]
        %v1208 = vperm.slane %v1206, 0
        %v1210 = vadd.f32 %v1190, %v1208
        %v1211 = vadd.f32 %v1191, %v1208
        %v1212 = vadd.f32 %v1192, %v1208
        %v1213 = vadd.f32 %v1193, %v1208
        %v1214 = vadd.f32 %v1194, %v1208
        %v1215 = vadd.f32 %v1195, %v1208
        %v1216 = vadd.f32 %v1196, %v1208
        %v1217 = vadd.f32 %v1197, %v1208
        %v1218 = vadd.f32 %v1198, %v1208
        %v1219 = vadd.f32 %v1199, %v1208
        %v1220 = vadd.f32 %v1200, %v1208
        %v1221 = vadd.f32 %v1201, %v1208
        %v1222 = vadd.f32 %v1202, %v1208
        %v1223 = vadd.f32 %v1203, %v1208
        %v1224 = vadd.f32 %v1204, %v1208
        %v1225 = vadd.f32 %v1205, %v1208
        %v1226 = vmax.f32 %v1210, 0.0
        %v1227 = vmax.f32 %v1211, 0.0
        %v1228 = vmax.f32 %v1212, 0.0
        %v1229 = vmax.f32 %v1213, 0.0
        %v1230 = vmax.f32 %v1214, 0.0
        %v1231 = vmax.f32 %v1215, 0.0
        %v1232 = vmax.f32 %v1216, 0.0
        %v1233 = vmax.f32 %v1217, 0.0
        %v1234 = vmax.f32 %v1218, 0.0
        %v1235 = vmax.f32 %v1219, 0.0
        %v1236 = vmax.f32 %v1220, 0.0
        %v1237 = vmax.f32 %v1221, 0.0
        %v1238 = vmax.f32 %v1222, 0.0
        %v1239 = vmax.f32 %v1223, 0.0
        %v1240 = vmax.f32 %v1224, 0.0
        %v1241 = vmax.f32 %v1225, 0.0
        %v1242 = vld [vmem:[%s4] sm:$0x1]
        %v1244 = vperm.slane %v1242, 0
        %v1246 = vmul.f32 %v1226, %v1244
        %v1247 = vmul.f32 %v1227, %v1244
        %v1248 = vmul.f32 %v1228, %v1244
        %v1249 = vmul.f32 %v1229, %v1244
        %v1250 = vmul.f32 %v1230, %v1244
        %v1251 = vmul.f32 %v1231, %v1244
        %v1252 = vmul.f32 %v1232, %v1244
        %v1253 = vmul.f32 %v1233, %v1244
        %v1254 = vmul.f32 %v1234, %v1244
        %v1255 = vmul.f32 %v1235, %v1244
        %v1256 = vmul.f32 %v1236, %v1244
        %v1257 = vmul.f32 %v1237, %v1244
        %v1258 = vmul.f32 %v1238, %v1244
        %v1259 = vmul.f32 %v1239, %v1244
        %v1260 = vmul.f32 %v1240, %v1244
        %v1261 = vmul.f32 %v1241, %v1244
        %v1262 = vld [vmem:[%s5] sm:$0x1]
        %v1264 = vperm.slane %v1262, 0
        %v1266 = vadd.f32 %v1246, %v1264
        %v1267 = vadd.f32 %v1247, %v1264
        %v1268 = vadd.f32 %v1248, %v1264
        %v1269 = vadd.f32 %v1249, %v1264
        %v1270 = vadd.f32 %v1250, %v1264
        %v1271 = vadd.f32 %v1251, %v1264
        %v1272 = vadd.f32 %v1252, %v1264
        %v1273 = vadd.f32 %v1253, %v1264
        %v1274 = vadd.f32 %v1254, %v1264
        %v1275 = vadd.f32 %v1255, %v1264
        %v1276 = vadd.f32 %v1256, %v1264
        %v1277 = vadd.f32 %v1257, %v1264
        %v1278 = vadd.f32 %v1258, %v1264
        %v1279 = vadd.f32 %v1259, %v1264
        %v1280 = vadd.f32 %v1260, %v1264
        %v1281 = vadd.f32 %v1261, %v1264
        %1282 = vxpose.xlu0.b32.start [1/16] %v1266, 128
        %1283 = vxpose.xlu0.b32.cont [2/16] %v1267, 128
        %1284 = vxpose.xlu0.b32.cont [3/16] %v1268, 128
        %1285 = vxpose.xlu0.b32.cont [4/16] %v1269, 128
        %1286 = vxpose.xlu0.b32.cont [5/16] %v1270, 128
        %1287 = vxpose.xlu0.b32.cont [6/16] %v1271, 128
        %1288 = vxpose.xlu0.b32.cont [7/16] %v1272, 128
        %1289 = vxpose.xlu0.b32.cont [8/16] %v1273, 128
        %1290 = vxpose.xlu0.b32.cont [9/16] %v1274, 128
        %1291 = vxpose.xlu0.b32.cont [10/16] %v1275, 128
        %1292 = vxpose.xlu0.b32.cont [11/16] %v1276, 128
        %1293 = vxpose.xlu0.b32.cont [12/16] %v1277, 128
        %1294 = vxpose.xlu0.b32.cont [13/16] %v1278, 128
        %1295 = vxpose.xlu0.b32.cont [14/16] %v1279, 128
        %1296 = vxpose.xlu0.b32.cont [15/16] %v1280, 128
        %1297 = vxpose.xlu0.b32.end [16/16] %v1281, 128
        %v1298 = vpop.trf.xlu0
        %v1299 = vpop.trf.xlu0
        %v1300 = vpop.trf.xlu0
        %v1301 = vpop.trf.xlu0
        %v1302 = vpop.trf.xlu0
        %v1303 = vpop.trf.xlu0
        %v1304 = vpop.trf.xlu0
        %v1305 = vpop.trf.xlu0
        %v1306 = vpop.trf.xlu0
        %v1307 = vpop.trf.xlu0
        %v1308 = vpop.trf.xlu0
        %v1309 = vpop.trf.xlu0
        %v1310 = vpop.trf.xlu0
        %v1311 = vpop.trf.xlu0
        %v1312 = vpop.trf.xlu0
        %v1313 = vpop.trf.xlu0
        %1314 = vst [vmem:[%s324] sm:$0xff] %v1298
        %1315 = vst [vmem:[%s324 + $0x8] sm:$0xff] %v1299
        %1316 = vst [vmem:[%s324 + $0x10] sm:$0xff] %v1300
        %1317 = vst [vmem:[%s324 + $0x18] sm:$0xff] %v1301
        %s1318 = sand.u32 %s186, 1
        %s1319 = scalar_lea.sflag [#allocation3], %s1318
        %s1320 = sand.u32 %s186, 1
        %s1321 = smul.addr %s1320, 32
        %s1322 = scalar_lea.vmem [#allocation2], %s1321
        // Predicated region
        $region45: #{tpu_custom_call.1} parent=43 // pred_check
          %p1323 = pneg %p196
        $region46: #{tpu_custom_call.1} parent=43 // pred_check_branch
          %1325 = sbr.rel (%p1323) target = $region48
        $region47: #{tpu_custom_call.1} parent=43 // pred_region
          %1327 = vsyncadd %s1319, 0
          %s1328 = smul.addr %s24, 8
          %s1329 = sadd.s32 %s25, %s1328
          %s1330 = smul.addr %s1329, 8
          %s1331 = scalar_lea.hbm %s6, %s1330
          %s1332 = sshll.u32 %s1322, 4
          %s1333 = int_to_ptr.vmem [resolvable:$true] %s1332
          %s1334 = sshll.u32 %s1331, 4
          %s1335 = int_to_ptr.hbm [resolvable:$true] %s1334
          %1340 = dma.vmem_to_hbm [thread:$0]  %s1333, 512, %s1335, %s1319, 128, 256, 8
        $region48: #{tpu_custom_call.1} parent=43 // pred_fallthru
          _
      $region44: #{tpu_custom_call.1} parent=5 // pred_fallthru
        _
      %p1341 = scmp.le.s32.totalorder 2, %s15
      // Predicated region
      $region49: #{tpu_custom_call.1} parent=5 // pred_check
        %p1342 = pneg %p1341
      $region50: #{tpu_custom_call.1} parent=5 // pred_check_branch
        %1344 = sbr.rel (%p1342) target = $region52
      $region51: #{tpu_custom_call.1} parent=5 // pred_region
        %s1345 = ssub.s32 %s15, 2
        // Predicated region
        $region53: #{tpu_custom_call.1} parent=51 // pred_check
          %p1346 = pneg %p202
        $region54: #{tpu_custom_call.1} parent=51 // pred_check_branch
          %1348 = sbr.rel (%p1346) target = $region56
        $region55: #{tpu_custom_call.1} parent=51 // pred_region
          %s1349 = sand.u32 %s187, 1
          %s1350 = scalar_lea.sflag [#allocation3], %s1349
          %s1351 = sand.u32 %s187, 1
          %s1352 = smul.addr %s1351, 32
          %s1353 = scalar_lea.vmem [#allocation2], %s1352
          %1355 = dma.done %s1350, 512
        $region56: #{tpu_custom_call.1} parent=51 // pred_fallthru
          _
      $region52: #{tpu_custom_call.1} parent=5 // pred_fallthru
        _
    $region6: #{tpu_custom_call.1} parent=1 // loop_footer
      %s19 = sadd.s32 1, %s15
    $region7: #{tpu_custom_call.1} parent=1 // loop_footer_branch
      %14 = sbr.rel target = $region3
    $region8: #{tpu_custom_call.1} parent=1 // loop_exit
      _
    %1356 = vsyncpa [#allocation3], 1
    %s1357 = scalar_lea.sflag [#allocation3], 1
    %1358 = vsyncpa %s1357, 1

// kernel: tpu_custom_call.1
$region0: #{tpu_custom_call.1}
  #allocation0 [shape = 'u32[]', space=smem, size = 0x4, offset = 0x4, fixed_abs, tag = 'smem constant byte address 0x4 - core index']
  #allocation1 [shape = 'u32[72,128]{1,0:T(1,128)}', space=vmem, size = 0x9000, scoped, tag = 'internal scratch']
  %s0 = inlined_call_operand.vmem [shape: f32[2,18,24,4], index: 0, kind: input, shape index: {}]
  %s1 = inlined_call_operand.vmem [shape: f32[2,18,24,4], index: 1, kind: input, shape index: {}]
  %s2 = inlined_call_operand.vmem [shape: f32[3,12,128], index: 2, kind: input, shape index: {}]
  %s3 = inlined_call_operand.vmem [shape: f32[1,128], index: 3, kind: input, shape index: {}]
  %s4 = inlined_call_operand.vmem [shape: f32[1,128], index: 4, kind: input, shape index: {}]
  %s5 = inlined_call_operand.vmem [shape: f32[1,128], index: 5, kind: input, shape index: {}]
  %s6 = inlined_call_operand.hbm [shape: f32[2,32,256], index: 6, kind: output, shape index: {}]
  %s7 = sld [smem:[#allocation0]]
  $region57: #{tpu_custom_call.1} parent=0
    _
  %s9 = ssub.s32 1, %s7
  %s10 = scalar_select 0, %s9, %s7
  $region1: #{tpu_custom_call.1} parent=0
    #allocation2 [shape = 'u8[32768]{0}', space=vmem, size = 0x8000, scoped, tag = 'output window, operand 0']
    #allocation3 [shape = 's32[2]{0}', space=sflag, size = 0x8, scoped, tag = 'scoped memory for tpu_custom_call.1']
    %11 = vsyncpa [#allocation3], 0
    %s12 = scalar_lea.sflag [#allocation3], 1
    %13 = vsyncpa %s12, 0
    loop: start=0, step=1, limit=6
    $region2: #{tpu_custom_call.1} parent=1 // loop_pre_header
      _
    $region3: #{tpu_custom_call.1} parent=1 // loop_header
      %s15 = sphi 0, %s19
      %p16 = scmp.ge.s32.totalorder %s15, 6
      %s22 = sphi 0, %s34
      %s23 = sphi 0, %s30
      %s24 = sphi 0, %s22
      %s25 = sphi 0, %s23
      %s26 = sphi 0, %s24
      %s27 = sphi 0, %s25
      %s39 = sphi 0, %s41
      %s42 = sphi 0, %s39
      %s43 = sphi 0, %s42
      %s59 = sphi 0, %s43
      %s71 = sphi 0, %s73
      %s74 = sphi 0, %s71
      %s75 = sphi 0, %s74
      %s91 = sphi 0, %s75
      %s95 = sphi 0, %s95
      %s97 = sphi 0, %s95
      %s98 = sphi 0, %s97
      %s112 = sphi 0, %s98
      %s116 = sphi 0, %s116
      %s118 = sphi 0, %s116
      %s119 = sphi 0, %s118
      %s133 = sphi 0, %s119
      %s137 = sphi 0, %s137
      %s139 = sphi 0, %s137
      %s140 = sphi 0, %s139
      %s154 = sphi 0, %s140
      %s158 = sphi 0, %s158
      %s160 = sphi 0, %s158
      %s161 = sphi 0, %s160
      %s175 = sphi 0, %s161
      %s183 = sphi 0, %s185
      %s186 = sphi 0, %s183
      %s187 = sphi 0, %s186
      %s203 = sphi 0, %s187
    $region4: #{tpu_custom_call.1} parent=1 // loop_header_branch
      %18 = sbr.rel (%p16) target = $region8
    $region5: #{tpu_custom_call.1} parent=1 // loop_body
      %s20 = ssub.s32 %s15, 1
      %s21 = ssub.s32 %s15, 2
      %s28 = sadd.s32 1, %s23
      %p29 = scmp.ge.s32.totalorder %s28, 2
      %s30 = scalar_select %p29, 0, %s28
      %s31 = sadd.s32 1, %s22
      %s32 = scalar_select %p29, %s31, %s22
      %p33 = scmp.ge.s32.totalorder %s32, 2
      %s34 = scalar_select %p33, 0, %s32
      %s35 = ssub.s32 %s22, %s34
      %s36 = ssub.s32 %s23, %s30
      %s37 = sor.u32 %s35, %s36
      %p38 = scmp.eq.s32.totalorder %s37, 0
      %s40 = sadd.s32 %s39, 1
      %s41 = scalar_select %p38, %s39, %s40
      %p44 = pneg %p38
      %p45 = scmp.eq.s32.totalorder %s15, 3
      %p46 = por %p44, %p45
      %p47 = scmp.ne.s32.totalorder %s39, %s42
      %p48 = scmp.eq.s32.totalorder %s15, 0
      %p49 = por %p47, %p48
      %p50 = scmp.ne.s32.totalorder %s39, %s42
      %p51 = scmp.eq.s32.totalorder %s20, 3
      %p52 = por %p50, %p51
      %p53 = scmp.ne.s32.totalorder %s42, %s43
      %p54 = scmp.eq.s32.totalorder %s20, 0
      %p55 = por %p53, %p54
      %p56 = scmp.ne.s32.totalorder %s42, %s43
      %p57 = scmp.eq.s32.totalorder %s21, 3
      %p58 = por %p56, %p57
      %p60 = scmp.ne.s32.totalorder %s43, %s59
      %p61 = scmp.eq.s32.totalorder %s21, 0
      %p62 = por %p60, %p61
      %s63 = sadd.s32 %s23, 1
      %s64 = smul.u32 %s63, 4
      %s65 = sadd.s32 %s30, 1
      %s66 = smul.u32 %s65, 4
      %s67 = ssub.s32 %s22, %s34
      %s68 = ssub.s32 %s64, %s66
      %s69 = sor.u32 %s67, %s68
      %p70 = scmp.eq.s32.totalorder %s69, 0
      %s72 = sadd.s32 %s71, 1
      %s73 = scalar_select %p70, %s71, %s72
      %p76 = pneg %p70
      %p77 = scmp.eq.s32.totalorder %s15, 3
      %p78 = por %p76, %p77
      %p79 = scmp.ne.s32.totalorder %s71, %s74
      %p80 = scmp.eq.s32.totalorder %s15, 0
      %p81 = por %p79, %p80
      %p82 = scmp.ne.s32.totalorder %s71, %s74
      %p83 = scmp.eq.s32.totalorder %s20, 3
      %p84 = por %p82, %p83
      %p85 = scmp.ne.s32.totalorder %s74, %s75
      %p86 = scmp.eq.s32.totalorder %s20, 0
      %p87 = por %p85, %p86
      %p88 = scmp.ne.s32.totalorder %s74, %s75
      %p89 = scmp.eq.s32.totalorder %s21, 3
      %p90 = por %p88, %p89
      %p92 = scmp.ne.s32.totalorder %s75, %s91
      %p93 = scmp.eq.s32.totalorder %s21, 0
      %p94 = por %p92, %p93
      %s96 = sadd.s32 %s95, 1
      %p99 = scmp.eq.s32.totalorder %s15, 3
      %p100 = scmp.ne.s32.totalorder %s95, %s97
      %p101 = scmp.eq.s32.totalorder %s15, 0
      %p102 = por %p100, %p101
      %p103 = scmp.ne.s32.totalorder %s95, %s97
      %p104 = scmp.eq.s32.totalorder %s20, 3
      %p105 = por %p103, %p104
      %p106 = scmp.ne.s32.totalorder %s97, %s98
      %p107 = scmp.eq.s32.totalorder %s20, 0
      %p108 = por %p106, %p107
      %p109 = scmp.ne.s32.totalorder %s97, %s98
      %p110 = scmp.eq.s32.totalorder %s21, 3
      %p111 = por %p109, %p110
      %p113 = scmp.ne.s32.totalorder %s98, %s112
      %p114 = scmp.eq.s32.totalorder %s21, 0
      %p115 = por %p113, %p114
      %s117 = sadd.s32 %s116, 1
      %p120 = scmp.eq.s32.totalorder %s15, 3
      %p121 = scmp.ne.s32.totalorder %s116, %s118
      %p122 = scmp.eq.s32.totalorder %s15, 0
      %p123 = por %p121, %p122
      %p124 = scmp.ne.s32.totalorder %s116, %s118
      %p125 = scmp.eq.s32.totalorder %s20, 3
      %p126 = por %p124, %p125
      %p127 = scmp.ne.s32.totalorder %s118, %s119
      %p128 = scmp.eq.s32.totalorder %s20, 0
      %p129 = por %p127, %p128
      %p130 = scmp.ne.s32.totalorder %s118, %s119
      %p131 = scmp.eq.s32.totalorder %s21, 3
      %p132 = por %p130, %p131
      %p134 = scmp.ne.s32.totalorder %s119, %s133
      %p135 = scmp.eq.s32.totalorder %s21, 0
      %p136 = por %p134, %p135
      %s138 = sadd.s32 %s137, 1
      %p141 = scmp.eq.s32.totalorder %s15, 3
      %p142 = scmp.ne.s32.totalorder %s137, %s139
      %p143 = scmp.eq.s32.totalorder %s15, 0
      %p144 = por %p142, %p143
      %p145 = scmp.ne.s32.totalorder %s137, %s139
      %p146 = scmp.eq.s32.totalorder %s20, 3
      %p147 = por %p145, %p146
      %p148 = scmp.ne.s32.totalorder %s139, %s140
      %p149 = scmp.eq.s32.totalorder %s20, 0
      %p150 = por %p148, %p149
      %p151 = scmp.ne.s32.totalorder %s139, %s140
      %p152 = scmp.eq.s32.totalorder %s21, 3
      %p153 = por %p151, %p152
      %p155 = scmp.ne.s32.totalorder %s140, %s154
      %p156 = scmp.eq.s32.totalorder %s21, 0
      %p157 = por %p155, %p156
      %s159 = sadd.s32 %s158, 1
      %p162 = scmp.eq.s32.totalorder %s15, 3
      %p163 = scmp.ne.s32.totalorder %s158, %s160
      %p164 = scmp.eq.s32.totalorder %s15, 0
      %p165 = por %p163, %p164
      %p166 = scmp.ne.s32.totalorder %s158, %s160
      %p167 = scmp.eq.s32.totalorder %s20, 3
      %p168 = por %p166, %p167
      %p169 = scmp.ne.s32.totalorder %s160, %s161
      %p170 = scmp.eq.s32.totalorder %s20, 0
      %p171 = por %p169, %p170
      %p172 = scmp.ne.s32.totalorder %s160, %s161
      %p173 = scmp.eq.s32.totalorder %s21, 3
      %p174 = por %p172, %p173
      %p176 = scmp.ne.s32.totalorder %s161, %s175
      %p177 = scmp.eq.s32.totalorder %s21, 0
      %p178 = por %p176, %p177
      %s179 = ssub.s32 %s22, %s34
      %s180 = ssub.s32 %s23, %s30
      %s181 = sor.u32 %s179, %s180
      %p182 = scmp.eq.s32.totalorder %s181, 0
      %s184 = sadd.s32 %s183, 1
      %s185 = scalar_select %p182, %s183, %s184
      %p188 = pneg %p182
      %p189 = scmp.eq.s32.totalorder %s15, 3
      %p190 = por %p188, %p189
      %p191 = scmp.ne.s32.totalorder %s183, %s186
      %p192 = scmp.eq.s32.totalorder %s15, 0
      %p193 = por %p191, %p192
      %p194 = scmp.ne.s32.totalorder %s183, %s186
      %p195 = scmp.eq.s32.totalorder %s20, 3
      %p196 = por %p194, %p195
      %p197 = scmp.ne.s32.totalorder %s186, %s187
      %p198 = scmp.eq.s32.totalorder %s20, 0
      %p199 = por %p197, %p198
      %p200 = scmp.ne.s32.totalorder %s186, %s187
      %p201 = scmp.eq.s32.totalorder %s21, 3
      %p202 = por %p200, %p201
      %p204 = scmp.ne.s32.totalorder %s187, %s203
      %p205 = scmp.eq.s32.totalorder %s21, 0
      %p206 = por %p204, %p205
      %p207 = scmp.le.s32.totalorder 1, %s15
      %p208 = scmp.lt.s32.totalorder %s15, 5
      %p209 = pnand %p207, %p208
      %p210 = pneg %p209
      // Predicated region
      $region9: #{tpu_custom_call.1} parent=5 // pred_check
        _
      $region10: #{tpu_custom_call.1} parent=5 // pred_check_branch
        %212 = sbr.rel (%p209) target = $region12
      $region11: #{tpu_custom_call.1} parent=5 // pred_region
        %s213 = ssub.s32 %s15, 1
        // Predicated region
        $region13: #{tpu_custom_call.1} parent=11 // pred_check
          %p214 = pneg %p108
        $region14: #{tpu_custom_call.1} parent=11 // pred_check_branch
          %216 = sbr.rel (%p214) target = $region16
        $region15: #{tpu_custom_call.1} parent=11 // pred_region
          _
        $region16: #{tpu_custom_call.1} parent=11 // pred_fallthru
          _
        // Predicated region
        $region17: #{tpu_custom_call.1} parent=11 // pred_check
          %p217 = pneg %p129
        $region18: #{tpu_custom_call.1} parent=11 // pred_check_branch
          %219 = sbr.rel (%p217) target = $region20
        $region19: #{tpu_custom_call.1} parent=11 // pred_region
          _
        $region20: #{tpu_custom_call.1} parent=11 // pred_fallthru
          _
        // Predicated region
        $region21: #{tpu_custom_call.1} parent=11 // pred_check
          %p220 = pneg %p150
        $region22: #{tpu_custom_call.1} parent=11 // pred_check_branch
          %222 = sbr.rel (%p220) target = $region24
        $region23: #{tpu_custom_call.1} parent=11 // pred_region
          _
        $region24: #{tpu_custom_call.1} parent=11 // pred_fallthru
          _
        // Predicated region
        $region25: #{tpu_custom_call.1} parent=11 // pred_check
          %p223 = pneg %p171
        $region26: #{tpu_custom_call.1} parent=11 // pred_check_branch
          %225 = sbr.rel (%p223) target = $region28
        $region27: #{tpu_custom_call.1} parent=11 // pred_region
          _
        $region28: #{tpu_custom_call.1} parent=11 // pred_fallthru
          _
      $region12: #{tpu_custom_call.1} parent=5 // pred_fallthru
        _
      %p226 = scmp.lt.s32.totalorder %s15, 4
      // Predicated region
      $region29: #{tpu_custom_call.1} parent=5 // pred_check
        %p227 = pneg %p226
      $region30: #{tpu_custom_call.1} parent=5 // pred_check_branch
        %229 = sbr.rel (%p227) target = $region32
      $region31: #{tpu_custom_call.1} parent=5 // pred_region
        // Predicated region
        $region33: #{tpu_custom_call.1} parent=31 // pred_check
          %p230 = pneg %p49
        $region34: #{tpu_custom_call.1} parent=31 // pred_check_branch
          %232 = sbr.rel (%p230) target = $region36
        $region35: #{tpu_custom_call.1} parent=31 // pred_region
          %s233 = smul.u32 8, %s23
          %s234 = ssub.s32 18, %s233
          %p235 = scmp.lt.s32.totalorder %s234, 8
          %s236 = scalar_select %p235, %s234, 8
          %s237 = smul.u32 8, %s236
          %s238 = smul.u32 %s237, 3
          %p239 = scmp.lt.s32.totalorder %s22, 1
          %s240 = scalar_select %p239, %s22, 1
          %p241 = scmp.lt.s32.totalorder %s233, 17
          %s242 = scalar_select %p241, %s233, 17
          %s243 = smul.addr %s242, 3
          %s244 = smul.addr %s240, 54
          %s245 = sadd.s32 %s243, %s244
          %s246 = smul.addr %s245, 8
          %s247 = scalar_lea.vmem %s0, %s246
          %s248 = smul.u32 8, %s23
          %s249 = ssub.s32 18, %s248
          %p250 = scmp.lt.s32.totalorder %s249, 8
          %s251 = scalar_select %p250, %s249, 8
          %s252 = smul.u32 8, %s251
          %s253 = smul.u32 %s252, 3
        $region36: #{tpu_custom_call.1} parent=31 // pred_fallthru
          _
        // Predicated region
        $region37: #{tpu_custom_call.1} parent=31 // pred_check
          %p254 = pneg %p81
        $region38: #{tpu_custom_call.1} parent=31 // pred_check_branch
          %256 = sbr.rel (%p254) target = $region40
        $region39: #{tpu_custom_call.1} parent=31 // pred_region
          %s257 = sadd.s32 %s23, 1
          %s258 = smul.u32 %s257, 4
          %s259 = smul.u32 2, %s258
          %p260 = scmp.lt.s32.totalorder %s22, 1
          %s261 = scalar_select %p260, %s22, 1
          %p262 = scmp.lt.s32.totalorder %s259, 17
          %s263 = scalar_select %p262, %s259, 17
          %s264 = smul.addr %s263, 3
          %s265 = smul.addr %s261, 54
          %s266 = sadd.s32 %s264, %s265
          %s267 = smul.addr %s266, 8
          %s268 = scalar_lea.vmem %s1, %s267
          %s269 = sadd.s32 %s23, 1
          %s270 = smul.u32 %s269, 4
          %s271 = smul.u32 2, %s270
        $region40: #{tpu_custom_call.1} parent=31 // pred_fallthru
          _
      $region32: #{tpu_custom_call.1} parent=5 // pred_fallthru
        _
      %p272 = scmp.le.s32.totalorder 1, %s15
      %p273 = scmp.lt.s32.totalorder %s15, 5
      %p274 = pnand %p272, %p273
      %p275 = pneg %p274
      // Predicated region
      $region41: #{tpu_custom_call.1} parent=5 // pred_check
        _
      $region42: #{tpu_custom_call.1} parent=5 // pred_check_branch
        %277 = sbr.rel (%p274) target = $region44
      $region43: #{tpu_custom_call.1} parent=5 // pred_region
        %s278 = ssub.s32 %s15, 1
        %s279 = smul.u32 8, %s25
        %s280 = ssub.s32 18, %s279
        %p281 = scmp.lt.s32.totalorder %s280, 8
        %s282 = scalar_select %p281, %s280, 8
        %s283 = smul.u32 8, %s282
        %s284 = smul.u32 %s283, 3
        %p285 = scmp.lt.s32.totalorder %s24, 1
        %s286 = scalar_select %p285, %s24, 1
        %p287 = scmp.lt.s32.totalorder %s279, 17
        %s288 = scalar_select %p287, %s279, 17
        %s289 = smul.addr %s288, 3
        %s290 = smul.addr %s286, 54
        %s291 = sadd.s32 %s289, %s290
        %s292 = smul.addr %s291, 8
        %s293 = scalar_lea.vmem %s0, %s292
        %p294 = pneg %p55
        %p295 = pneg %p52
        %s296 = sadd.s32 %s25, 1
        %s297 = smul.u32 %s296, 4
        %s298 = smul.u32 2, %s297
        %p299 = scmp.lt.s32.totalorder %s24, 1
        %s300 = scalar_select %p299, %s24, 1
        %p301 = scmp.lt.s32.totalorder %s298, 17
        %s302 = scalar_select %p301, %s298, 17
        %s303 = smul.addr %s302, 3
        %s304 = smul.addr %s300, 54
        %s305 = sadd.s32 %s303, %s304
        %s306 = smul.addr %s305, 8
        %s307 = scalar_lea.vmem %s1, %s306
        %p308 = pneg %p87
        %p309 = pneg %p84
        %p310 = pneg %p108
        %p311 = pneg %p105
        %p312 = pneg %p129
        %p313 = pneg %p126
        %p314 = pneg %p150
        %p315 = pneg %p147
        %p316 = pneg %p171
        %p317 = pneg %p168
        %p318 = pneg %p199
        %p319 = pneg %p196
        %s320 = sand.u32 %s186, 1
        %s321 = scalar_lea.sflag [#allocation3], %s320
        %s322 = sand.u32 %s186, 1
        %s323 = smul.addr %s322, 32
        %s324 = scalar_lea.vmem [#allocation2], %s323
        %s325 = smul.u32 8, %s25
        %s326 = ssub.s32 18, %s325
        %p327 = scmp.lt.s32.totalorder %s326, 8
        %s328 = scalar_select %p327, %s326, 8
        %s329 = smul.u32 8, %s328
        %s330 = smul.u32 %s329, 3
        %p331 = scmp.lt.s32.totalorder %s24, 1
        %s332 = scalar_select %p331, %s24, 1
        %p333 = scmp.lt.s32.totalorder %s325, 17
        %s334 = scalar_select %p333, %s325, 17
        %s335 = smul.addr %s334, 3
        %s336 = smul.addr %s332, 54
        %s337 = sadd.s32 %s335, %s336
        %s338 = smul.addr %s337, 8
        %s339 = scalar_lea.vmem %s0, %s338
        %s340 = smul.u32 8, %s25
        %s341 = ssub.s32 18, %s340
        %p342 = scmp.lt.s32.totalorder %s341, 8
        %s343 = scalar_select %p342, %s341, 8
        %s344 = smul.u32 8, %s343
        %s345 = smul.u32 %s344, 3
        %s346 = sadd.s32 %s25, 1
        %s347 = smul.u32 %s346, 4
        %s348 = smul.u32 2, %s347
        %p349 = scmp.lt.s32.totalorder %s24, 1
        %s350 = scalar_select %p349, %s24, 1
        %p351 = scmp.lt.s32.totalorder %s348, 17
        %s352 = scalar_select %p351, %s348, 17
        %s353 = smul.addr %s352, 3
        %s354 = smul.addr %s350, 54
        %s355 = sadd.s32 %s353, %s354
        %s356 = smul.addr %s355, 8
        %s357 = scalar_lea.vmem %s1, %s356
        %s358 = sadd.s32 %s25, 1
        %s359 = smul.u32 %s358, 4
        %s360 = smul.u32 2, %s359
        %v361 = vld [vmem:[%s339] sm:$0xff]
        %v362 = vld [vmem:[%s339 + $0x8] sm:$0xff]
        %v363 = vld [vmem:[%s339 + $0x10] sm:$0xff]
        %v364 = vld [vmem:[%s339 + $0x18] sm:$0xff]
        %v365 = vld [vmem:[%s339 + $0x20] sm:$0xff]
        %v366 = vld [vmem:[%s339 + $0x28] sm:$0xff]
        %v367 = vld [vmem:[%s339 + $0x30] sm:$0xff]
        %v368 = vld [vmem:[%s339 + $0x38] sm:$0xff]
        %v369 = vld [vmem:[%s339 + $0x40] sm:$0xff]
        %v370 = vld [vmem:[%s339 + $0x48] sm:$0xff]
        %v371 = vld [vmem:[%s339 + $0x50] sm:$0xff]
        %v372 = vld [vmem:[%s339 + $0x58] sm:$0xff]
        %v373 = vld [vmem:[%s339 + $0x60] sm:$0xff]
        %v374 = vld [vmem:[%s339 + $0x68] sm:$0xff]
        %v375 = vld [vmem:[%s339 + $0x70] sm:$0xff]
        %v376 = vld [vmem:[%s339 + $0x78] sm:$0xff]
        %v377 = vld [vmem:[%s339 + $0x80] sm:$0xff]
        %v378 = vld [vmem:[%s339 + $0x88] sm:$0xff]
        %v379 = vld [vmem:[%s339 + $0x90] sm:$0xff]
        %v380 = vld [vmem:[%s339 + $0x98] sm:$0xff]
        %v381 = vld [vmem:[%s339 + $0xa0] sm:$0xff]
        %v382 = vld [vmem:[%s339 + $0xa8] sm:$0xff]
        %v383 = vld [vmem:[%s339 + $0xb0] sm:$0xff]
        %v384 = vld [vmem:[%s339 + $0xb8] sm:$0xff]
        %v385 = vld [vmem:[%s357] sm:$0xff]
        %v386 = vld [vmem:[%s357 + $0x8] sm:$0xff]
        %v387 = vld [vmem:[%s357 + $0x10] sm:$0xff]
        %v388 = vld [vmem:[%s357 + $0x18] sm:$0xff]
        %v389 = vld [vmem:[%s357 + $0x20] sm:$0xff]
        %v390 = vld [vmem:[%s357 + $0x28] sm:$0xff]
        %v391 = vrot.slane %v361, 7
        %v392 = vrot.slane %v362, 7
        %v393 = vrot.slane %v363, 7
        %v394 = vrot.slane %v364, 7
        %v395 = vrot.slane %v365, 7
        %v396 = vrot.slane %v366, 7
        %v397 = vrot.slane %v367, 7
        %v398 = vrot.slane %v368, 7
        %v399 = vrot.slane %v369, 7
        %v400 = vrot.slane %v370, 7
        %v401 = vrot.slane %v371, 7
        %v402 = vrot.slane %v372, 7
        %v403 = vrot.slane %v373, 7
        %v404 = vrot.slane %v374, 7
        %v405 = vrot.slane %v375, 7
        %v406 = vrot.slane %v376, 7
        %v407 = vrot.slane %v377, 7
        %v408 = vrot.slane %v378, 7
        %v409 = vrot.slane %v379, 7
        %v410 = vrot.slane %v380, 7
        %v411 = vrot.slane %v381, 7
        %v412 = vrot.slane %v382, 7
        %v413 = vrot.slane %v383, 7
        %v414 = vrot.slane %v384, 7
        %v415 = vrot.slane %v385, 7
        %v416 = vrot.slane %v386, 7
        %v417 = vrot.slane %v387, 7
        %v418 = vrot.slane %v388, 7
        %v419 = vrot.slane %v389, 7
        %v420 = vrot.slane %v390, 7
        %v421 = vlaneseq
        %v422 = vshrl.u32 %v421, 7
        %vm423 = vcmp.lt.s32.totalorder %v422, 1
        %v424 = vsel %vm423, %v419, %v420
        %v425 = vsel %vm423, %v418, %v419
        %v426 = vsel %vm423, %v417, %v418
        %v427 = vsel %vm423, %v416, %v417
        %v428 = vsel %vm423, %v415, %v416
        %v429 = vsel %vm423, %v414, %v415
        %v430 = vsel %vm423, %v413, %v414
        %v431 = vsel %vm423, %v412, %v413
        %v432 = vsel %vm423, %v411, %v412
        %v433 = vsel %vm423, %v410, %v411
        %v434 = vsel %vm423, %v409, %v410
        %v435 = vsel %vm423, %v408, %v409
        %v436 = vsel %vm423, %v407, %v408
        %v437 = vsel %vm423, %v406, %v407
        %v438 = vsel %vm423, %v405, %v406
        %v439 = vsel %vm423, %v404, %v405
        %v440 = vsel %vm423, %v403, %v404
        %v441 = vsel %vm423, %v402, %v403
        %v442 = vsel %vm423, %v401, %v402
        %v443 = vsel %vm423, %v400, %v401
        %v444 = vsel %vm423, %v399, %v400
        %v445 = vsel %vm423, %v398, %v399
        %v446 = vsel %vm423, %v397, %v398
        %v447 = vsel %vm423, %v396, %v397
        %v448 = vsel %vm423, %v395, %v396
        %v449 = vsel %vm423, %v394, %v395
        %v450 = vsel %vm423, %v393, %v394
        %v451 = vsel %vm423, %v392, %v393
        %v452 = vsel %vm423, %v391, %v392
        %v453 = vsel %vm423, %v420, %v391
        %v454 = vrot.slane %v361, 1
        %v455 = vrot.slane %v362, 1
        %v456 = vrot.slane %v363, 1
        %v457 = vrot.slane %v364, 1
        %v458 = vrot.slane %v365, 1
        %v459 = vrot.slane %v366, 1
        %v460 = vrot.slane %v367, 1
        %v461 = vrot.slane %v368, 1
        %v462 = vrot.slane %v369, 1
        %v463 = vrot.slane %v370, 1
        %v464 = vrot.slane %v371, 1
        %v465 = vrot.slane %v372, 1
        %v466 = vrot.slane %v373, 1
        %v467 = vrot.slane %v374, 1
        %v468 = vrot.slane %v375, 1
        %v469 = vrot.slane %v376, 1
        %v470 = vrot.slane %v377, 1
        %v471 = vrot.slane %v378, 1
        %v472 = vrot.slane %v379, 1
        %v473 = vrot.slane %v380, 1
        %v474 = vrot.slane %v381, 1
        %v475 = vrot.slane %v382, 1
        %v476 = vrot.slane %v383, 1
        %v477 = vrot.slane %v384, 1
        %v478 = vrot.slane %v385, 1
        %v479 = vrot.slane %v386, 1
        %v480 = vrot.slane %v387, 1
        %v481 = vrot.slane %v388, 1
        %v482 = vrot.slane %v389, 1
        %v483 = vrot.slane %v390, 1
        %vm484 = vcmp.lt.s32.totalorder %v422, 7
        %v485 = vsel %vm484, %v482, %v483
        %v486 = vsel %vm484, %v481, %v482
        %v487 = vsel %vm484, %v480, %v481
        %v488 = vsel %vm484, %v479, %v480
        %v489 = vsel %vm484, %v478, %v479
        %v490 = vsel %vm484, %v477, %v478
        %v491 = vsel %vm484, %v476, %v477
        %v492 = vsel %vm484, %v475, %v476
        %v493 = vsel %vm484, %v474, %v475
        %v494 = vsel %vm484, %v473, %v474
        %v495 = vsel %vm484, %v472, %v473
        %v496 = vsel %vm484, %v471, %v472
        %v497 = vsel %vm484, %v470, %v471
        %v498 = vsel %vm484, %v469, %v470
        %v499 = vsel %vm484, %v468, %v469
        %v500 = vsel %vm484, %v467, %v468
        %v501 = vsel %vm484, %v466, %v467
        %v502 = vsel %vm484, %v465, %v466
        %v503 = vsel %vm484, %v464, %v465
        %v504 = vsel %vm484, %v463, %v464
        %v505 = vsel %vm484, %v462, %v463
        %v506 = vsel %vm484, %v461, %v462
        %v507 = vsel %vm484, %v460, %v461
        %v508 = vsel %vm484, %v459, %v460
        %v509 = vsel %vm484, %v458, %v459
        %v510 = vsel %vm484, %v457, %v458
        %v511 = vsel %vm484, %v456, %v457
        %v512 = vsel %vm484, %v455, %v456
        %v513 = vsel %vm484, %v454, %v455
        %v514 = vsel %vm484, %v483, %v454
        %v515 = vld [vmem:[%s2] sm:$0xff]
        %v516 = vld [vmem:[%s2 + $0x8] sm:$0xf]
        %s517 = scalar_lea.vmem %s2, 16
        %v518 = vld [vmem:[%s517] sm:$0xff]
        %v519 = vld [vmem:[%s517 + $0x8] sm:$0xf]
        %vm520 = vcmask 31744
        %v522 = vsel %vm520, %v361, 0
        %v525 = vsel %vm520, %v362, 0
        %v528 = vsel %vm520, %v363, 0
        %v531 = vsel %vm520, %v364, 0
        %v534 = vsel %vm520, %v365, 0
        %v537 = vsel %vm520, %v366, 0
        %v540 = vsel %vm520, %v367, 0
        %v543 = vsel %vm520, %v368, 0
        %v546 = vsel %vm520, %v369, 0
        %v549 = vsel %vm520, %v370, 0
        %v552 = vsel %vm520, %v371, 0
        %v555 = vsel %vm520, %v372, 0
        %v558 = vsel %vm520, %v373, 0
        %v561 = vsel %vm520, %v374, 0
        %v564 = vsel %vm520, %v375, 0
        %v567 = vsel %vm520, %v376, 0
        %v570 = vsel %vm520, %v377, 0
        %v573 = vsel %vm520, %v378, 0
        %v576 = vsel %vm520, %v379, 0
        %v579 = vsel %vm520, %v380, 0
        %v582 = vsel %vm520, %v381, 0
        %v585 = vsel %vm520, %v382, 0
        %v588 = vsel %vm520, %v383, 0
        %v591 = vsel %vm520, %v384, 0
        %vm593 = vcmask 1043456
        %v595 = vsel %vm593, %v518, 0
        %597 = vmatpush.msra.mxu0 0.0
        %598 = vmatpush.msra.mxu0 0.0
        %599 = vmatpush.msra.mxu0 0.0
        %600 = vmatpush.msra.mxu0 0.0
        %601 = vmatpush.msra.mxu0 0.0
        %602 = vmatpush.msra.mxu0 0.0
        %603 = vmatpush.msra.mxu0 0.0
        %604 = vmatpush.msra.mxu0 0.0
        %605 = vmatpush.msra.mxu0 0.0
        %606 = vmatpush.msra.mxu0 0.0
        %607 = vmatpush.msra.mxu0 0.0
        %608 = vmatpush.msra.mxu0 0.0
        %609 = vmatpush.msra.mxu0 0.0
        %610 = vmatpush.msra.mxu0 0.0
        %611 = vmatpush.msra.mxu0 0.0
        %612 = vmatpush.msra.mxu0 %v595
        %613 = vmatmul.f32.gmra.mxu0 %v522
        %v614 = vpop.f32.mrf.mxu0
        %v615 = vadd.f32 0.0, %v614
        %616 = vmatmul.f32.gmra.mxu0 %v525
        %v617 = vpop.f32.mrf.mxu0
        %v618 = vadd.f32 0.0, %v617
        %619 = vmatmul.f32.gmra.mxu0 %v528
        %v620 = vpop.f32.mrf.mxu0
        %621 = vmatmul.f32.gmra.mxu0 %v531
        %v622 = vpop.f32.mrf.mxu0
        %v623 = vadd.f32 0.0, %v622
        %624 = vmatmul.f32.gmra.mxu0 %v534
        %v625 = vpop.f32.mrf.mxu0
        %v626 = vadd.f32 0.0, %v625
        %627 = vmatmul.f32.gmra.mxu0 %v537
        %v628 = vpop.f32.mrf.mxu0
        %629 = vmatmul.f32.gmra.mxu0 %v540
        %v630 = vpop.f32.mrf.mxu0
        %v631 = vadd.f32 0.0, %v630
        %632 = vmatmul.f32.gmra.mxu0 %v543
        %v633 = vpop.f32.mrf.mxu0
        %v634 = vadd.f32 0.0, %v633
        %635 = vmatmul.f32.gmra.mxu0 %v546
        %v636 = vpop.f32.mrf.mxu0
        %637 = vmatmul.f32.gmra.mxu0 %v549
        %v638 = vpop.f32.mrf.mxu0
        %v639 = vadd.f32 0.0, %v638
        %640 = vmatmul.f32.gmra.mxu0 %v552
        %v641 = vpop.f32.mrf.mxu0
        %v642 = vadd.f32 0.0, %v641
        %643 = vmatmul.f32.gmra.mxu0 %v555
        %v644 = vpop.f32.mrf.mxu0
        %645 = vmatmul.f32.gmra.mxu0 %v558
        %v646 = vpop.f32.mrf.mxu0
        %v647 = vadd.f32 0.0, %v646
        %648 = vmatmul.f32.gmra.mxu0 %v561
        %v649 = vpop.f32.mrf.mxu0
        %v650 = vadd.f32 0.0, %v649
        %651 = vmatmul.f32.gmra.mxu0 %v564
        %v652 = vpop.f32.mrf.mxu0
        %653 = vmatmul.f32.gmra.mxu0 %v567
        %v654 = vpop.f32.mrf.mxu0
        %v655 = vadd.f32 0.0, %v654
        %656 = vmatmul.f32.gmra.mxu0 %v570
        %v657 = vpop.f32.mrf.mxu0
        %v658 = vadd.f32 0.0, %v657
        %659 = vmatmul.f32.gmra.mxu0 %v573
        %v660 = vpop.f32.mrf.mxu0
        %661 = vmatmul.f32.gmra.mxu0 %v576
        %v662 = vpop.f32.mrf.mxu0
        %v663 = vadd.f32 0.0, %v662
        %664 = vmatmul.f32.gmra.mxu0 %v579
        %v665 = vpop.f32.mrf.mxu0
        %v666 = vadd.f32 0.0, %v665
        %667 = vmatmul.f32.gmra.mxu0 %v582
        %v668 = vpop.f32.mrf.mxu0
        %669 = vmatmul.f32.gmra.mxu0 %v585
        %v670 = vpop.f32.mrf.mxu0
        %v671 = vadd.f32 0.0, %v670
        %672 = vmatmul.f32.gmra.mxu0 %v588
        %v673 = vpop.f32.mrf.mxu0
        %v674 = vadd.f32 0.0, %v673
        %675 = vmatmul.f32.gmra.mxu0 %v591
        %v676 = vpop.f32.mrf.mxu0
        %677 = vdwg.mxu0
        %v679 = vsel %vm520, %v453, 0
        %v682 = vsel %vm520, %v452, 0
        %v685 = vsel %vm520, %v451, 0
        %v688 = vsel %vm520, %v450, 0
        %v691 = vsel %vm520, %v449, 0
        %v694 = vsel %vm520, %v448, 0
        %v697 = vsel %vm520, %v447, 0
        %v700 = vsel %vm520, %v446, 0
        %v703 = vsel %vm520, %v445, 0
        %v706 = vsel %vm520, %v444, 0
        %v709 = vsel %vm520, %v443, 0
        %v712 = vsel %vm520, %v442, 0
        %v715 = vsel %vm520, %v441, 0
        %v718 = vsel %vm520, %v440, 0
        %v721 = vsel %vm520, %v439, 0
        %v724 = vsel %vm520, %v438, 0
        %v727 = vsel %vm520, %v437, 0
        %v730 = vsel %vm520, %v436, 0
        %v733 = vsel %vm520, %v435, 0
        %v736 = vsel %vm520, %v434, 0
        %v739 = vsel %vm520, %v433, 0
        %v742 = vsel %vm520, %v432, 0
        %v745 = vsel %vm520, %v431, 0
        %v748 = vsel %vm520, %v430, 0
        %v751 = vsel %vm593, %v515, 0
        %753 = vmatpush.msra.mxu0 0.0
        %754 = vmatpush.msra.mxu0 0.0
        %755 = vmatpush.msra.mxu0 0.0
        %756 = vmatpush.msra.mxu0 0.0
        %757 = vmatpush.msra.mxu0 0.0
        %758 = vmatpush.msra.mxu0 0.0
        %759 = vmatpush.msra.mxu0 0.0
        %760 = vmatpush.msra.mxu0 0.0
        %761 = vmatpush.msra.mxu0 0.0
        %762 = vmatpush.msra.mxu0 0.0
        %763 = vmatpush.msra.mxu0 0.0
        %764 = vmatpush.msra.mxu0 0.0
        %765 = vmatpush.msra.mxu0 0.0
        %766 = vmatpush.msra.mxu0 0.0
        %767 = vmatpush.msra.mxu0 0.0
        %768 = vmatpush.msra.mxu0 %v751
        %769 = vmatmul.f32.gmra.mxu0 %v679
        %v770 = vpop.f32.mrf.mxu0
        %v771 = vadd.f32 %v615, %v770
        %772 = vmatmul.f32.gmra.mxu0 %v682
        %v773 = vpop.f32.mrf.mxu0
        %v774 = vadd.f32 %v618, %v773
        %775 = vmatmul.f32.gmra.mxu0 %v685
        %v776 = vpop.f32.mrf.mxu0
        %777 = vmatmul.f32.gmra.mxu0 %v688
        %v778 = vpop.f32.mrf.mxu0
        %v779 = vadd.f32 %v623, %v778
        %780 = vmatmul.f32.gmra.mxu0 %v691
        %v781 = vpop.f32.mrf.mxu0
        %v782 = vadd.f32 %v626, %v781
        %783 = vmatmul.f32.gmra.mxu0 %v694
        %v784 = vpop.f32.mrf.mxu0
        %785 = vmatmul.f32.gmra.mxu0 %v697
        %v786 = vpop.f32.mrf.mxu0
        %v787 = vadd.f32 %v631, %v786
        %788 = vmatmul.f32.gmra.mxu0 %v700
        %v789 = vpop.f32.mrf.mxu0
        %v790 = vadd.f32 %v634, %v789
        %791 = vmatmul.f32.gmra.mxu0 %v703
        %v792 = vpop.f32.mrf.mxu0
        %793 = vmatmul.f32.gmra.mxu0 %v706
        %v794 = vpop.f32.mrf.mxu0
        %v795 = vadd.f32 %v639, %v794
        %796 = vmatmul.f32.gmra.mxu0 %v709
        %v797 = vpop.f32.mrf.mxu0
        %v798 = vadd.f32 %v642, %v797
        %799 = vmatmul.f32.gmra.mxu0 %v712
        %v800 = vpop.f32.mrf.mxu0
        %801 = vmatmul.f32.gmra.mxu0 %v715
        %v802 = vpop.f32.mrf.mxu0
        %v803 = vadd.f32 %v647, %v802
        %804 = vmatmul.f32.gmra.mxu0 %v718
        %v805 = vpop.f32.mrf.mxu0
        %v806 = vadd.f32 %v650, %v805
        %807 = vmatmul.f32.gmra.mxu0 %v721
        %v808 = vpop.f32.mrf.mxu0
        %809 = vmatmul.f32.gmra.mxu0 %v724
        %v810 = vpop.f32.mrf.mxu0
        %v811 = vadd.f32 %v655, %v810
        %812 = vmatmul.f32.gmra.mxu0 %v727
        %v813 = vpop.f32.mrf.mxu0
        %v814 = vadd.f32 %v658, %v813
        %815 = vmatmul.f32.gmra.mxu0 %v730
        %v816 = vpop.f32.mrf.mxu0
        %817 = vmatmul.f32.gmra.mxu0 %v733
        %v818 = vpop.f32.mrf.mxu0
        %v819 = vadd.f32 %v663, %v818
        %820 = vmatmul.f32.gmra.mxu0 %v736
        %v821 = vpop.f32.mrf.mxu0
        %v822 = vadd.f32 %v666, %v821
        %823 = vmatmul.f32.gmra.mxu0 %v739
        %v824 = vpop.f32.mrf.mxu0
        %825 = vmatmul.f32.gmra.mxu0 %v742
        %v826 = vpop.f32.mrf.mxu0
        %v827 = vadd.f32 %v671, %v826
        %828 = vmatmul.f32.gmra.mxu0 %v745
        %v829 = vpop.f32.mrf.mxu0
        %v830 = vadd.f32 %v674, %v829
        %831 = vmatmul.f32.gmra.mxu0 %v748
        %v832 = vpop.f32.mrf.mxu0
        %833 = vdwg.mxu0
        %s834 = scalar_lea.vmem %s2, 32
        %v835 = vld [vmem:[%s834] sm:$0xff]
        %v836 = vld [vmem:[%s834 + $0x8] sm:$0xf]
        %v838 = vsel %vm520, %v513, 0
        %v841 = vsel %vm520, %v512, 0
        %v844 = vsel %vm520, %v511, 0
        %v847 = vsel %vm520, %v510, 0
        %v850 = vsel %vm520, %v509, 0
        %v853 = vsel %vm520, %v508, 0
        %v856 = vsel %vm520, %v507, 0
        %v859 = vsel %vm520, %v506, 0
        %v862 = vsel %vm520, %v505, 0
        %v865 = vsel %vm520, %v504, 0
        %v868 = vsel %vm520, %v503, 0
        %v871 = vsel %vm520, %v502, 0
        %v874 = vsel %vm520, %v501, 0
        %v877 = vsel %vm520, %v500, 0
        %v880 = vsel %vm520, %v499, 0
        %v883 = vsel %vm520, %v498, 0
        %v886 = vsel %vm520, %v497, 0
        %v889 = vsel %vm520, %v496, 0
        %v892 = vsel %vm520, %v495, 0
        %v895 = vsel %vm520, %v494, 0
        %v898 = vsel %vm520, %v493, 0
        %v901 = vsel %vm520, %v492, 0
        %v904 = vsel %vm520, %v491, 0
        %v907 = vsel %vm520, %v490, 0
        %v910 = vsel %vm593, %v835, 0
        %912 = vmatpush.msra.mxu0 0.0
        %913 = vmatpush.msra.mxu0 0.0
        %914 = vmatpush.msra.mxu0 0.0
        %915 = vmatpush.msra.mxu0 0.0
        %916 = vmatpush.msra.mxu0 0.0
        %917 = vmatpush.msra.mxu0 0.0
        %918 = vmatpush.msra.mxu0 0.0
        %919 = vmatpush.msra.mxu0 0.0
        %920 = vmatpush.msra.mxu0 0.0
        %921 = vmatpush.msra.mxu0 0.0
        %922 = vmatpush.msra.mxu0 0.0
        %923 = vmatpush.msra.mxu0 0.0
        %924 = vmatpush.msra.mxu0 0.0
        %925 = vmatpush.msra.mxu0 0.0
        %926 = vmatpush.msra.mxu0 0.0
        %927 = vmatpush.msra.mxu0 %v910
        %928 = vmatmul.f32.gmra.mxu0 %v838
        %v929 = vpop.f32.mrf.mxu0
        %v930 = vadd.f32 0.0, %v929
        %931 = vmatmul.f32.gmra.mxu0 %v841
        %v932 = vpop.f32.mrf.mxu0
        %v933 = vadd.f32 0.0, %v932
        %934 = vmatmul.f32.gmra.mxu0 %v844
        %v935 = vpop.f32.mrf.mxu0
        %936 = vmatmul.f32.gmra.mxu0 %v847
        %v937 = vpop.f32.mrf.mxu0
        %v938 = vadd.f32 0.0, %v937
        %939 = vmatmul.f32.gmra.mxu0 %v850
        %v940 = vpop.f32.mrf.mxu0
        %v941 = vadd.f32 0.0, %v940
        %942 = vmatmul.f32.gmra.mxu0 %v853
        %v943 = vpop.f32.mrf.mxu0
        %944 = vmatmul.f32.gmra.mxu0 %v856
        %v945 = vpop.f32.mrf.mxu0
        %v946 = vadd.f32 0.0, %v945
        %947 = vmatmul.f32.gmra.mxu0 %v859
        %v948 = vpop.f32.mrf.mxu0
        %v949 = vadd.f32 0.0, %v948
        %950 = vmatmul.f32.gmra.mxu0 %v862
        %v951 = vpop.f32.mrf.mxu0
        %952 = vmatmul.f32.gmra.mxu0 %v865
        %v953 = vpop.f32.mrf.mxu0
        %v954 = vadd.f32 0.0, %v953
        %955 = vmatmul.f32.gmra.mxu0 %v868
        %v956 = vpop.f32.mrf.mxu0
        %v957 = vadd.f32 0.0, %v956
        %958 = vmatmul.f32.gmra.mxu0 %v871
        %v959 = vpop.f32.mrf.mxu0
        %960 = vmatmul.f32.gmra.mxu0 %v874
        %v961 = vpop.f32.mrf.mxu0
        %v962 = vadd.f32 0.0, %v961
        %963 = vmatmul.f32.gmra.mxu0 %v877
        %v964 = vpop.f32.mrf.mxu0
        %v965 = vadd.f32 0.0, %v964
        %966 = vmatmul.f32.gmra.mxu0 %v880
        %v967 = vpop.f32.mrf.mxu0
        %968 = vmatmul.f32.gmra.mxu0 %v883
        %v969 = vpop.f32.mrf.mxu0
        %v970 = vadd.f32 0.0, %v969
        %971 = vmatmul.f32.gmra.mxu0 %v886
        %v972 = vpop.f32.mrf.mxu0
        %v973 = vadd.f32 0.0, %v972
        %974 = vmatmul.f32.gmra.mxu0 %v889
        %v975 = vpop.f32.mrf.mxu0
        %976 = vmatmul.f32.gmra.mxu0 %v892
        %v977 = vpop.f32.mrf.mxu0
        %v978 = vadd.f32 0.0, %v977
        %979 = vmatmul.f32.gmra.mxu0 %v895
        %v980 = vpop.f32.mrf.mxu0
        %v981 = vadd.f32 0.0, %v980
        %982 = vmatmul.f32.gmra.mxu0 %v898
        %v983 = vpop.f32.mrf.mxu0
        %984 = vmatmul.f32.gmra.mxu0 %v901
        %v985 = vpop.f32.mrf.mxu0
        %v986 = vadd.f32 0.0, %v985
        %987 = vmatmul.f32.gmra.mxu0 %v904
        %v988 = vpop.f32.mrf.mxu0
        %v989 = vadd.f32 0.0, %v988
        %990 = vmatmul.f32.gmra.mxu0 %v907
        %v991 = vpop.f32.mrf.mxu0
        %992 = vdwg.mxu0
        %v993 = vadd.f32 %v771, %v930
        %v994 = vadd.f32 %v774, %v933
        %v995 = vadd.f32 %v779, %v938
        %v996 = vadd.f32 %v782, %v941
        %v997 = vadd.f32 %v787, %v946
        %v998 = vadd.f32 %v790, %v949
        %v999 = vadd.f32 %v795, %v954
        %v1000 = vadd.f32 %v798, %v957
        %v1001 = vadd.f32 %v803, %v962
        %v1002 = vadd.f32 %v806, %v965
        %v1003 = vadd.f32 %v811, %v970
        %v1004 = vadd.f32 %v814, %v973
        %v1005 = vadd.f32 %v819, %v978
        %v1006 = vadd.f32 %v822, %v981
        %v1007 = vadd.f32 %v827, %v986
        %v1008 = vadd.f32 %v830, %v989
        %v1009 = vrot.slane %v515, 4
        %v1011 = vsel %vm520, %v429, 0
        %v1014 = vsel %vm520, %v428, 0
        %v1017 = vsel %vm520, %v427, 0
        %v1019 = vsel %vm593, %v1009, 0
        %1021 = vmatpush.msra.mxu0 0.0
        %1022 = vmatpush.msra.mxu0 0.0
        %1023 = vmatpush.msra.mxu0 0.0
        %1024 = vmatpush.msra.mxu0 0.0
        %1025 = vmatpush.msra.mxu0 0.0
        %1026 = vmatpush.msra.mxu0 0.0
        %1027 = vmatpush.msra.mxu0 0.0
        %1028 = vmatpush.msra.mxu0 0.0
        %1029 = vmatpush.msra.mxu0 0.0
        %1030 = vmatpush.msra.mxu0 0.0
        %1031 = vmatpush.msra.mxu0 0.0
        %1032 = vmatpush.msra.mxu0 0.0
        %1033 = vmatpush.msra.mxu0 0.0
        %1034 = vmatpush.msra.mxu0 0.0
        %1035 = vmatpush.msra.mxu0 0.0
        %1036 = vmatpush.msra.mxu0 %v1019
        %1037 = vmatmul.f32.gmra.mxu0 %v688
        %v1038 = vpop.f32.mrf.mxu0
        %v1039 = vadd.f32 0.0, %v1038
        %1040 = vmatmul.f32.gmra.mxu0 %v691
        %v1041 = vpop.f32.mrf.mxu0
        %v1042 = vadd.f32 0.0, %v1041
        %1043 = vmatmul.f32.gmra.mxu0 %v694
        %v1044 = vpop.f32.mrf.mxu0
        %1045 = vmatmul.f32.gmra.mxu0 %v697
        %v1046 = vpop.f32.mrf.mxu0
        %v1047 = vadd.f32 0.0, %v1046
        %1048 = vmatmul.f32.gmra.mxu0 %v700
        %v1049 = vpop.f32.mrf.mxu0
        %v1050 = vadd.f32 0.0, %v1049
        %1051 = vmatmul.f32.gmra.mxu0 %v703
        %v1052 = vpop.f32.mrf.mxu0
        %1053 = vmatmul.f32.gmra.mxu0 %v706
        %v1054 = vpop.f32.mrf.mxu0
        %v1055 = vadd.f32 0.0, %v1054
        %1056 = vmatmul.f32.gmra.mxu0 %v709
        %v1057 = vpop.f32.mrf.mxu0
        %v1058 = vadd.f32 0.0, %v1057
        %1059 = vmatmul.f32.gmra.mxu0 %v712
        %v1060 = vpop.f32.mrf.mxu0
        %1061 = vmatmul.f32.gmra.mxu0 %v715
        %v1062 = vpop.f32.mrf.mxu0
        %v1063 = vadd.f32 0.0, %v1062
        %1064 = vmatmul.f32.gmra.mxu0 %v718
        %v1065 = vpop.f32.mrf.mxu0
        %v1066 = vadd.f32 0.0, %v1065
        %1067 = vmatmul.f32.gmra.mxu0 %v721
        %v1068 = vpop.f32.mrf.mxu0
        %1069 = vmatmul.f32.gmra.mxu0 %v724
        %v1070 = vpop.f32.mrf.mxu0
        %v1071 = vadd.f32 0.0, %v1070
        %1072 = vmatmul.f32.gmra.mxu0 %v727
        %v1073 = vpop.f32.mrf.mxu0
        %v1074 = vadd.f32 0.0, %v1073
        %1075 = vmatmul.f32.gmra.mxu0 %v730
        %v1076 = vpop.f32.mrf.mxu0
        %1077 = vmatmul.f32.gmra.mxu0 %v733
        %v1078 = vpop.f32.mrf.mxu0
        %v1079 = vadd.f32 0.0, %v1078
        %1080 = vmatmul.f32.gmra.mxu0 %v736
        %v1081 = vpop.f32.mrf.mxu0
        %v1082 = vadd.f32 0.0, %v1081
        %1083 = vmatmul.f32.gmra.mxu0 %v739
        %v1084 = vpop.f32.mrf.mxu0
        %1085 = vmatmul.f32.gmra.mxu0 %v742
        %v1086 = vpop.f32.mrf.mxu0
        %v1087 = vadd.f32 0.0, %v1086
        %1088 = vmatmul.f32.gmra.mxu0 %v745
        %v1089 = vpop.f32.mrf.mxu0
        %v1090 = vadd.f32 0.0, %v1089
        %1091 = vmatmul.f32.gmra.mxu0 %v748
        %v1092 = vpop.f32.mrf.mxu0
        %1093 = vmatmul.f32.gmra.mxu0 %v1011
        %v1094 = vpop.f32.mrf.mxu0
        %v1095 = vadd.f32 0.0, %v1094
        %1096 = vmatmul.f32.gmra.mxu0 %v1014
        %v1097 = vpop.f32.mrf.mxu0
        %v1098 = vadd.f32 0.0, %v1097
        %1099 = vmatmul.f32.gmra.mxu0 %v1017
        %v1100 = vpop.f32.mrf.mxu0
        %1101 = vdwg.mxu0
        %v1102 = vadd.f32 %v993, %v1039
        %v1103 = vadd.f32 %v994, %v1042
        %v1104 = vadd.f32 %v995, %v1047
        %v1105 = vadd.f32 %v996, %v1050
        %v1106 = vadd.f32 %v997, %v1055
        %v1107 = vadd.f32 %v998, %v1058
        %v1108 = vadd.f32 %v999, %v1063
        %v1109 = vadd.f32 %v1000, %v1066
        %v1110 = vadd.f32 %v1001, %v1071
        %v1111 = vadd.f32 %v1002, %v1074
        %v1112 = vadd.f32 %v1003, %v1079
        %v1113 = vadd.f32 %v1004, %v1082
        %v1114 = vadd.f32 %v1005, %v1087
        %v1115 = vadd.f32 %v1006, %v1090
        %v1116 = vadd.f32 %v1007, %v1095
        %v1117 = vadd.f32 %v1008, %v1098
        %v1118 = vrot.slane %v518, 4
        %v1120 = vsel %vm520, %v385, 0
        %v1123 = vsel %vm520, %v386, 0
        %v1126 = vsel %vm520, %v387, 0
        %v1128 = vsel %vm593, %v1118, 0
        %1130 = vmatpush.msra.mxu0 0.0
        %1131 = vmatpush.msra.mxu0 0.0
        %1132 = vmatpush.msra.mxu0 0.0
        %1133 = vmatpush.msra.mxu0 0.0
        %1134 = vmatpush.msra.mxu0 0.0
        %1135 = vmatpush.msra.mxu0 0.0
        %1136 = vmatpush.msra.mxu0 0.0
        %1137 = vmatpush.msra.mxu0 0.0
        %1138 = vmatpush.msra.mxu0 0.0
        %1139 = vmatpush.msra.mxu0 0.0
        %1140 = vmatpush.msra.mxu0 0.0
        %1141 = vmatpush.msra.mxu0 0.0
        %1142 = vmatpush.msra.mxu0 0.0
        %1143 = vmatpush.msra.mxu0 0.0
        %1144 = vmatpush.msra.mxu0 0.0
        %1145 = vmatpush.msra.mxu0 %v1128
        %1146 = vmatmul.f32.gmra.mxu0 %v531
        %v1147 = vpop.f32.mrf.mxu0
        %v1148 = vadd.f32 0.0, %v1147
        %1149 = vmatmul.f32.gmra.mxu0 %v534
        %v1150 = vpop.f32.mrf.mxu0
        %v1151 = vadd.f32 0.0, %v1150
        %1152 = vmatmul.f32.gmra.mxu0 %v537
        %v1153 = vpop.f32.mrf.mxu0
        %1154 = vmatmul.f32.gmra.mxu0 %v540
        %v1155 = vpop.f32.mrf.mxu0
        %v1156 = vadd.f32 0.0, %v1155
        %1157 = vmatmul.f32.gmra.mxu0 %v543
        %v1158 = vpop.f32.mrf.mxu0
        %v1159 = vadd.f32 0.0, %v1158
        %1160 = vmatmul.f32.gmra.mxu0 %v546
        %v1161 = vpop.f32.mrf.mxu0
        %1162 = vmatmul.f32.gmra.mxu0 %v549
        %v1163 = vpop.f32.mrf.mxu0
        %v1164 = vadd.f32 0.0, %v1163
        %1165 = vmatmul.f32.gmra.mxu0 %v552
        %v1166 = vpop.f32.mrf.mxu0
        %v1167 = vadd.f32 0.0, %v1166
        %1168 = vmatmul.f32.gmra.mxu0 %v555
        %v1169 = vpop.f32.mrf.mxu0
        %1170 = vmatmul.f32.gmra.mxu0 %v558
        %v1171 = vpop.f32.mrf.mxu0
        %v1172 = vadd.f32 0.0, %v1171
        %1173 = vmatmul.f32.gmra.mxu0 %v561
        %v1174 = vpop.f32.mrf.mxu0
        %v1175 = vadd.f32 0.0, %v1174
        %1176 = vmatmul.f32.gmra.mxu0 %v564
        %v1177 = vpop.f32.mrf.mxu0
        %1178 = vmatmul.f32.gmra.mxu0 %v567
        %v1179 = vpop.f32.mrf.mxu0
        %v1180 = vadd.f32 0.0, %v1179
        %1181 = vmatmul.f32.gmra.mxu0 %v570
        %v1182 = vpop.f32.mrf.mxu0
        %v1183 = vadd.f32 0.0, %v1182
        %1184 = vmatmul.f32.gmra.mxu0 %v573
        %v1185 = vpop.f32.mrf.mxu0
        %1186 = vmatmul.f32.gmra.mxu0 %v576
        %v1187 = vpop.f32.mrf.mxu0
        %v1188 = vadd.f32 0.0, %v1187
        %1189 = vmatmul.f32.gmra.mxu0 %v579
        %v1190 = vpop.f32.mrf.mxu0
        %v1191 = vadd.f32 0.0, %v1190
        %1192 = vmatmul.f32.gmra.mxu0 %v582
        %v1193 = vpop.f32.mrf.mxu0
        %1194 = vmatmul.f32.gmra.mxu0 %v585
        %v1195 = vpop.f32.mrf.mxu0
        %v1196 = vadd.f32 0.0, %v1195
        %1197 = vmatmul.f32.gmra.mxu0 %v588
        %v1198 = vpop.f32.mrf.mxu0
        %v1199 = vadd.f32 0.0, %v1198
        %1200 = vmatmul.f32.gmra.mxu0 %v591
        %v1201 = vpop.f32.mrf.mxu0
        %1202 = vmatmul.f32.gmra.mxu0 %v1120
        %v1203 = vpop.f32.mrf.mxu0
        %v1204 = vadd.f32 0.0, %v1203
        %1205 = vmatmul.f32.gmra.mxu0 %v1123
        %v1206 = vpop.f32.mrf.mxu0
        %v1207 = vadd.f32 0.0, %v1206
        %1208 = vmatmul.f32.gmra.mxu0 %v1126
        %v1209 = vpop.f32.mrf.mxu0
        %1210 = vdwg.mxu0
        %v1211 = vadd.f32 %v1102, %v1148
        %v1212 = vadd.f32 %v1103, %v1151
        %v1213 = vadd.f32 %v1104, %v1156
        %v1214 = vadd.f32 %v1105, %v1159
        %v1215 = vadd.f32 %v1106, %v1164
        %v1216 = vadd.f32 %v1107, %v1167
        %v1217 = vadd.f32 %v1108, %v1172
        %v1218 = vadd.f32 %v1109, %v1175
        %v1219 = vadd.f32 %v1110, %v1180
        %v1220 = vadd.f32 %v1111, %v1183
        %v1221 = vadd.f32 %v1112, %v1188
        %v1222 = vadd.f32 %v1113, %v1191
        %v1223 = vadd.f32 %v1114, %v1196
        %v1224 = vadd.f32 %v1115, %v1199
        %v1225 = vadd.f32 %v1116, %v1204
        %v1226 = vadd.f32 %v1117, %v1207
        %v1227 = vrot.slane %v835, 4
        %v1229 = vsel %vm520, %v489, 0
        %v1232 = vsel %vm520, %v488, 0
        %v1235 = vsel %vm520, %v487, 0
        %v1237 = vsel %vm593, %v1227, 0
        %1239 = vmatpush.msra.mxu0 0.0
        %1240 = vmatpush.msra.mxu0 0.0
        %1241 = vmatpush.msra.mxu0 0.0
        %1242 = vmatpush.msra.mxu0 0.0
        %1243 = vmatpush.msra.mxu0 0.0
        %1244 = vmatpush.msra.mxu0 0.0
        %1245 = vmatpush.msra.mxu0 0.0
        %1246 = vmatpush.msra.mxu0 0.0
        %1247 = vmatpush.msra.mxu0 0.0
        %1248 = vmatpush.msra.mxu0 0.0
        %1249 = vmatpush.msra.mxu0 0.0
        %1250 = vmatpush.msra.mxu0 0.0
        %1251 = vmatpush.msra.mxu0 0.0
        %1252 = vmatpush.msra.mxu0 0.0
        %1253 = vmatpush.msra.mxu0 0.0
        %1254 = vmatpush.msra.mxu0 %v1237
        %1255 = vmatmul.f32.gmra.mxu0 %v847
        %v1256 = vpop.f32.mrf.mxu0
        %v1257 = vadd.f32 0.0, %v1256
        %1258 = vmatmul.f32.gmra.mxu0 %v850
        %v1259 = vpop.f32.mrf.mxu0
        %v1260 = vadd.f32 0.0, %v1259
        %1261 = vmatmul.f32.gmra.mxu0 %v853
        %v1262 = vpop.f32.mrf.mxu0
        %1263 = vmatmul.f32.gmra.mxu0 %v856
        %v1264 = vpop.f32.mrf.mxu0
        %v1265 = vadd.f32 0.0, %v1264
        %1266 = vmatmul.f32.gmra.mxu0 %v859
        %v1267 = vpop.f32.mrf.mxu0
        %v1268 = vadd.f32 0.0, %v1267
        %1269 = vmatmul.f32.gmra.mxu0 %v862
        %v1270 = vpop.f32.mrf.mxu0
        %1271 = vmatmul.f32.gmra.mxu0 %v865
        %v1272 = vpop.f32.mrf.mxu0
        %v1273 = vadd.f32 0.0, %v1272
        %1274 = vmatmul.f32.gmra.mxu0 %v868
        %v1275 = vpop.f32.mrf.mxu0
        %v1276 = vadd.f32 0.0, %v1275
        %1277 = vmatmul.f32.gmra.mxu0 %v871
        %v1278 = vpop.f32.mrf.mxu0
        %1279 = vmatmul.f32.gmra.mxu0 %v874
        %v1280 = vpop.f32.mrf.mxu0
        %v1281 = vadd.f32 0.0, %v1280
        %1282 = vmatmul.f32.gmra.mxu0 %v877
        %v1283 = vpop.f32.mrf.mxu0
        %v1284 = vadd.f32 0.0, %v1283
        %1285 = vmatmul.f32.gmra.mxu0 %v880
        %v1286 = vpop.f32.mrf.mxu0
        %1287 = vmatmul.f32.gmra.mxu0 %v883
        %v1288 = vpop.f32.mrf.mxu0
        %v1289 = vadd.f32 0.0, %v1288
        %1290 = vmatmul.f32.gmra.mxu0 %v886
        %v1291 = vpop.f32.mrf.mxu0
        %v1292 = vadd.f32 0.0, %v1291
        %1293 = vmatmul.f32.gmra.mxu0 %v889
        %v1294 = vpop.f32.mrf.mxu0
        %1295 = vmatmul.f32.gmra.mxu0 %v892
        %v1296 = vpop.f32.mrf.mxu0
        %v1297 = vadd.f32 0.0, %v1296
        %1298 = vmatmul.f32.gmra.mxu0 %v895
        %v1299 = vpop.f32.mrf.mxu0
        %v1300 = vadd.f32 0.0, %v1299
        %1301 = vmatmul.f32.gmra.mxu0 %v898
        %v1302 = vpop.f32.mrf.mxu0
        %1303 = vmatmul.f32.gmra.mxu0 %v901
        %v1304 = vpop.f32.mrf.mxu0
        %v1305 = vadd.f32 0.0, %v1304
        %1306 = vmatmul.f32.gmra.mxu0 %v904
        %v1307 = vpop.f32.mrf.mxu0
        %v1308 = vadd.f32 0.0, %v1307
        %1309 = vmatmul.f32.gmra.mxu0 %v907
        %v1310 = vpop.f32.mrf.mxu0
        %1311 = vmatmul.f32.gmra.mxu0 %v1229
        %v1312 = vpop.f32.mrf.mxu0
        %v1313 = vadd.f32 0.0, %v1312
        %1314 = vmatmul.f32.gmra.mxu0 %v1232
        %v1315 = vpop.f32.mrf.mxu0
        %v1316 = vadd.f32 0.0, %v1315
        %1317 = vmatmul.f32.gmra.mxu0 %v1235
        %v1318 = vpop.f32.mrf.mxu0
        %1319 = vdwg.mxu0
        %v1320 = vadd.f32 %v1211, %v1257
        %v1321 = vadd.f32 %v1212, %v1260
        %v1322 = vadd.f32 %v1213, %v1265
        %v1323 = vadd.f32 %v1214, %v1268
        %v1324 = vadd.f32 %v1215, %v1273
        %v1325 = vadd.f32 %v1216, %v1276
        %v1326 = vadd.f32 %v1217, %v1281
        %v1327 = vadd.f32 %v1218, %v1284
        %v1328 = vadd.f32 %v1219, %v1289
        %v1329 = vadd.f32 %v1220, %v1292
        %v1330 = vadd.f32 %v1221, %v1297
        %v1331 = vadd.f32 %v1222, %v1300
        %v1332 = vadd.f32 %v1223, %v1305
        %v1333 = vadd.f32 %v1224, %v1308
        %v1334 = vadd.f32 %v1225, %v1313
        %v1335 = vadd.f32 %v1226, %v1316
        %v1337 = vsel %vm520, %v426, 0
        %v1340 = vsel %vm520, %v425, 0
        %v1343 = vsel %vm520, %v424, 0
        %v1346 = vsel %vm593, %v516, 0
        %1348 = vmatpush.msra.mxu0 0.0
        %1349 = vmatpush.msra.mxu0 0.0
        %1350 = vmatpush.msra.mxu0 0.0
        %1351 = vmatpush.msra.mxu0 0.0
        %1352 = vmatpush.msra.mxu0 0.0
        %1353 = vmatpush.msra.mxu0 0.0
        %1354 = vmatpush.msra.mxu0 0.0
        %1355 = vmatpush.msra.mxu0 0.0
        %1356 = vmatpush.msra.mxu0 0.0
        %1357 = vmatpush.msra.mxu0 0.0
        %1358 = vmatpush.msra.mxu0 0.0
        %1359 = vmatpush.msra.mxu0 0.0
        %1360 = vmatpush.msra.mxu0 0.0
        %1361 = vmatpush.msra.mxu0 0.0
        %1362 = vmatpush.msra.mxu0 0.0
        %1363 = vmatpush.msra.mxu0 %v1346
        %1364 = vmatmul.f32.gmra.mxu0 %v697
        %v1365 = vpop.f32.mrf.mxu0
        %v1366 = vadd.f32 0.0, %v1365
        %1367 = vmatmul.f32.gmra.mxu0 %v700
        %v1368 = vpop.f32.mrf.mxu0
        %v1369 = vadd.f32 0.0, %v1368
        %1370 = vmatmul.f32.gmra.mxu0 %v703
        %v1371 = vpop.f32.mrf.mxu0
        %1372 = vmatmul.f32.gmra.mxu0 %v706
        %v1373 = vpop.f32.mrf.mxu0
        %v1374 = vadd.f32 0.0, %v1373
        %1375 = vmatmul.f32.gmra.mxu0 %v709
        %v1376 = vpop.f32.mrf.mxu0
        %v1377 = vadd.f32 0.0, %v1376
        %1378 = vmatmul.f32.gmra.mxu0 %v712
        %v1379 = vpop.f32.mrf.mxu0
        %1380 = vmatmul.f32.gmra.mxu0 %v715
        %v1381 = vpop.f32.mrf.mxu0
        %v1382 = vadd.f32 0.0, %v1381
        %1383 = vmatmul.f32.gmra.mxu0 %v718
        %v1384 = vpop.f32.mrf.mxu0
        %v1385 = vadd.f32 0.0, %v1384
        %1386 = vmatmul.f32.gmra.mxu0 %v721
        %v1387 = vpop.f32.mrf.mxu0
        %1388 = vmatmul.f32.gmra.mxu0 %v724
        %v1389 = vpop.f32.mrf.mxu0
        %v1390 = vadd.f32 0.0, %v1389
        %1391 = vmatmul.f32.gmra.mxu0 %v727
        %v1392 = vpop.f32.mrf.mxu0
        %v1393 = vadd.f32 0.0, %v1392
        %1394 = vmatmul.f32.gmra.mxu0 %v730
        %v1395 = vpop.f32.mrf.mxu0
        %1396 = vmatmul.f32.gmra.mxu0 %v733
        %v1397 = vpop.f32.mrf.mxu0
        %v1398 = vadd.f32 0.0, %v1397
        %1399 = vmatmul.f32.gmra.mxu0 %v736
        %v1400 = vpop.f32.mrf.mxu0
        %v1401 = vadd.f32 0.0, %v1400
        %1402 = vmatmul.f32.gmra.mxu0 %v739
        %v1403 = vpop.f32.mrf.mxu0
        %1404 = vmatmul.f32.gmra.mxu0 %v742
        %v1405 = vpop.f32.mrf.mxu0
        %v1406 = vadd.f32 0.0, %v1405
        %1407 = vmatmul.f32.gmra.mxu0 %v745
        %v1408 = vpop.f32.mrf.mxu0
        %v1409 = vadd.f32 0.0, %v1408
        %1410 = vmatmul.f32.gmra.mxu0 %v748
        %v1411 = vpop.f32.mrf.mxu0
        %1412 = vmatmul.f32.gmra.mxu0 %v1011
        %v1413 = vpop.f32.mrf.mxu0
        %v1414 = vadd.f32 0.0, %v1413
        %1415 = vmatmul.f32.gmra.mxu0 %v1014
        %v1416 = vpop.f32.mrf.mxu0
        %v1417 = vadd.f32 0.0, %v1416
        %1418 = vmatmul.f32.gmra.mxu0 %v1017
        %v1419 = vpop.f32.mrf.mxu0
        %1420 = vmatmul.f32.gmra.mxu0 %v1337
        %v1421 = vpop.f32.mrf.mxu0
        %v1422 = vadd.f32 0.0, %v1421
        %1423 = vmatmul.f32.gmra.mxu0 %v1340
        %v1424 = vpop.f32.mrf.mxu0
        %v1425 = vadd.f32 0.0, %v1424
        %1426 = vmatmul.f32.gmra.mxu0 %v1343
        %v1427 = vpop.f32.mrf.mxu0
        %1428 = vdwg.mxu0
        %v1429 = vadd.f32 %v1320, %v1366
        %v1430 = vadd.f32 %v1321, %v1369
        %v1431 = vadd.f32 %v1322, %v1374
        %v1432 = vadd.f32 %v1323, %v1377
        %v1433 = vadd.f32 %v1324, %v1382
        %v1434 = vadd.f32 %v1325, %v1385
        %v1435 = vadd.f32 %v1326, %v1390
        %v1436 = vadd.f32 %v1327, %v1393
        %v1437 = vadd.f32 %v1328, %v1398
        %v1438 = vadd.f32 %v1329, %v1401
        %v1439 = vadd.f32 %v1330, %v1406
        %v1440 = vadd.f32 %v1331, %v1409
        %v1441 = vadd.f32 %v1332, %v1414
        %v1442 = vadd.f32 %v1333, %v1417
        %v1443 = vadd.f32 %v1334, %v1422
        %v1444 = vadd.f32 %v1335, %v1425
        %v1446 = vsel %vm520, %v388, 0
        %v1449 = vsel %vm520, %v389, 0
        %v1452 = vsel %vm520, %v390, 0
        %v1455 = vsel %vm593, %v519, 0
        %1457 = vmatpush.msra.mxu0 0.0
        %1458 = vmatpush.msra.mxu0 0.0
        %1459 = vmatpush.msra.mxu0 0.0
        %1460 = vmatpush.msra.mxu0 0.0
        %1461 = vmatpush.msra.mxu0 0.0
        %1462 = vmatpush.msra.mxu0 0.0
        %1463 = vmatpush.msra.mxu0 0.0
        %1464 = vmatpush.msra.mxu0 0.0
        %1465 = vmatpush.msra.mxu0 0.0
        %1466 = vmatpush.msra.mxu0 0.0
        %1467 = vmatpush.msra.mxu0 0.0
        %1468 = vmatpush.msra.mxu0 0.0
        %1469 = vmatpush.msra.mxu0 0.0
        %1470 = vmatpush.msra.mxu0 0.0
        %1471 = vmatpush.msra.mxu0 0.0
        %1472 = vmatpush.msra.mxu0 %v1455
        %1473 = vmatmul.f32.gmra.mxu0 %v540
        %v1474 = vpop.f32.mrf.mxu0
        %v1475 = vadd.f32 0.0, %v1474
        %1476 = vmatmul.f32.gmra.mxu0 %v543
        %v1477 = vpop.f32.mrf.mxu0
        %v1478 = vadd.f32 0.0, %v1477
        %1479 = vmatmul.f32.gmra.mxu0 %v546
        %v1480 = vpop.f32.mrf.mxu0
        %1481 = vmatmul.f32.gmra.mxu0 %v549
        %v1482 = vpop.f32.mrf.mxu0
        %v1483 = vadd.f32 0.0, %v1482
        %1484 = vmatmul.f32.gmra.mxu0 %v552
        %v1485 = vpop.f32.mrf.mxu0
        %v1486 = vadd.f32 0.0, %v1485
        %1487 = vmatmul.f32.gmra.mxu0 %v555
        %v1488 = vpop.f32.mrf.mxu0
        %1489 = vmatmul.f32.gmra.mxu0 %v558
        %v1490 = vpop.f32.mrf.mxu0
        %v1491 = vadd.f32 0.0, %v1490
        %1492 = vmatmul.f32.gmra.mxu0 %v561
        %v1493 = vpop.f32.mrf.mxu0
        %v1494 = vadd.f32 0.0, %v1493
        %1495 = vmatmul.f32.gmra.mxu0 %v564
        %v1496 = vpop.f32.mrf.mxu0
        %1497 = vmatmul.f32.gmra.mxu0 %v567
        %v1498 = vpop.f32.mrf.mxu0
        %v1499 = vadd.f32 0.0, %v1498
        %1500 = vmatmul.f32.gmra.mxu0 %v570
        %v1501 = vpop.f32.mrf.mxu0
        %v1502 = vadd.f32 0.0, %v1501
        %1503 = vmatmul.f32.gmra.mxu0 %v573
        %v1504 = vpop.f32.mrf.mxu0
        %1505 = vmatmul.f32.gmra.mxu0 %v576
        %v1506 = vpop.f32.mrf.mxu0
        %v1507 = vadd.f32 0.0, %v1506
        %1508 = vmatmul.f32.gmra.mxu0 %v579
        %v1509 = vpop.f32.mrf.mxu0
        %v1510 = vadd.f32 0.0, %v1509
        %1511 = vmatmul.f32.gmra.mxu0 %v582
        %v1512 = vpop.f32.mrf.mxu0
        %1513 = vmatmul.f32.gmra.mxu0 %v585
        %v1514 = vpop.f32.mrf.mxu0
        %v1515 = vadd.f32 0.0, %v1514
        %1516 = vmatmul.f32.gmra.mxu0 %v588
        %v1517 = vpop.f32.mrf.mxu0
        %v1518 = vadd.f32 0.0, %v1517
        %1519 = vmatmul.f32.gmra.mxu0 %v591
        %v1520 = vpop.f32.mrf.mxu0
        %1521 = vmatmul.f32.gmra.mxu0 %v1120
        %v1522 = vpop.f32.mrf.mxu0
        %v1523 = vadd.f32 0.0, %v1522
        %1524 = vmatmul.f32.gmra.mxu0 %v1123
        %v1525 = vpop.f32.mrf.mxu0
        %v1526 = vadd.f32 0.0, %v1525
        %1527 = vmatmul.f32.gmra.mxu0 %v1126
        %v1528 = vpop.f32.mrf.mxu0
        %1529 = vmatmul.f32.gmra.mxu0 %v1446
        %v1530 = vpop.f32.mrf.mxu0
        %v1531 = vadd.f32 0.0, %v1530
        %1532 = vmatmul.f32.gmra.mxu0 %v1449
        %v1533 = vpop.f32.mrf.mxu0
        %v1534 = vadd.f32 0.0, %v1533
        %1535 = vmatmul.f32.gmra.mxu0 %v1452
        %v1536 = vpop.f32.mrf.mxu0
        %1537 = vdwg.mxu0
        %v1538 = vadd.f32 %v1429, %v1475
        %v1539 = vadd.f32 %v1430, %v1478
        %v1540 = vadd.f32 %v1431, %v1483
        %v1541 = vadd.f32 %v1432, %v1486
        %v1542 = vadd.f32 %v1433, %v1491
        %v1543 = vadd.f32 %v1434, %v1494
        %v1544 = vadd.f32 %v1435, %v1499
        %v1545 = vadd.f32 %v1436, %v1502
        %v1546 = vadd.f32 %v1437, %v1507
        %v1547 = vadd.f32 %v1438, %v1510
        %v1548 = vadd.f32 %v1439, %v1515
        %v1549 = vadd.f32 %v1440, %v1518
        %v1550 = vadd.f32 %v1441, %v1523
        %v1551 = vadd.f32 %v1442, %v1526
        %v1552 = vadd.f32 %v1443, %v1531
        %v1553 = vadd.f32 %v1444, %v1534
        %v1555 = vsel %vm520, %v486, 0
        %v1558 = vsel %vm520, %v485, 0
        %v1561 = vsel %vm520, %v514, 0
        %v1564 = vsel %vm593, %v836, 0
        %1566 = vmatpush.msra.mxu0 0.0
        %1567 = vmatpush.msra.mxu0 0.0
        %1568 = vmatpush.msra.mxu0 0.0
        %1569 = vmatpush.msra.mxu0 0.0
        %1570 = vmatpush.msra.mxu0 0.0
        %1571 = vmatpush.msra.mxu0 0.0
        %1572 = vmatpush.msra.mxu0 0.0
        %1573 = vmatpush.msra.mxu0 0.0
        %1574 = vmatpush.msra.mxu0 0.0
        %1575 = vmatpush.msra.mxu0 0.0
        %1576 = vmatpush.msra.mxu0 0.0
        %1577 = vmatpush.msra.mxu0 0.0
        %1578 = vmatpush.msra.mxu0 0.0
        %1579 = vmatpush.msra.mxu0 0.0
        %1580 = vmatpush.msra.mxu0 0.0
        %1581 = vmatpush.msra.mxu0 %v1564
        %1582 = vmatmul.f32.gmra.mxu0 %v856
        %v1583 = vpop.f32.mrf.mxu0
        %v1584 = vadd.f32 0.0, %v1583
        %1585 = vmatmul.f32.gmra.mxu0 %v859
        %v1586 = vpop.f32.mrf.mxu0
        %v1587 = vadd.f32 0.0, %v1586
        %1588 = vmatmul.f32.gmra.mxu0 %v862
        %v1589 = vpop.f32.mrf.mxu0
        %1590 = vmatmul.f32.gmra.mxu0 %v865
        %v1591 = vpop.f32.mrf.mxu0
        %v1592 = vadd.f32 0.0, %v1591
        %1593 = vmatmul.f32.gmra.mxu0 %v868
        %v1594 = vpop.f32.mrf.mxu0
        %v1595 = vadd.f32 0.0, %v1594
        %1596 = vmatmul.f32.gmra.mxu0 %v871
        %v1597 = vpop.f32.mrf.mxu0
        %1598 = vmatmul.f32.gmra.mxu0 %v874
        %v1599 = vpop.f32.mrf.mxu0
        %v1600 = vadd.f32 0.0, %v1599
        %1601 = vmatmul.f32.gmra.mxu0 %v877
        %v1602 = vpop.f32.mrf.mxu0
        %v1603 = vadd.f32 0.0, %v1602
        %1604 = vmatmul.f32.gmra.mxu0 %v880
        %v1605 = vpop.f32.mrf.mxu0
        %1606 = vmatmul.f32.gmra.mxu0 %v883
        %v1607 = vpop.f32.mrf.mxu0
        %v1608 = vadd.f32 0.0, %v1607
        %1609 = vmatmul.f32.gmra.mxu0 %v886
        %v1610 = vpop.f32.mrf.mxu0
        %v1611 = vadd.f32 0.0, %v1610
        %1612 = vmatmul.f32.gmra.mxu0 %v889
        %v1613 = vpop.f32.mrf.mxu0
        %1614 = vmatmul.f32.gmra.mxu0 %v892
        %v1615 = vpop.f32.mrf.mxu0
        %v1616 = vadd.f32 0.0, %v1615
        %1617 = vmatmul.f32.gmra.mxu0 %v895
        %v1618 = vpop.f32.mrf.mxu0
        %v1619 = vadd.f32 0.0, %v1618
        %1620 = vmatmul.f32.gmra.mxu0 %v898
        %v1621 = vpop.f32.mrf.mxu0
        %1622 = vmatmul.f32.gmra.mxu0 %v901
        %v1623 = vpop.f32.mrf.mxu0
        %v1624 = vadd.f32 0.0, %v1623
        %1625 = vmatmul.f32.gmra.mxu0 %v904
        %v1626 = vpop.f32.mrf.mxu0
        %v1627 = vadd.f32 0.0, %v1626
        %1628 = vmatmul.f32.gmra.mxu0 %v907
        %v1629 = vpop.f32.mrf.mxu0
        %1630 = vmatmul.f32.gmra.mxu0 %v1229
        %v1631 = vpop.f32.mrf.mxu0
        %v1632 = vadd.f32 0.0, %v1631
        %1633 = vmatmul.f32.gmra.mxu0 %v1232
        %v1634 = vpop.f32.mrf.mxu0
        %v1635 = vadd.f32 0.0, %v1634
        %1636 = vmatmul.f32.gmra.mxu0 %v1235
        %v1637 = vpop.f32.mrf.mxu0
        %1638 = vmatmul.f32.gmra.mxu0 %v1555
        %v1639 = vpop.f32.mrf.mxu0
        %v1640 = vadd.f32 0.0, %v1639
        %1641 = vmatmul.f32.gmra.mxu0 %v1558
        %v1642 = vpop.f32.mrf.mxu0
        %v1643 = vadd.f32 0.0, %v1642
        %1644 = vmatmul.f32.gmra.mxu0 %v1561
        %v1645 = vpop.f32.mrf.mxu0
        %1646 = vdwg.mxu0
        %v1647 = vadd.f32 %v1538, %v1584
        %v1648 = vadd.f32 %v1539, %v1587
        %v1649 = vadd.f32 %v1540, %v1592
        %v1650 = vadd.f32 %v1541, %v1595
        %v1651 = vadd.f32 %v1542, %v1600
        %v1652 = vadd.f32 %v1543, %v1603
        %v1653 = vadd.f32 %v1544, %v1608
        %v1654 = vadd.f32 %v1545, %v1611
        %v1655 = vadd.f32 %v1546, %v1616
        %v1656 = vadd.f32 %v1547, %v1619
        %v1657 = vadd.f32 %v1548, %v1624
        %v1658 = vadd.f32 %v1549, %v1627
        %v1659 = vadd.f32 %v1550, %v1632
        %v1660 = vadd.f32 %v1551, %v1635
        %v1661 = vadd.f32 %v1552, %v1640
        %v1662 = vadd.f32 %v1553, %v1643
        %v1663 = vld [vmem:[%s3] sm:$0x1]
        %v1665 = vperm.slane %v1663, 0
        %v1667 = vadd.f32 %v1647, %v1665
        %v1668 = vadd.f32 %v1648, %v1665
        %v1669 = vadd.f32 %v1649, %v1665
        %v1670 = vadd.f32 %v1650, %v1665
        %v1671 = vadd.f32 %v1651, %v1665
        %v1672 = vadd.f32 %v1652, %v1665
        %v1673 = vadd.f32 %v1653, %v1665
        %v1674 = vadd.f32 %v1654, %v1665
        %v1675 = vadd.f32 %v1655, %v1665
        %v1676 = vadd.f32 %v1656, %v1665
        %v1677 = vadd.f32 %v1657, %v1665
        %v1678 = vadd.f32 %v1658, %v1665
        %v1679 = vadd.f32 %v1659, %v1665
        %v1680 = vadd.f32 %v1660, %v1665
        %v1681 = vadd.f32 %v1661, %v1665
        %v1682 = vadd.f32 %v1662, %v1665
        %v1683 = vmax.f32 %v1667, 0.0
        %v1684 = vmax.f32 %v1668, 0.0
        %v1685 = vmax.f32 %v1669, 0.0
        %v1686 = vmax.f32 %v1670, 0.0
        %v1687 = vmax.f32 %v1671, 0.0
        %v1688 = vmax.f32 %v1672, 0.0
        %v1689 = vmax.f32 %v1673, 0.0
        %v1690 = vmax.f32 %v1674, 0.0
        %v1691 = vmax.f32 %v1675, 0.0
        %v1692 = vmax.f32 %v1676, 0.0
        %v1693 = vmax.f32 %v1677, 0.0
        %v1694 = vmax.f32 %v1678, 0.0
        %v1695 = vmax.f32 %v1679, 0.0
        %v1696 = vmax.f32 %v1680, 0.0
        %v1697 = vmax.f32 %v1681, 0.0
        %v1698 = vmax.f32 %v1682, 0.0
        %v1699 = vld [vmem:[%s4] sm:$0x1]
        %v1701 = vperm.slane %v1699, 0
        %v1703 = vmul.f32 %v1683, %v1701
        %v1704 = vmul.f32 %v1684, %v1701
        %v1705 = vmul.f32 %v1685, %v1701
        %v1706 = vmul.f32 %v1686, %v1701
        %v1707 = vmul.f32 %v1687, %v1701
        %v1708 = vmul.f32 %v1688, %v1701
        %v1709 = vmul.f32 %v1689, %v1701
        %v1710 = vmul.f32 %v1690, %v1701
        %v1711 = vmul.f32 %v1691, %v1701
        %v1712 = vmul.f32 %v1692, %v1701
        %v1713 = vmul.f32 %v1693, %v1701
        %v1714 = vmul.f32 %v1694, %v1701
        %v1715 = vmul.f32 %v1695, %v1701
        %v1716 = vmul.f32 %v1696, %v1701
        %v1717 = vmul.f32 %v1697, %v1701
        %v1718 = vmul.f32 %v1698, %v1701
        %v1719 = vld [vmem:[%s5] sm:$0x1]
        %v1721 = vperm.slane %v1719, 0
        %v1723 = vadd.f32 %v1703, %v1721
        %v1724 = vadd.f32 %v1704, %v1721
        %v1725 = vadd.f32 %v1705, %v1721
        %v1726 = vadd.f32 %v1706, %v1721
        %v1727 = vadd.f32 %v1707, %v1721
        %v1728 = vadd.f32 %v1708, %v1721
        %v1729 = vadd.f32 %v1709, %v1721
        %v1730 = vadd.f32 %v1710, %v1721
        %v1731 = vadd.f32 %v1711, %v1721
        %v1732 = vadd.f32 %v1712, %v1721
        %v1733 = vadd.f32 %v1713, %v1721
        %v1734 = vadd.f32 %v1714, %v1721
        %v1735 = vadd.f32 %v1715, %v1721
        %v1736 = vadd.f32 %v1716, %v1721
        %v1737 = vadd.f32 %v1717, %v1721
        %v1738 = vadd.f32 %v1718, %v1721
        %1739 = vxpose.xlu0.b32.start [1/16] %v1723, 128
        %1740 = vxpose.xlu0.b32.cont [2/16] %v1724, 128
        %1741 = vxpose.xlu0.b32.cont [3/16] %v1725, 128
        %1742 = vxpose.xlu0.b32.cont [4/16] %v1726, 128
        %1743 = vxpose.xlu0.b32.cont [5/16] %v1727, 128
        %1744 = vxpose.xlu0.b32.cont [6/16] %v1728, 128
        %1745 = vxpose.xlu0.b32.cont [7/16] %v1729, 128
        %1746 = vxpose.xlu0.b32.cont [8/16] %v1730, 128
        %1747 = vxpose.xlu0.b32.cont [9/16] %v1731, 128
        %1748 = vxpose.xlu0.b32.cont [10/16] %v1732, 128
        %1749 = vxpose.xlu0.b32.cont [11/16] %v1733, 128
        %1750 = vxpose.xlu0.b32.cont [12/16] %v1734, 128
        %1751 = vxpose.xlu0.b32.cont [13/16] %v1735, 128
        %1752 = vxpose.xlu0.b32.cont [14/16] %v1736, 128
        %1753 = vxpose.xlu0.b32.cont [15/16] %v1737, 128
        %1754 = vxpose.xlu0.b32.end [16/16] %v1738, 128
        %v1755 = vpop.trf.xlu0
        %v1756 = vpop.trf.xlu0
        %v1757 = vpop.trf.xlu0
        %v1758 = vpop.trf.xlu0
        %v1759 = vpop.trf.xlu0
        %v1760 = vpop.trf.xlu0
        %v1761 = vpop.trf.xlu0
        %v1762 = vpop.trf.xlu0
        %v1763 = vpop.trf.xlu0
        %v1764 = vpop.trf.xlu0
        %v1765 = vpop.trf.xlu0
        %v1766 = vpop.trf.xlu0
        %v1767 = vpop.trf.xlu0
        %v1768 = vpop.trf.xlu0
        %v1769 = vpop.trf.xlu0
        %v1770 = vpop.trf.xlu0
        %1771 = vst [vmem:[%s324] sm:$0xff] %v1755
        %1772 = vst [vmem:[%s324 + $0x8] sm:$0xff] %v1756
        %1773 = vst [vmem:[%s324 + $0x10] sm:$0xff] %v1757
        %1774 = vst [vmem:[%s324 + $0x18] sm:$0xff] %v1758
        %s1775 = sand.u32 %s186, 1
        %s1776 = scalar_lea.sflag [#allocation3], %s1775
        %s1777 = sand.u32 %s186, 1
        %s1778 = smul.addr %s1777, 32
        %s1779 = scalar_lea.vmem [#allocation2], %s1778
        // Predicated region
        $region45: #{tpu_custom_call.1} parent=43 // pred_check
          %p1780 = pneg %p196
        $region46: #{tpu_custom_call.1} parent=43 // pred_check_branch
          %1782 = sbr.rel (%p1780) target = $region48
        $region47: #{tpu_custom_call.1} parent=43 // pred_region
          %1784 = vsyncadd %s1776, 0
          %s1785 = smul.addr %s24, 8
          %s1786 = sadd.s32 %s25, %s1785
          %s1787 = smul.addr %s1786, 8
          %s1788 = scalar_lea.hbm %s6, %s1787
          %s1789 = sshll.u32 %s1779, 4
          %s1790 = int_to_ptr.vmem [resolvable:$true] %s1789
          %s1791 = sshll.u32 %s1788, 4
          %s1792 = int_to_ptr.hbm [resolvable:$true] %s1791
          %1797 = dma.vmem_to_hbm [thread:$0]  %s1790, 512, %s1792, %s1776, 128, 256, 8
        $region48: #{tpu_custom_call.1} parent=43 // pred_fallthru
          _
      $region44: #{tpu_custom_call.1} parent=5 // pred_fallthru
        _
      %p1798 = scmp.le.s32.totalorder 2, %s15
      // Predicated region
      $region49: #{tpu_custom_call.1} parent=5 // pred_check
        %p1799 = pneg %p1798
      $region50: #{tpu_custom_call.1} parent=5 // pred_check_branch
        %1801 = sbr.rel (%p1799) target = $region52
      $region51: #{tpu_custom_call.1} parent=5 // pred_region
        %s1802 = ssub.s32 %s15, 2
        // Predicated region
        $region53: #{tpu_custom_call.1} parent=51 // pred_check
          %p1803 = pneg %p202
        $region54: #{tpu_custom_call.1} parent=51 // pred_check_branch
          %1805 = sbr.rel (%p1803) target = $region56
        $region55: #{tpu_custom_call.1} parent=51 // pred_region
          %s1806 = sand.u32 %s187, 1
          %s1807 = scalar_lea.sflag [#allocation3], %s1806
          %s1808 = sand.u32 %s187, 1
          %s1809 = smul.addr %s1808, 32
          %s1810 = scalar_lea.vmem [#allocation2], %s1809
          %1812 = dma.done %s1807, 512
        $region56: #{tpu_custom_call.1} parent=51 // pred_fallthru
          _
      $region52: #{tpu_custom_call.1} parent=5 // pred_fallthru
        _
    $region6: #{tpu_custom_call.1} parent=1 // loop_footer
      %s19 = sadd.s32 1, %s15
    $region7: #{tpu_custom_call.1} parent=1 // loop_footer_branch
      %14 = sbr.rel target = $region3
    $region8: #{tpu_custom_call.1} parent=1 // loop_exit
      _
    %1813 = vsyncpa [#allocation3], 1
    %s1814 = scalar_lea.sflag [#allocation3], 1
    %1815 = vsyncpa %s1814, 1

</llo_original>
